<compile_context>
chip_gen: v6e
topology: v6e:2x2x1
jax: 0.10.0
libtpu: 0.0.40
codegen_flags: <defaults>
</compile_context>

<pallas_src>
import jax
import jax.numpy as jnp
from jax.experimental import pallas as pl
from jax.experimental.pallas import tpu as pltpu


# ------------------------------ tiling config -------------------------------

_TM = 256  # pixels (rows of the (M, C) view) per grid step

_COMPILER_PARAMS = pltpu.CompilerParams(
    dimension_semantics=("parallel",),       # shard M across TCs on v7x
    vmem_limit_bytes=32 * 1024 * 1024,
)


def _round_up(x, m):
    return ((x + m - 1) // m) * m


# ----------------------------- Pallas kernels ------------------------------

def _stage1_kernel(p_ref, w1_ref, b1_ref, w4_ref, b4_ref, o_ref):
    """Fused stage 1 (everything that reads x).

    p_ref : (9, TM, Cin) bf16   3x3 / pad-1 shifted windows of x (zero pad)
    w1_ref: (Cin, C1)    bf16   concat of [b1_w | b2reduce_w | b3reduce_w]
    b1_ref: (1, C1)      f32
    w4_ref: (Cin, C4)    bf16   pool-proj 1x1 weight
    b4_ref: (1, C4)      f32
    o_ref : (TM, C1+C4)  f32    [relu(x@w1+b1) | relu(relu(maxpool(x))@w4+b4)]
    """
    xc = p_ref[4]                                 # center tap == x (no pad)
    y1 = jnp.dot(xc, w1_ref[...], preferred_element_type=jnp.float32)
    y1 = jnp.maximum(y1 + b1_ref[...], 0.0)

    m = p_ref[0]
    for t in range(1, 9):                         # VPU max chain hides under MXU
        m = jnp.maximum(m, p_ref[t])
    pooled = jnp.maximum(m, 0.0)                  # ReLU after pool (bf16)
    y4 = jnp.dot(pooled, w4_ref[...], preferred_element_type=jnp.float32)
    y4 = jnp.maximum(y4 + b4_ref[...], 0.0)

    o_ref[...] = jnp.concatenate([y1, y4], axis=-1).astype(o_ref.dtype)


def _conv_relu_kernel(p_ref, w_ref, b_ref, o_ref):
    """KxK conv + bias + ReLU as a single matmul (taps folded into K axis).

    p_ref: (TM, K*K*Cin) bf16   w_ref: (K*K*Cin, Cout) bf16
    b_ref: (1, Cout) f32        o_ref: (TM, Cout) f32
    """
    acc = jnp.dot(p_ref[...], w_ref[...], preferred_element_type=jnp.float32)
    o_ref[...] = jnp.maximum(acc + b_ref[...], 0.0).astype(o_ref.dtype)


# ------------------------------ glue wrappers -------------------------------

def _im2col_taps(x_nhwc, k, pad, dtype):
    """(N,H,W,C) -> (k*k, N*H*W, C) zero-padded shifted windows."""
    n, h, w, c = x_nhwc.shape
    xp = jnp.pad(x_nhwc, ((0, 0), (pad, pad), (pad, pad), (0, 0)))
    taps = [xp[:, ky:ky + h, kx:kx + w, :].reshape(n * h * w, c)
            for ky in range(k) for kx in range(k)]
    return jnp.stack(taps, axis=0).astype(dtype)


def _im2col_folded(x_nhwc, k, pad, dtype):
    """(N,H,W,C) -> (N*H*W, k*k*C): taps folded onto the contraction axis."""
    n, h, w, c = x_nhwc.shape
    xp = jnp.pad(x_nhwc, ((0, 0), (pad, pad), (pad, pad), (0, 0)))
    taps = [xp[:, ky:ky + h, kx:kx + w, :]
            for ky in range(k) for kx in range(k)]
    cols = jnp.concatenate(taps, axis=-1)                  # (N,H,W,k*k*C)
    return cols.reshape(n * h * w, k * k * c).astype(dtype)


def _w1x1(w_oihw):
    """(Cout, Cin, 1, 1) -> (Cin, Cout)."""
    cout, cin = w_oihw.shape[0], w_oihw.shape[1]
    return jnp.transpose(w_oihw, (2, 3, 1, 0)).reshape(cin, cout)


def inception_stage1_pallas(x_nhwc, w1cat, b1cat, w4, b4):
    """One fused kernel reading x once: three 1x1 convs + maxpool/ReLU/1x1."""
    n, h, w, cin = x_nhwc.shape
    c1 = w1cat.shape[1]
    c4 = w4.shape[1]
    m = n * h * w
    tm = min(_TM, _round_up(m, 8))
    mpad = _round_up(m, tm)

    taps = _im2col_taps(x_nhwc, 3, 1, jnp.bfloat16)        # (9, m, cin)
    if mpad != m:
        taps = jnp.pad(taps, ((0, 0), (0, mpad - m), (0, 0)))

    out = pl.pallas_call(
        _stage1_kernel,
        out_shape=jax.ShapeDtypeStruct((mpad, c1 + c4), jnp.float32),
        grid=(mpad // tm,),
        in_specs=[
            pl.BlockSpec((9, tm, cin), lambda i: (0, i, 0)),
            pl.BlockSpec((cin, c1), lambda i: (0, 0)),     # resident weights
            pl.BlockSpec((1, c1), lambda i: (0, 0)),       # resident bias
            pl.BlockSpec((cin, c4), lambda i: (0, 0)),
            pl.BlockSpec((1, c4), lambda i: (0, 0)),
        ],
        out_specs=pl.BlockSpec((tm, c1 + c4), lambda i: (i, 0)),
        compiler_params=_COMPILER_PARAMS,
    )(taps, w1cat.astype(jnp.bfloat16), b1cat.astype(jnp.float32),
      w4.astype(jnp.bfloat16), b4.astype(jnp.float32))
    return out[:m]


def conv_relu_pallas(x_nhwc, w_oihw, b, pad):
    """Conv2d (stride 1, 'same' via pad) + ReLU as one folded-taps matmul."""
    n, h, w, cin = x_nhwc.shape
    cout, _, k, _ = w_oihw.shape
    kk = k * k
    m = n * h * w
    tm = min(_TM, _round_up(m, 8))
    mpad = _round_up(m, tm)

    patches = _im2col_folded(x_nhwc, k, pad, jnp.bfloat16)  # (m, kk*cin)
    if mpad != m:
        patches = jnp.pad(patches, ((0, mpad - m), (0, 0)))
    w2 = jnp.transpose(w_oihw, (2, 3, 1, 0)).reshape(kk * cin, cout)
    w2 = w2.astype(jnp.bfloat16)
    b2 = b.reshape(1, cout).astype(jnp.float32)

    out = pl.pallas_call(
        _conv_relu_kernel,
        out_shape=jax.ShapeDtypeStruct((mpad, cout), jnp.float32),
        grid=(mpad // tm,),
        in_specs=[
            pl.BlockSpec((tm, kk * cin), lambda i: (i, 0)),
            pl.BlockSpec((kk * cin, cout), lambda i: (0, 0)),  # resident
            pl.BlockSpec((1, cout), lambda i: (0, 0)),         # resident
        ],
        out_specs=pl.BlockSpec((tm, cout), lambda i: (i, 0)),
        compiler_params=_COMPILER_PARAMS,
    )(patches, w2, b2)
    return out[:m].reshape(n, h, w, cout)


def inception_block_pallas(x_nchw, params):
    """Forward pass of InceptionBlock.  Input/output: NCHW (like PyTorch)."""
    x = jnp.transpose(x_nchw, (0, 2, 3, 1))                 # NCHW -> NHWC
    n, h, w, _ = x.shape

    n1 = params['b1_w'].shape[0]
    n2r = params['b2r_w'].shape[0]
    n3r = params['b3r_w'].shape[0]
    npool = params['b4_w'].shape[0]
    c1tot = n1 + n2r + n3r

    # Fuse the three 1x1 convs on x into one matmul (concat along Cout).
    w1cat = jnp.concatenate(
        [_w1x1(params['b1_w']), _w1x1(params['b2r_w']), _w1x1(params['b3r_w'])],
        axis=1)
    b1cat = jnp.concatenate(
        [params['b1_b'], params['b2r_b'], params['b3r_b']]).reshape(1, -1)
    w4 = _w1x1(params['b4_w'])
    b4 = params['b4_b'].reshape(1, -1)

    s1 = inception_stage1_pallas(x, w1cat, b1cat, w4, b4)   # (M, c1tot+npool)

    b1_out = s1[:, :n1].reshape(n, h, w, n1)
    b2r = s1[:, n1:n1 + n2r].reshape(n, h, w, n2r)
    b3r = s1[:, n1 + n2r:c1tot].reshape(n, h, w, n3r)
    b4_out = s1[:, c1tot:].reshape(n, h, w, npool)

    # Stage 2: the spatial convs on the reduce outputs (taps folded into K).
    b2_out = conv_relu_pallas(b2r, params['b2_w'], params['b2_b'], 1)
    b3_out = conv_relu_pallas(b3r, params['b3_w'], params['b3_b'], 2)

    out = jnp.concatenate([b1_out, b2_out, b3_out, b4_out], axis=-1)
    return jnp.transpose(out, (0, 3, 1, 2))                 # back to NCHW


# ------------------------- pure-JAX reference check -------------------------

def _ref_conv_relu(x_nchw, w, b, pad):
    y = jax.lax.conv_general_dilated(
        x_nchw, w, (1, 1), [(pad, pad), (pad, pad)],
        dimension_numbers=('NCHW', 'OIHW', 'NCHW'),
        precision=jax.lax.Precision.HIGHEST)
    return jax.nn.relu(y + b[None, :, None, None])


def inception_block_ref(x_nchw, params):
    b1 = _ref_conv_relu(x_nchw, params['b1_w'], params['b1_b'], 0)
    b2 = _ref_conv_relu(x_nchw, params['b2r_w'], params['b2r_b'], 0)
    b2 = _ref_conv_relu(b2, params['b2_w'], params['b2_b'], 1)
    b3 = _ref_conv_relu(x_nchw, params['b3r_w'], params['b3r_b'], 0)
    b3 = _ref_conv_relu(b3, params['b3_w'], params['b3_b'], 2)
    pooled = jax.lax.reduce_window(
        x_nchw, -jnp.inf, jax.lax.max,
        (1, 1, 3, 3), (1, 1, 1, 1), [(0, 0), (0, 0), (1, 1), (1, 1)])
    b4 = _ref_conv_relu(jax.nn.relu(pooled), params['b4_w'], params['b4_b'], 0)
    return jnp.concatenate([b1, b2, b3, b4], axis=1)


# ---------------------------------- main -------------------------------------

def _make_params(key, in_channels, n1x1, n3x3red, n3x3, n5x5red, n5x5,
                 pool_planes):
    keys = jax.random.split(key, 12)

    def conv_init(kw, kb, cout, cin, ksize):
        w = 0.1 * jax.random.normal(kw, (cout, cin, ksize, ksize), jnp.float32)
        b = 0.1 * jax.random.normal(kb, (cout,), jnp.float32)
        return w, b

    p = {}
    p['b1_w'], p['b1_b'] = conv_init(keys[0], keys[1], n1x1, in_channels, 1)
    p['b2r_w'], p['b2r_b'] = conv_init(keys[2], keys[3], n3x3red, in_channels, 1)
    p['b2_w'], p['b2_b'] = conv_init(keys[4], keys[5], n3x3, n3x3red, 3)
    p['b3r_w'], p['b3r_b'] = conv_init(keys[6], keys[7], n5x5red, in_channels, 1)
    p['b3_w'], p['b3_b'] = conv_init(keys[8], keys[9], n5x5, n5x5red, 5)
    p['b4_w'], p['b4_b'] = conv_init(keys[10], keys[11], pool_planes,
                                     in_channels, 1)
    return p


if __name__ == "__main__":
    key = jax.random.PRNGKey(0)
    k_x, k_p = jax.random.split(key)

    # small InceptionBlock: in=4, n1x1=8, n3x3red=6, n3x3=8, n5x5red=6, n5x5=8,
    # pool_planes=8  ->  output channels = 32
    N, C, H, W = 2, 4, 16, 16
    params = _make_params(k_p, C, 8, 6, 8, 6, 8, 8)
    x = jax.random.normal(k_x, (N, C, H, W), jnp.float32)

    out = jax.jit(inception_block_pallas)(x, params)
    out = jax.block_until_ready(out)

    assert out.shape == (N, 8 + 8 + 8 + 8, H, W), out.shape

    # Tolerance relaxed vs a pure-f32 path because MXU operands are bf16
    # (accumulation stays f32).
    ref = inception_block_ref(x, params)
    assert jnp.allclose(out, ref, rtol=2e-2, atol=2e-2), (
        float(jnp.max(jnp.abs(out - ref))))

    print("KERNEL_OK")
</pallas_src>

<mosaic_0001>
module attributes {stable_mosaic.version = 11 : i64} {
  func.func @_stage1_kernel(%arg0: i32, %arg1: memref<9x256x4xbf16, #tpu.memory_space<vmem>>, %arg2: memref<4x20xbf16, #tpu.memory_space<vmem>>, %arg3: memref<1x20xf32, #tpu.memory_space<vmem>>, %arg4: memref<4x8xbf16, #tpu.memory_space<vmem>>, %arg5: memref<1x8xf32, #tpu.memory_space<vmem>>, %arg6: memref<256x28xf32, #tpu.memory_space<vmem>>) attributes {dimension_semantics = [#tpu.dimension_semantics<parallel>], iteration_bounds = array<i64: 2>, scalar_prefetch = 0 : i64, scratch_operands = 0 : i64, tpu.core_type = #tpu.core_type<tc>, window_params = [{transform_indices = @transform_0, window_bounds = array<i64: 9, 256, 4>}, {pipeline_mode = #tpu.pipeline_mode<synchronous>, transform_indices = @transform_1, window_bounds = array<i64: 4, 20>}, {pipeline_mode = #tpu.pipeline_mode<synchronous>, transform_indices = @transform_2, window_bounds = array<i64: 1, 20>}, {pipeline_mode = #tpu.pipeline_mode<synchronous>, transform_indices = @transform_3, window_bounds = array<i64: 4, 8>}, {pipeline_mode = #tpu.pipeline_mode<synchronous>, transform_indices = @transform_4, window_bounds = array<i64: 1, 8>}, {transform_indices = @transform_5, window_bounds = array<i64: 256, 28>}]} {
    %c4 = arith.constant 4 : index
    %c0 = arith.constant 0 : index
    %c0_0 = arith.constant 0 : index
    %0 = vector.load %arg1[%c4, %c0, %c0_0] : memref<9x256x4xbf16, #tpu.memory_space<vmem>>, vector<1x256x4xbf16>
    %1 = vector.shape_cast %0 : vector<1x256x4xbf16> to vector<256x4xbf16>
    %c0_1 = arith.constant 0 : index
    %c0_2 = arith.constant 0 : index
    %2 = vector.load %arg2[%c0_1, %c0_2] : memref<4x20xbf16, #tpu.memory_space<vmem>>, vector<4x20xbf16>
    %cst = arith.constant dense<0.000000e+00> : vector<256x20xf32>
    %3 = tpu.matmul %1, %2, %cst {dimension_numbers = #tpu.dot_dimension_numbers<[1], [0], [0], [1], [0, 0, 1, 1], [], []>} : vector<256x4xbf16>, vector<4x20xbf16>, vector<256x20xf32> -> vector<256x20xf32>
    %c0_3 = arith.constant 0 : index
    %c0_4 = arith.constant 0 : index
    %4 = vector.load %arg3[%c0_3, %c0_4] : memref<1x20xf32, #tpu.memory_space<vmem>>, vector<1x20xf32>
    %5 = vector.broadcast %4 : vector<1x20xf32> to vector<256x20xf32>
    %6 = arith.addf %3, %5 : vector<256x20xf32>
    %cst_5 = arith.constant 0.000000e+00 : f32
    %7 = vector.broadcast %cst_5 : f32 to vector<256x20xf32>
    %8 = arith.maximumf %6, %7 : vector<256x20xf32>
    %c0_6 = arith.constant 0 : index
    %c0_7 = arith.constant 0 : index
    %c0_8 = arith.constant 0 : index
    %9 = vector.load %arg1[%c0_6, %c0_7, %c0_8] : memref<9x256x4xbf16, #tpu.memory_space<vmem>>, vector<1x256x4xbf16>
    %10 = vector.shape_cast %9 : vector<1x256x4xbf16> to vector<256x4xbf16>
    %c1 = arith.constant 1 : index
    %c0_9 = arith.constant 0 : index
    %c0_10 = arith.constant 0 : index
    %11 = vector.load %arg1[%c1, %c0_9, %c0_10] : memref<9x256x4xbf16, #tpu.memory_space<vmem>>, vector<1x256x4xbf16>
    %12 = vector.shape_cast %11 : vector<1x256x4xbf16> to vector<256x4xbf16>
    %13 = arith.maximumf %10, %12 : vector<256x4xbf16>
    %c2 = arith.constant 2 : index
    %c0_11 = arith.constant 0 : index
    %c0_12 = arith.constant 0 : index
    %14 = vector.load %arg1[%c2, %c0_11, %c0_12] : memref<9x256x4xbf16, #tpu.memory_space<vmem>>, vector<1x256x4xbf16>
    %15 = vector.shape_cast %14 : vector<1x256x4xbf16> to vector<256x4xbf16>
    %16 = arith.maximumf %13, %15 : vector<256x4xbf16>
    %c3 = arith.constant 3 : index
    %c0_13 = arith.constant 0 : index
    %c0_14 = arith.constant 0 : index
    %17 = vector.load %arg1[%c3, %c0_13, %c0_14] : memref<9x256x4xbf16, #tpu.memory_space<vmem>>, vector<1x256x4xbf16>
    %18 = vector.shape_cast %17 : vector<1x256x4xbf16> to vector<256x4xbf16>
    %19 = arith.maximumf %16, %18 : vector<256x4xbf16>
    %c4_15 = arith.constant 4 : index
    %c0_16 = arith.constant 0 : index
    %c0_17 = arith.constant 0 : index
    %20 = vector.load %arg1[%c4_15, %c0_16, %c0_17] : memref<9x256x4xbf16, #tpu.memory_space<vmem>>, vector<1x256x4xbf16>
    %21 = vector.shape_cast %20 : vector<1x256x4xbf16> to vector<256x4xbf16>
    %22 = arith.maximumf %19, %21 : vector<256x4xbf16>
    %c5 = arith.constant 5 : index
    %c0_18 = arith.constant 0 : index
    %c0_19 = arith.constant 0 : index
    %23 = vector.load %arg1[%c5, %c0_18, %c0_19] : memref<9x256x4xbf16, #tpu.memory_space<vmem>>, vector<1x256x4xbf16>
    %24 = vector.shape_cast %23 : vector<1x256x4xbf16> to vector<256x4xbf16>
    %25 = arith.maximumf %22, %24 : vector<256x4xbf16>
    %c6 = arith.constant 6 : index
    %c0_20 = arith.constant 0 : index
    %c0_21 = arith.constant 0 : index
    %26 = vector.load %arg1[%c6, %c0_20, %c0_21] : memref<9x256x4xbf16, #tpu.memory_space<vmem>>, vector<1x256x4xbf16>
    %27 = vector.shape_cast %26 : vector<1x256x4xbf16> to vector<256x4xbf16>
    %28 = arith.maximumf %25, %27 : vector<256x4xbf16>
    %c7 = arith.constant 7 : index
    %c0_22 = arith.constant 0 : index
    %c0_23 = arith.constant 0 : index
    %29 = vector.load %arg1[%c7, %c0_22, %c0_23] : memref<9x256x4xbf16, #tpu.memory_space<vmem>>, vector<1x256x4xbf16>
    %30 = vector.shape_cast %29 : vector<1x256x4xbf16> to vector<256x4xbf16>
    %31 = arith.maximumf %28, %30 : vector<256x4xbf16>
    %c8 = arith.constant 8 : index
    %c0_24 = arith.constant 0 : index
    %c0_25 = arith.constant 0 : index
    %32 = vector.load %arg1[%c8, %c0_24, %c0_25] : memref<9x256x4xbf16, #tpu.memory_space<vmem>>, vector<1x256x4xbf16>
    %33 = vector.shape_cast %32 : vector<1x256x4xbf16> to vector<256x4xbf16>
    %34 = arith.maximumf %31, %33 : vector<256x4xbf16>
    %cst_26 = arith.constant 0.000000e+00 : bf16
    %35 = vector.broadcast %cst_26 : bf16 to vector<256x4xbf16>
    %36 = arith.maximumf %34, %35 : vector<256x4xbf16>
    %c0_27 = arith.constant 0 : index
    %c0_28 = arith.constant 0 : index
    %37 = vector.load %arg4[%c0_27, %c0_28] : memref<4x8xbf16, #tpu.memory_space<vmem>>, vector<4x8xbf16>
    %cst_29 = arith.constant dense<0.000000e+00> : vector<256x8xf32>
    %38 = tpu.matmul %36, %37, %cst_29 {dimension_numbers = #tpu.dot_dimension_numbers<[1], [0], [0], [1], [0, 0, 1, 1], [], []>} : vector<256x4xbf16>, vector<4x8xbf16>, vector<256x8xf32> -> vector<256x8xf32>
    %c0_30 = arith.constant 0 : index
    %c0_31 = arith.constant 0 : index
    %39 = vector.load %arg5[%c0_30, %c0_31] : memref<1x8xf32, #tpu.memory_space<vmem>>, vector<1x8xf32>
    %40 = vector.broadcast %39 : vector<1x8xf32> to vector<256x8xf32>
    %41 = arith.addf %38, %40 : vector<256x8xf32>
    %cst_32 = arith.constant 0.000000e+00 : f32
    %42 = vector.broadcast %cst_32 : f32 to vector<256x8xf32>
    %43 = arith.maximumf %41, %42 : vector<256x8xf32>
    %44 = tpu.concatenate %8, %43 in 1 : vector<256x20xf32>, vector<256x8xf32> -> vector<256x28xf32>
    %c0_33 = arith.constant 0 : index
    %c0_34 = arith.constant 0 : index
    %45 = vector.load %arg6[%c0_33, %c0_34] : memref<256x28xf32, #tpu.memory_space<vmem>>, vector<256x28xf32>
    tpu.vector_store %arg6[%c0_33, %c0_34], %44 {strides = array<i32>} : memref<256x28xf32, #tpu.memory_space<vmem>>, vector<256x28xf32>,
    return
  }
  func.func @transform_0(%arg0: i32) -> (i32, i32, i32) {
    %c0_i32 = arith.constant 0 : i32
    %c0_i32_0 = arith.constant 0 : i32
    %c0_i32_1 = arith.constant 0 : i32
    return %c0_i32, %arg0, %c0_i32_0 : i32, i32, i32
  }
  func.func @transform_1(%arg0: i32) -> (i32, i32) {
    %c0_i32 = arith.constant 0 : i32
    %c0_i32_0 = arith.constant 0 : i32
    %c0_i32_1 = arith.constant 0 : i32
    return %c0_i32, %c0_i32_0 : i32, i32
  }
  func.func @transform_2(%arg0: i32) -> (i32, i32) {
    %c0_i32 = arith.constant 0 : i32
    %c0_i32_0 = arith.constant 0 : i32
    %c0_i32_1 = arith.constant 0 : i32
    return %c0_i32, %c0_i32_0 : i32, i32
  }
  func.func @transform_3(%arg0: i32) -> (i32, i32) {
    %c0_i32 = arith.constant 0 : i32
    %c0_i32_0 = arith.constant 0 : i32
    %c0_i32_1 = arith.constant 0 : i32
    return %c0_i32, %c0_i32_0 : i32, i32
  }
  func.func @transform_4(%arg0: i32) -> (i32, i32) {
    %c0_i32 = arith.constant 0 : i32
    %c0_i32_0 = arith.constant 0 : i32
    %c0_i32_1 = arith.constant 0 : i32
    return %c0_i32, %c0_i32_0 : i32, i32
  }
  func.func @transform_5(%arg0: i32) -> (i32, i32) {
    %c0_i32 = arith.constant 0 : i32
    %c0_i32_0 = arith.constant 0 : i32
    return %arg0, %c0_i32 : i32, i32
  }
}

module attributes {stable_mosaic.version = 11 : i64} {
  func.func @_conv_relu_kernel(%arg0: i32, %arg1: memref<256x54xbf16, #tpu.memory_space<vmem>>, %arg2: memref<54x8xbf16, #tpu.memory_space<vmem>>, %arg3: memref<1x8xf32, #tpu.memory_space<vmem>>, %arg4: memref<256x8xf32, #tpu.memory_space<vmem>>) attributes {dimension_semantics = [#tpu.dimension_semantics<parallel>], iteration_bounds = array<i64: 2>, scalar_prefetch = 0 : i64, scratch_operands = 0 : i64, tpu.core_type = #tpu.core_type<tc>, window_params = [{transform_indices = @transform_0, window_bounds = array<i64: 256, 54>}, {pipeline_mode = #tpu.pipeline_mode<synchronous>, transform_indices = @transform_1, window_bounds = array<i64: 54, 8>}, {pipeline_mode = #tpu.pipeline_mode<synchronous>, transform_indices = @transform_2, window_bounds = array<i64: 1, 8>}, {transform_indices = @transform_3, window_bounds = array<i64: 256, 8>}]} {
    %c0 = arith.constant 0 : index
    %c0_0 = arith.constant 0 : index
    %0 = vector.load %arg1[%c0, %c0_0] : memref<256x54xbf16, #tpu.memory_space<vmem>>, vector<256x54xbf16>
    %c0_1 = arith.constant 0 : index
    %c0_2 = arith.constant 0 : index
    %1 = vector.load %arg2[%c0_1, %c0_2] : memref<54x8xbf16, #tpu.memory_space<vmem>>, vector<54x8xbf16>
    %cst = arith.constant dense<0.000000e+00> : vector<256x8xf32>
    %2 = tpu.matmul %0, %1, %cst {dimension_numbers = #tpu.dot_dimension_numbers<[1], [0], [0], [1], [0, 0, 1, 1], [], []>} : vector<256x54xbf16>, vector<54x8xbf16>, vector<256x8xf32> -> vector<256x8xf32>
    %c0_3 = arith.constant 0 : index
    %c0_4 = arith.constant 0 : index
    %3 = vector.load %arg3[%c0_3, %c0_4] : memref<1x8xf32, #tpu.memory_space<vmem>>, vector<1x8xf32>
    %4 = vector.broadcast %3 : vector<1x8xf32> to vector<256x8xf32>
    %5 = arith.addf %2, %4 : vector<256x8xf32>
    %cst_5 = arith.constant 0.000000e+00 : f32
    %6 = vector.broadcast %cst_5 : f32 to vector<256x8xf32>
    %7 = arith.maximumf %5, %6 : vector<256x8xf32>
    %c0_6 = arith.constant 0 : index
    %c0_7 = arith.constant 0 : index
    %8 = vector.load %arg4[%c0_6, %c0_7] : memref<256x8xf32, #tpu.memory_space<vmem>>, vector<256x8xf32>
    tpu.vector_store %arg4[%c0_6, %c0_7], %7 {strides = array<i32>} : memref<256x8xf32, #tpu.memory_space<vmem>>, vector<256x8xf32>,
    return
  }
  func.func @transform_0(%arg0: i32) -> (i32, i32) {
    %c0_i32 = arith.constant 0 : i32
    %c0_i32_0 = arith.constant 0 : i32
    return %arg0, %c0_i32 : i32, i32
  }
  func.func @transform_1(%arg0: i32) -> (i32, i32) {
    %c0_i32 = arith.constant 0 : i32
    %c0_i32_0 = arith.constant 0 : i32
    %c0_i32_1 = arith.constant 0 : i32
    return %c0_i32, %c0_i32_0 : i32, i32
  }
  func.func @transform_2(%arg0: i32) -> (i32, i32) {
    %c0_i32 = arith.constant 0 : i32
    %c0_i32_0 = arith.constant 0 : i32
    %c0_i32_1 = arith.constant 0 : i32
    return %c0_i32, %c0_i32_0 : i32, i32
  }
  func.func @transform_3(%arg0: i32) -> (i32, i32) {
    %c0_i32 = arith.constant 0 : i32
    %c0_i32_0 = arith.constant 0 : i32
    return %arg0, %c0_i32 : i32, i32
  }
}

module attributes {stable_mosaic.version = 11 : i64} {
  func.func @_conv_relu_kernel(%arg0: i32, %arg1: memref<256x150xbf16, #tpu.memory_space<vmem>>, %arg2: memref<150x8xbf16, #tpu.memory_space<vmem>>, %arg3: memref<1x8xf32, #tpu.memory_space<vmem>>, %arg4: memref<256x8xf32, #tpu.memory_space<vmem>>) attributes {dimension_semantics = [#tpu.dimension_semantics<parallel>], iteration_bounds = array<i64: 2>, scalar_prefetch = 0 : i64, scratch_operands = 0 : i64, tpu.core_type = #tpu.core_type<tc>, window_params = [{transform_indices = @transform_0, window_bounds = array<i64: 256, 150>}, {pipeline_mode = #tpu.pipeline_mode<synchronous>, transform_indices = @transform_1, window_bounds = array<i64: 150, 8>}, {pipeline_mode = #tpu.pipeline_mode<synchronous>, transform_indices = @transform_2, window_bounds = array<i64: 1, 8>}, {transform_indices = @transform_3, window_bounds = array<i64: 256, 8>}]} {
    %c0 = arith.constant 0 : index
    %c0_0 = arith.constant 0 : index
    %0 = vector.load %arg1[%c0, %c0_0] : memref<256x150xbf16, #tpu.memory_space<vmem>>, vector<256x150xbf16>
    %c0_1 = arith.constant 0 : index
    %c0_2 = arith.constant 0 : index
    %1 = vector.load %arg2[%c0_1, %c0_2] : memref<150x8xbf16, #tpu.memory_space<vmem>>, vector<150x8xbf16>
    %cst = arith.constant dense<0.000000e+00> : vector<256x8xf32>
    %2 = tpu.matmul %0, %1, %cst {dimension_numbers = #tpu.dot_dimension_numbers<[1], [0], [0], [1], [0, 0, 1, 1], [], []>} : vector<256x150xbf16>, vector<150x8xbf16>, vector<256x8xf32> -> vector<256x8xf32>
    %c0_3 = arith.constant 0 : index
    %c0_4 = arith.constant 0 : index
    %3 = vector.load %arg3[%c0_3, %c0_4] : memref<1x8xf32, #tpu.memory_space<vmem>>, vector<1x8xf32>
    %4 = vector.broadcast %3 : vector<1x8xf32> to vector<256x8xf32>
    %5 = arith.addf %2, %4 : vector<256x8xf32>
    %cst_5 = arith.constant 0.000000e+00 : f32
    %6 = vector.broadcast %cst_5 : f32 to vector<256x8xf32>
    %7 = arith.maximumf %5, %6 : vector<256x8xf32>
    %c0_6 = arith.constant 0 : index
    %c0_7 = arith.constant 0 : index
    %8 = vector.load %arg4[%c0_6, %c0_7] : memref<256x8xf32, #tpu.memory_space<vmem>>, vector<256x8xf32>
    tpu.vector_store %arg4[%c0_6, %c0_7], %7 {strides = array<i32>} : memref<256x8xf32, #tpu.memory_space<vmem>>, vector<256x8xf32>,
    return
  }
  func.func @transform_0(%arg0: i32) -> (i32, i32) {
    %c0_i32 = arith.constant 0 : i32
    %c0_i32_0 = arith.constant 0 : i32
    return %arg0, %c0_i32 : i32, i32
  }
  func.func @transform_1(%arg0: i32) -> (i32, i32) {
    %c0_i32 = arith.constant 0 : i32
    %c0_i32_0 = arith.constant 0 : i32
    %c0_i32_1 = arith.constant 0 : i32
    return %c0_i32, %c0_i32_0 : i32, i32
  }
  func.func @transform_2(%arg0: i32) -> (i32, i32) {
    %c0_i32 = arith.constant 0 : i32
    %c0_i32_0 = arith.constant 0 : i32
    %c0_i32_1 = arith.constant 0 : i32
    return %c0_i32, %c0_i32_0 : i32, i32
  }
  func.func @transform_3(%arg0: i32) -> (i32, i32) {
    %c0_i32 = arith.constant 0 : i32
    %c0_i32_0 = arith.constant 0 : i32
    return %arg0, %c0_i32 : i32, i32
  }
}

</mosaic_0001>

<llo_original>
// kernel: inception_block_pallas.3
$region0: #{inception_block_pallas.3}
  #allocation0 [shape = 'u32[]', space=smem, size = 0x4, offset = 0x4, fixed_abs, tag = 'smem constant byte address 0x4 - core index']
  #allocation1 [shape = 'u32[144,128]{1,0:T(1,128)}', space=vmem, size = 0x12000, scoped, tag = 'internal scratch']
  %s0 = inlined_call_operand.vmem [shape: bf16[9,512,4], index: 0, kind: input, shape index: {}]
  %s1 = inlined_call_operand.vmem [shape: bf16[4,20], index: 1, kind: input, shape index: {}]
  %s2 = inlined_call_operand.vmem [shape: f32[1,20], index: 2, kind: input, shape index: {}]
  %s3 = inlined_call_operand.vmem [shape: bf16[4,8], index: 3, kind: input, shape index: {}]
  %s4 = inlined_call_operand.vmem [shape: f32[1,8], index: 4, kind: input, shape index: {}]
  %s5 = inlined_call_operand.vmem [shape: f32[512,28], index: 5, kind: output, shape index: {}]
  %s6 = sld [smem:[#allocation0]]
  $region94: #{inception_block_pallas.3} parent=0
    _
  %s8 = ssub.s32 1, %s6
  %s9 = scalar_select 0, %s8, %s6
  $region1: #{inception_block_pallas.3} parent=0
    #allocation2 [shape = 'u8[1179648]{0}', space=vmem, size = 0x120000, scoped, tag = 'input window, operand 0']
    loop: start=0, step=1, limit=4
    $region2: #{inception_block_pallas.3} parent=1 // loop_pre_header
      _
    $region3: #{inception_block_pallas.3} parent=1 // loop_header
      %s11 = sphi 0, %s15
      %p12 = scmp.ge.s32.totalorder %s11, 4
      %s21 = sphi 0, %s23
      %s24 = sphi 0, %s21
      %s25 = sphi 0, %s24
      %s41 = sphi 0, %s25
      %s45 = sphi 0, %s45
      %s47 = sphi 0, %s45
      %s48 = sphi 0, %s47
      %s62 = sphi 0, %s48
      %s66 = sphi 0, %s66
      %s68 = sphi 0, %s66
      %s69 = sphi 0, %s68
      %s83 = sphi 0, %s69
      %s87 = sphi 0, %s87
      %s89 = sphi 0, %s87
      %s90 = sphi 0, %s89
      %s104 = sphi 0, %s90
      %s108 = sphi 0, %s108
      %s110 = sphi 0, %s108
      %s111 = sphi 0, %s110
      %s125 = sphi 0, %s111
      %s131 = sphi 0, %s133
      %s134 = sphi 0, %s131
      %s135 = sphi 0, %s134
      %s151 = sphi 0, %s135
    $region4: #{inception_block_pallas.3} parent=1 // loop_header_branch
      %14 = sbr.rel (%p12) target = $region8
    $region5: #{inception_block_pallas.3} parent=1 // loop_body
      %s16 = ssub.s32 %s11, 1
      %s17 = ssub.s32 %s11, 2
      %s18 = sadd.s32 %s11, 1
      %s19 = ssub.s32 %s11, %s18
      %p20 = scmp.eq.s32.totalorder %s19, 0
      %s22 = sadd.s32 %s21, 1
      %s23 = scalar_select %p20, %s21, %s22
      %p26 = pneg %p20
      %p27 = scmp.eq.s32.totalorder %s11, 1
      %p28 = por %p26, %p27
      %p29 = scmp.ne.s32.totalorder %s21, %s24
      %p30 = scmp.eq.s32.totalorder %s11, 0
      %p31 = por %p29, %p30
      %p32 = scmp.ne.s32.totalorder %s21, %s24
      %p33 = scmp.eq.s32.totalorder %s16, 1
      %p34 = por %p32, %p33
      %p35 = scmp.ne.s32.totalorder %s24, %s25
      %p36 = scmp.eq.s32.totalorder %s16, 0
      %p37 = por %p35, %p36
      %p38 = scmp.ne.s32.totalorder %s24, %s25
      %p39 = scmp.eq.s32.totalorder %s17, 1
      %p40 = por %p38, %p39
      %p42 = scmp.ne.s32.totalorder %s25, %s41
      %p43 = scmp.eq.s32.totalorder %s17, 0
      %p44 = por %p42, %p43
      %s46 = sadd.s32 %s45, 1
      %p49 = scmp.eq.s32.totalorder %s11, 1
      %p50 = scmp.ne.s32.totalorder %s45, %s47
      %p51 = scmp.eq.s32.totalorder %s11, 0
      %p52 = por %p50, %p51
      %p53 = scmp.ne.s32.totalorder %s45, %s47
      %p54 = scmp.eq.s32.totalorder %s16, 1
      %p55 = por %p53, %p54
      %p56 = scmp.ne.s32.totalorder %s47, %s48
      %p57 = scmp.eq.s32.totalorder %s16, 0
      %p58 = por %p56, %p57
      %p59 = scmp.ne.s32.totalorder %s47, %s48
      %p60 = scmp.eq.s32.totalorder %s17, 1
      %p61 = por %p59, %p60
      %p63 = scmp.ne.s32.totalorder %s48, %s62
      %p64 = scmp.eq.s32.totalorder %s17, 0
      %p65 = por %p63, %p64
      %s67 = sadd.s32 %s66, 1
      %p70 = scmp.eq.s32.totalorder %s11, 1
      %p71 = scmp.ne.s32.totalorder %s66, %s68
      %p72 = scmp.eq.s32.totalorder %s11, 0
      %p73 = por %p71, %p72
      %p74 = scmp.ne.s32.totalorder %s66, %s68
      %p75 = scmp.eq.s32.totalorder %s16, 1
      %p76 = por %p74, %p75
      %p77 = scmp.ne.s32.totalorder %s68, %s69
      %p78 = scmp.eq.s32.totalorder %s16, 0
      %p79 = por %p77, %p78
      %p80 = scmp.ne.s32.totalorder %s68, %s69
      %p81 = scmp.eq.s32.totalorder %s17, 1
      %p82 = por %p80, %p81
      %p84 = scmp.ne.s32.totalorder %s69, %s83
      %p85 = scmp.eq.s32.totalorder %s17, 0
      %p86 = por %p84, %p85
      %s88 = sadd.s32 %s87, 1
      %p91 = scmp.eq.s32.totalorder %s11, 1
      %p92 = scmp.ne.s32.totalorder %s87, %s89
      %p93 = scmp.eq.s32.totalorder %s11, 0
      %p94 = por %p92, %p93
      %p95 = scmp.ne.s32.totalorder %s87, %s89
      %p96 = scmp.eq.s32.totalorder %s16, 1
      %p97 = por %p95, %p96
      %p98 = scmp.ne.s32.totalorder %s89, %s90
      %p99 = scmp.eq.s32.totalorder %s16, 0
      %p100 = por %p98, %p99
      %p101 = scmp.ne.s32.totalorder %s89, %s90
      %p102 = scmp.eq.s32.totalorder %s17, 1
      %p103 = por %p101, %p102
      %p105 = scmp.ne.s32.totalorder %s90, %s104
      %p106 = scmp.eq.s32.totalorder %s17, 0
      %p107 = por %p105, %p106
      %s109 = sadd.s32 %s108, 1
      %p112 = scmp.eq.s32.totalorder %s11, 1
      %p113 = scmp.ne.s32.totalorder %s108, %s110
      %p114 = scmp.eq.s32.totalorder %s11, 0
      %p115 = por %p113, %p114
      %p116 = scmp.ne.s32.totalorder %s108, %s110
      %p117 = scmp.eq.s32.totalorder %s16, 1
      %p118 = por %p116, %p117
      %p119 = scmp.ne.s32.totalorder %s110, %s111
      %p120 = scmp.eq.s32.totalorder %s16, 0
      %p121 = por %p119, %p120
      %p122 = scmp.ne.s32.totalorder %s110, %s111
      %p123 = scmp.eq.s32.totalorder %s17, 1
      %p124 = por %p122, %p123
      %p126 = scmp.ne.s32.totalorder %s111, %s125
      %p127 = scmp.eq.s32.totalorder %s17, 0
      %p128 = por %p126, %p127
      %s129 = ssub.s32 %s11, %s18
      %p130 = scmp.eq.s32.totalorder %s129, 0
      %s132 = sadd.s32 %s131, 1
      %s133 = scalar_select %p130, %s131, %s132
      %p136 = pneg %p130
      %p137 = scmp.eq.s32.totalorder %s11, 1
      %p138 = por %p136, %p137
      %p139 = scmp.ne.s32.totalorder %s131, %s134
      %p140 = scmp.eq.s32.totalorder %s11, 0
      %p141 = por %p139, %p140
      %p142 = scmp.ne.s32.totalorder %s131, %s134
      %p143 = scmp.eq.s32.totalorder %s16, 1
      %p144 = por %p142, %p143
      %p145 = scmp.ne.s32.totalorder %s134, %s135
      %p146 = scmp.eq.s32.totalorder %s16, 0
      %p147 = por %p145, %p146
      %p148 = scmp.ne.s32.totalorder %s134, %s135
      %p149 = scmp.eq.s32.totalorder %s17, 1
      %p150 = por %p148, %p149
      %p152 = scmp.ne.s32.totalorder %s135, %s151
      %p153 = scmp.eq.s32.totalorder %s17, 0
      %p154 = por %p152, %p153
      %p155 = scmp.le.s32.totalorder 1, %s11
      %p156 = scmp.lt.s32.totalorder %s11, 3
      %p157 = pnand %p155, %p156
      %p158 = pneg %p157
      // Predicated region
      $region9: #{inception_block_pallas.3} parent=5 // pred_check
        _
      $region10: #{inception_block_pallas.3} parent=5 // pred_check_branch
        %160 = sbr.rel (%p157) target = $region12
      $region11: #{inception_block_pallas.3} parent=5 // pred_region
        %s161 = ssub.s32 %s11, 1
        // Predicated region
        $region13: #{inception_block_pallas.3} parent=11 // pred_check
          %p162 = pneg %p58
        $region14: #{inception_block_pallas.3} parent=11 // pred_check_branch
          %164 = sbr.rel (%p162) target = $region16
        $region15: #{inception_block_pallas.3} parent=11 // pred_region
          _
        $region16: #{inception_block_pallas.3} parent=11 // pred_fallthru
          _
        // Predicated region
        $region17: #{inception_block_pallas.3} parent=11 // pred_check
          %p165 = pneg %p79
        $region18: #{inception_block_pallas.3} parent=11 // pred_check_branch
          %167 = sbr.rel (%p165) target = $region20
        $region19: #{inception_block_pallas.3} parent=11 // pred_region
          _
        $region20: #{inception_block_pallas.3} parent=11 // pred_fallthru
          _
        // Predicated region
        $region21: #{inception_block_pallas.3} parent=11 // pred_check
          %p168 = pneg %p100
        $region22: #{inception_block_pallas.3} parent=11 // pred_check_branch
          %170 = sbr.rel (%p168) target = $region24
        $region23: #{inception_block_pallas.3} parent=11 // pred_region
          _
        $region24: #{inception_block_pallas.3} parent=11 // pred_fallthru
          _
        // Predicated region
        $region25: #{inception_block_pallas.3} parent=11 // pred_check
          %p171 = pneg %p121
        $region26: #{inception_block_pallas.3} parent=11 // pred_check_branch
          %173 = sbr.rel (%p171) target = $region28
        $region27: #{inception_block_pallas.3} parent=11 // pred_region
          _
        $region28: #{inception_block_pallas.3} parent=11 // pred_fallthru
          _
      $region12: #{inception_block_pallas.3} parent=5 // pred_fallthru
        _
      %p174 = scmp.lt.s32.totalorder %s11, 2
      // Predicated region
      $region29: #{inception_block_pallas.3} parent=5 // pred_check
        %p175 = pneg %p174
      $region30: #{inception_block_pallas.3} parent=5 // pred_check_branch
        %177 = sbr.rel (%p175) target = $region32
      $region31: #{inception_block_pallas.3} parent=5 // pred_region
        // Predicated region
        $region33: #{inception_block_pallas.3} parent=31 // pred_check
          %p178 = pneg %p31
        $region34: #{inception_block_pallas.3} parent=31 // pred_check_branch
          %180 = sbr.rel (%p178) target = $region36
        $region35: #{inception_block_pallas.3} parent=31 // pred_region
          %s181 = sand.u32 %s21, 1
          %s182 = sand.u32 %s21, 1
          %s183 = smul.addr %s182, 1152
          %s184 = scalar_lea.vmem [#allocation2], %s183
          %s185 = smul.u32 32, %s11
          %s186 = smul.addr %s185, 4
          %s187 = scalar_lea.vmem %s0, %s186
          // Predicated region
          $region37: #{inception_block_pallas.3} parent=35 // pred_check
            _
          $region38: #{inception_block_pallas.3} parent=35 // pred_check_branch
            %189 = sbr.rel (0) target = $region40
          $region39: #{inception_block_pallas.3} parent=35 // pred_region
            // Predicated region
            $region41: #{inception_block_pallas.3} parent=39 // pred_check
              _
            $region42: #{inception_block_pallas.3} parent=39 // pred_check_branch
              %191 = sbr.rel target = $region44
            $region43: #{inception_block_pallas.3} parent=39 // pred_region
              // Predicated region
              $region56: #{inception_block_pallas.3} parent=43 // pred_check
                _
              $region57: #{inception_block_pallas.3} parent=43 // pred_check_branch
                %781 = sbr.rel (0) target = $region59
              $region58: #{inception_block_pallas.3} parent=43 // pred_region
                loop: start=0, step=1, limit=1
                $region60: #{inception_block_pallas.3} parent=58 // loop_pre_header
                  _
                $region61: #{inception_block_pallas.3} parent=58 // loop_header
                  %s783 = sphi 0, %s787
                  %p784 = scmp.ge.s32.totalorder %s783, 1
                  %s788 = sphi %s187, %s187
                  %s789 = sphi %s184, %s184
                $region62: #{inception_block_pallas.3} parent=58 // loop_header_branch
                  %786 = sbr.rel (%p784) target = $region66
                $region63: #{inception_block_pallas.3} parent=58 // loop_body
                  _
                $region64: #{inception_block_pallas.3} parent=58 // loop_footer
                  %s787 = sadd.s32 1, %s783
                $region65: #{inception_block_pallas.3} parent=58 // loop_footer_branch
                  %782 = sbr.rel target = $region61
                $region66: #{inception_block_pallas.3} parent=58 // loop_exit
                  _
                %s791 = ssub.s32 16, 1
                loop: start=0, step=1, limit=1
                $region67: #{inception_block_pallas.3} parent=58 // loop_pre_header
                  _
                $region68: #{inception_block_pallas.3} parent=58 // loop_header
                  %s793 = sphi 0, %s797
                  %p794 = scmp.ge.s32.totalorder %s793, 1
                  %s798 = sphi %s187, %s187
                  %s799 = sphi %s184, %s184
                $region69: #{inception_block_pallas.3} parent=58 // loop_header_branch
                  %796 = sbr.rel (%p794) target = $region73
                $region70: #{inception_block_pallas.3} parent=58 // loop_body
                  %v800 = vld [vmem:[%s798] sm:%s791]
                  %801 = vst [vmem:[%s799] sm:%s791] %v800
                  %v802 = vld [vmem:[%s798 + $0x4] sm:%s791]
                  %803 = vst [vmem:[%s799 + $0x4] sm:%s791] %v802
                  %v804 = vld [vmem:[%s798 + $0x8] sm:%s791]
                  %805 = vst [vmem:[%s799 + $0x8] sm:%s791] %v804
                  %v806 = vld [vmem:[%s798 + $0xc] sm:%s791]
                  %807 = vst [vmem:[%s799 + $0xc] sm:%s791] %v806
                  %v808 = vld [vmem:[%s798 + $0x10] sm:%s791]
                  %809 = vst [vmem:[%s799 + $0x10] sm:%s791] %v808
                  %v810 = vld [vmem:[%s798 + $0x14] sm:%s791]
                  %811 = vst [vmem:[%s799 + $0x14] sm:%s791] %v810
                  %v812 = vld [vmem:[%s798 + $0x18] sm:%s791]
                  %813 = vst [vmem:[%s799 + $0x18] sm:%s791] %v812
                  %v814 = vld [vmem:[%s798 + $0x1c] sm:%s791]
                  %815 = vst [vmem:[%s799 + $0x1c] sm:%s791] %v814
                  %v816 = vld [vmem:[%s798 + $0x20] sm:%s791]
                  %817 = vst [vmem:[%s799 + $0x20] sm:%s791] %v816
                  %v818 = vld [vmem:[%s798 + $0x24] sm:%s791]
                  %819 = vst [vmem:[%s799 + $0x24] sm:%s791] %v818
                  %v820 = vld [vmem:[%s798 + $0x28] sm:%s791]
                  %821 = vst [vmem:[%s799 + $0x28] sm:%s791] %v820
                  %v822 = vld [vmem:[%s798 + $0x2c] sm:%s791]
                  %823 = vst [vmem:[%s799 + $0x2c] sm:%s791] %v822
                  %v824 = vld [vmem:[%s798 + $0x30] sm:%s791]
                  %825 = vst [vmem:[%s799 + $0x30] sm:%s791] %v824
                  %v826 = vld [vmem:[%s798 + $0x34] sm:%s791]
                  %827 = vst [vmem:[%s799 + $0x34] sm:%s791] %v826
                  %v828 = vld [vmem:[%s798 + $0x38] sm:%s791]
                  %829 = vst [vmem:[%s799 + $0x38] sm:%s791] %v828
                  %v830 = vld [vmem:[%s798 + $0x3c] sm:%s791]
                  %831 = vst [vmem:[%s799 + $0x3c] sm:%s791] %v830
                  %v832 = vld [vmem:[%s798 + $0x40] sm:%s791]
                  %833 = vst [vmem:[%s799 + $0x40] sm:%s791] %v832
                  %v834 = vld [vmem:[%s798 + $0x44] sm:%s791]
                  %835 = vst [vmem:[%s799 + $0x44] sm:%s791] %v834
                  %v836 = vld [vmem:[%s798 + $0x48] sm:%s791]
                  %837 = vst [vmem:[%s799 + $0x48] sm:%s791] %v836
                  %v838 = vld [vmem:[%s798 + $0x4c] sm:%s791]
                  %839 = vst [vmem:[%s799 + $0x4c] sm:%s791] %v838
                  %v840 = vld [vmem:[%s798 + $0x50] sm:%s791]
                  %841 = vst [vmem:[%s799 + $0x50] sm:%s791] %v840
                  %v842 = vld [vmem:[%s798 + $0x54] sm:%s791]
                  %843 = vst [vmem:[%s799 + $0x54] sm:%s791] %v842
                  %v844 = vld [vmem:[%s798 + $0x58] sm:%s791]
                  %845 = vst [vmem:[%s799 + $0x58] sm:%s791] %v844
                  %v846 = vld [vmem:[%s798 + $0x5c] sm:%s791]
                  %847 = vst [vmem:[%s799 + $0x5c] sm:%s791] %v846
                  %v848 = vld [vmem:[%s798 + $0x60] sm:%s791]
                  %849 = vst [vmem:[%s799 + $0x60] sm:%s791] %v848
                  %v850 = vld [vmem:[%s798 + $0x64] sm:%s791]
                  %851 = vst [vmem:[%s799 + $0x64] sm:%s791] %v850
                  %v852 = vld [vmem:[%s798 + $0x68] sm:%s791]
                  %853 = vst [vmem:[%s799 + $0x68] sm:%s791] %v852
                  %v854 = vld [vmem:[%s798 + $0x6c] sm:%s791]
                  %855 = vst [vmem:[%s799 + $0x6c] sm:%s791] %v854
                  %v856 = vld [vmem:[%s798 + $0x70] sm:%s791]
                  %857 = vst [vmem:[%s799 + $0x70] sm:%s791] %v856
                  %v858 = vld [vmem:[%s798 + $0x74] sm:%s791]
                  %859 = vst [vmem:[%s799 + $0x74] sm:%s791] %v858
                  %v860 = vld [vmem:[%s798 + $0x78] sm:%s791]
                  %861 = vst [vmem:[%s799 + $0x78] sm:%s791] %v860
                  %v862 = vld [vmem:[%s798 + $0x7c] sm:%s791]
                  %863 = vst [vmem:[%s799 + $0x7c] sm:%s791] %v862
                  %v864 = vld [vmem:[%s798 + $0x100] sm:%s791]
                  %865 = vst [vmem:[%s799 + $0x80] sm:%s791] %v864
                  %v866 = vld [vmem:[%s798 + $0x104] sm:%s791]
                  %867 = vst [vmem:[%s799 + $0x84] sm:%s791] %v866
                  %v868 = vld [vmem:[%s798 + $0x108] sm:%s791]
                  %869 = vst [vmem:[%s799 + $0x88] sm:%s791] %v868
                  %v870 = vld [vmem:[%s798 + $0x10c] sm:%s791]
                  %871 = vst [vmem:[%s799 + $0x8c] sm:%s791] %v870
                  %v872 = vld [vmem:[%s798 + $0x110] sm:%s791]
                  %873 = vst [vmem:[%s799 + $0x90] sm:%s791] %v872
                  %v874 = vld [vmem:[%s798 + $0x114] sm:%s791]
                  %875 = vst [vmem:[%s799 + $0x94] sm:%s791] %v874
                  %v876 = vld [vmem:[%s798 + $0x118] sm:%s791]
                  %877 = vst [vmem:[%s799 + $0x98] sm:%s791] %v876
                  %v878 = vld [vmem:[%s798 + $0x11c] sm:%s791]
                  %879 = vst [vmem:[%s799 + $0x9c] sm:%s791] %v878
                  %v880 = vld [vmem:[%s798 + $0x120] sm:%s791]
                  %881 = vst [vmem:[%s799 + $0xa0] sm:%s791] %v880
                  %v882 = vld [vmem:[%s798 + $0x124] sm:%s791]
                  %883 = vst [vmem:[%s799 + $0xa4] sm:%s791] %v882
                  %v884 = vld [vmem:[%s798 + $0x128] sm:%s791]
                  %885 = vst [vmem:[%s799 + $0xa8] sm:%s791] %v884
                  %v886 = vld [vmem:[%s798 + $0x12c] sm:%s791]
                  %887 = vst [vmem:[%s799 + $0xac] sm:%s791] %v886
                  %v888 = vld [vmem:[%s798 + $0x130] sm:%s791]
                  %889 = vst [vmem:[%s799 + $0xb0] sm:%s791] %v888
                  %v890 = vld [vmem:[%s798 + $0x134] sm:%s791]
                  %891 = vst [vmem:[%s799 + $0xb4] sm:%s791] %v890
                  %v892 = vld [vmem:[%s798 + $0x138] sm:%s791]
                  %893 = vst [vmem:[%s799 + $0xb8] sm:%s791] %v892
                  %v894 = vld [vmem:[%s798 + $0x13c] sm:%s791]
                  %895 = vst [vmem:[%s799 + $0xbc] sm:%s791] %v894
                  %v896 = vld [vmem:[%s798 + $0x140] sm:%s791]
                  %897 = vst [vmem:[%s799 + $0xc0] sm:%s791] %v896
                  %v898 = vld [vmem:[%s798 + $0x144] sm:%s791]
                  %899 = vst [vmem:[%s799 + $0xc4] sm:%s791] %v898
                  %v900 = vld [vmem:[%s798 + $0x148] sm:%s791]
                  %901 = vst [vmem:[%s799 + $0xc8] sm:%s791] %v900
                  %v902 = vld [vmem:[%s798 + $0x14c] sm:%s791]
                  %903 = vst [vmem:[%s799 + $0xcc] sm:%s791] %v902
                  %v904 = vld [vmem:[%s798 + $0x150] sm:%s791]
                  %905 = vst [vmem:[%s799 + $0xd0] sm:%s791] %v904
                  %v906 = vld [vmem:[%s798 + $0x154] sm:%s791]
                  %907 = vst [vmem:[%s799 + $0xd4] sm:%s791] %v906
                  %v908 = vld [vmem:[%s798 + $0x158] sm:%s791]
                  %909 = vst [vmem:[%s799 + $0xd8] sm:%s791] %v908
                  %v910 = vld [vmem:[%s798 + $0x15c] sm:%s791]
                  %911 = vst [vmem:[%s799 + $0xdc] sm:%s791] %v910
                  %v912 = vld [vmem:[%s798 + $0x160] sm:%s791]
                  %913 = vst [vmem:[%s799 + $0xe0] sm:%s791] %v912
                  %v914 = vld [vmem:[%s798 + $0x164] sm:%s791]
                  %915 = vst [vmem:[%s799 + $0xe4] sm:%s791] %v914
                  %v916 = vld [vmem:[%s798 + $0x168] sm:%s791]
                  %917 = vst [vmem:[%s799 + $0xe8] sm:%s791] %v916
                  %v918 = vld [vmem:[%s798 + $0x16c] sm:%s791]
                  %919 = vst [vmem:[%s799 + $0xec] sm:%s791] %v918
                  %v920 = vld [vmem:[%s798 + $0x170] sm:%s791]
                  %921 = vst [vmem:[%s799 + $0xf0] sm:%s791] %v920
                  %v922 = vld [vmem:[%s798 + $0x174] sm:%s791]
                  %923 = vst [vmem:[%s799 + $0xf4] sm:%s791] %v922
                  %v924 = vld [vmem:[%s798 + $0x178] sm:%s791]
                  %925 = vst [vmem:[%s799 + $0xf8] sm:%s791] %v924
                  %v926 = vld [vmem:[%s798 + $0x17c] sm:%s791]
                  %927 = vst [vmem:[%s799 + $0xfc] sm:%s791] %v926
                  %v928 = vld [vmem:[%s798 + $0x200] sm:%s791]
                  %929 = vst [vmem:[%s799 + $0x100] sm:%s791] %v928
                  %v930 = vld [vmem:[%s798 + $0x204] sm:%s791]
                  %931 = vst [vmem:[%s799 + $0x104] sm:%s791] %v930
                  %v932 = vld [vmem:[%s798 + $0x208] sm:%s791]
                  %933 = vst [vmem:[%s799 + $0x108] sm:%s791] %v932
                  %v934 = vld [vmem:[%s798 + $0x20c] sm:%s791]
                  %935 = vst [vmem:[%s799 + $0x10c] sm:%s791] %v934
                  %v936 = vld [vmem:[%s798 + $0x210] sm:%s791]
                  %937 = vst [vmem:[%s799 + $0x110] sm:%s791] %v936
                  %v938 = vld [vmem:[%s798 + $0x214] sm:%s791]
                  %939 = vst [vmem:[%s799 + $0x114] sm:%s791] %v938
                  %v940 = vld [vmem:[%s798 + $0x218] sm:%s791]
                  %941 = vst [vmem:[%s799 + $0x118] sm:%s791] %v940
                  %v942 = vld [vmem:[%s798 + $0x21c] sm:%s791]
                  %943 = vst [vmem:[%s799 + $0x11c] sm:%s791] %v942
                  %v944 = vld [vmem:[%s798 + $0x220] sm:%s791]
                  %945 = vst [vmem:[%s799 + $0x120] sm:%s791] %v944
                  %v946 = vld [vmem:[%s798 + $0x224] sm:%s791]
                  %947 = vst [vmem:[%s799 + $0x124] sm:%s791] %v946
                  %v948 = vld [vmem:[%s798 + $0x228] sm:%s791]
                  %949 = vst [vmem:[%s799 + $0x128] sm:%s791] %v948
                  %v950 = vld [vmem:[%s798 + $0x22c] sm:%s791]
                  %951 = vst [vmem:[%s799 + $0x12c] sm:%s791] %v950
                  %v952 = vld [vmem:[%s798 + $0x230] sm:%s791]
                  %953 = vst [vmem:[%s799 + $0x130] sm:%s791] %v952
                  %v954 = vld [vmem:[%s798 + $0x234] sm:%s791]
                  %955 = vst [vmem:[%s799 + $0x134] sm:%s791] %v954
                  %v956 = vld [vmem:[%s798 + $0x238] sm:%s791]
                  %957 = vst [vmem:[%s799 + $0x138] sm:%s791] %v956
                  %v958 = vld [vmem:[%s798 + $0x23c] sm:%s791]
                  %959 = vst [vmem:[%s799 + $0x13c] sm:%s791] %v958
                  %v960 = vld [vmem:[%s798 + $0x240] sm:%s791]
                  %961 = vst [vmem:[%s799 + $0x140] sm:%s791] %v960
                  %v962 = vld [vmem:[%s798 + $0x244] sm:%s791]
                  %963 = vst [vmem:[%s799 + $0x144] sm:%s791] %v962
                  %v964 = vld [vmem:[%s798 + $0x248] sm:%s791]
                  %965 = vst [vmem:[%s799 + $0x148] sm:%s791] %v964
                  %v966 = vld [vmem:[%s798 + $0x24c] sm:%s791]
                  %967 = vst [vmem:[%s799 + $0x14c] sm:%s791] %v966
                  %v968 = vld [vmem:[%s798 + $0x250] sm:%s791]
                  %969 = vst [vmem:[%s799 + $0x150] sm:%s791] %v968
                  %v970 = vld [vmem:[%s798 + $0x254] sm:%s791]
                  %971 = vst [vmem:[%s799 + $0x154] sm:%s791] %v970
                  %v972 = vld [vmem:[%s798 + $0x258] sm:%s791]
                  %973 = vst [vmem:[%s799 + $0x158] sm:%s791] %v972
                  %v974 = vld [vmem:[%s798 + $0x25c] sm:%s791]
                  %975 = vst [vmem:[%s799 + $0x15c] sm:%s791] %v974
                  %v976 = vld [vmem:[%s798 + $0x260] sm:%s791]
                  %977 = vst [vmem:[%s799 + $0x160] sm:%s791] %v976
                  %v978 = vld [vmem:[%s798 + $0x264] sm:%s791]
                  %979 = vst [vmem:[%s799 + $0x164] sm:%s791] %v978
                  %v980 = vld [vmem:[%s798 + $0x268] sm:%s791]
                  %981 = vst [vmem:[%s799 + $0x168] sm:%s791] %v980
                  %v982 = vld [vmem:[%s798 + $0x26c] sm:%s791]
                  %983 = vst [vmem:[%s799 + $0x16c] sm:%s791] %v982
                  %v984 = vld [vmem:[%s798 + $0x270] sm:%s791]
                  %985 = vst [vmem:[%s799 + $0x170] sm:%s791] %v984
                  %v986 = vld [vmem:[%s798 + $0x274] sm:%s791]
                  %987 = vst [vmem:[%s799 + $0x174] sm:%s791] %v986
                  %v988 = vld [vmem:[%s798 + $0x278] sm:%s791]
                  %989 = vst [vmem:[%s799 + $0x178] sm:%s791] %v988
                  %v990 = vld [vmem:[%s798 + $0x27c] sm:%s791]
                  %991 = vst [vmem:[%s799 + $0x17c] sm:%s791] %v990
                  %v992 = vld [vmem:[%s798 + $0x300] sm:%s791]
                  %993 = vst [vmem:[%s799 + $0x180] sm:%s791] %v992
                  %v994 = vld [vmem:[%s798 + $0x304] sm:%s791]
                  %995 = vst [vmem:[%s799 + $0x184] sm:%s791] %v994
                  %v996 = vld [vmem:[%s798 + $0x308] sm:%s791]
                  %997 = vst [vmem:[%s799 + $0x188] sm:%s791] %v996
                  %v998 = vld [vmem:[%s798 + $0x30c] sm:%s791]
                  %999 = vst [vmem:[%s799 + $0x18c] sm:%s791] %v998
                  %v1000 = vld [vmem:[%s798 + $0x310] sm:%s791]
                  %1001 = vst [vmem:[%s799 + $0x190] sm:%s791] %v1000
                  %v1002 = vld [vmem:[%s798 + $0x314] sm:%s791]
                  %1003 = vst [vmem:[%s799 + $0x194] sm:%s791] %v1002
                  %v1004 = vld [vmem:[%s798 + $0x318] sm:%s791]
                  %1005 = vst [vmem:[%s799 + $0x198] sm:%s791] %v1004
                  %v1006 = vld [vmem:[%s798 + $0x31c] sm:%s791]
                  %1007 = vst [vmem:[%s799 + $0x19c] sm:%s791] %v1006
                  %v1008 = vld [vmem:[%s798 + $0x320] sm:%s791]
                  %1009 = vst [vmem:[%s799 + $0x1a0] sm:%s791] %v1008
                  %v1010 = vld [vmem:[%s798 + $0x324] sm:%s791]
                  %1011 = vst [vmem:[%s799 + $0x1a4] sm:%s791] %v1010
                  %v1012 = vld [vmem:[%s798 + $0x328] sm:%s791]
                  %1013 = vst [vmem:[%s799 + $0x1a8] sm:%s791] %v1012
                  %v1014 = vld [vmem:[%s798 + $0x32c] sm:%s791]
                  %1015 = vst [vmem:[%s799 + $0x1ac] sm:%s791] %v1014
                  %v1016 = vld [vmem:[%s798 + $0x330] sm:%s791]
                  %1017 = vst [vmem:[%s799 + $0x1b0] sm:%s791] %v1016
                  %v1018 = vld [vmem:[%s798 + $0x334] sm:%s791]
                  %1019 = vst [vmem:[%s799 + $0x1b4] sm:%s791] %v1018
                  %v1020 = vld [vmem:[%s798 + $0x338] sm:%s791]
                  %1021 = vst [vmem:[%s799 + $0x1b8] sm:%s791] %v1020
                  %v1022 = vld [vmem:[%s798 + $0x33c] sm:%s791]
                  %1023 = vst [vmem:[%s799 + $0x1bc] sm:%s791] %v1022
                  %v1024 = vld [vmem:[%s798 + $0x340] sm:%s791]
                  %1025 = vst [vmem:[%s799 + $0x1c0] sm:%s791] %v1024
                  %v1026 = vld [vmem:[%s798 + $0x344] sm:%s791]
                  %1027 = vst [vmem:[%s799 + $0x1c4] sm:%s791] %v1026
                  %v1028 = vld [vmem:[%s798 + $0x348] sm:%s791]
                  %1029 = vst [vmem:[%s799 + $0x1c8] sm:%s791] %v1028
                  %v1030 = vld [vmem:[%s798 + $0x34c] sm:%s791]
                  %1031 = vst [vmem:[%s799 + $0x1cc] sm:%s791] %v1030
                  %v1032 = vld [vmem:[%s798 + $0x350] sm:%s791]
                  %1033 = vst [vmem:[%s799 + $0x1d0] sm:%s791] %v1032
                  %v1034 = vld [vmem:[%s798 + $0x354] sm:%s791]
                  %1035 = vst [vmem:[%s799 + $0x1d4] sm:%s791] %v1034
                  %v1036 = vld [vmem:[%s798 + $0x358] sm:%s791]
                  %1037 = vst [vmem:[%s799 + $0x1d8] sm:%s791] %v1036
                  %v1038 = vld [vmem:[%s798 + $0x35c] sm:%s791]
                  %1039 = vst [vmem:[%s799 + $0x1dc] sm:%s791] %v1038
                  %v1040 = vld [vmem:[%s798 + $0x360] sm:%s791]
                  %1041 = vst [vmem:[%s799 + $0x1e0] sm:%s791] %v1040
                  %v1042 = vld [vmem:[%s798 + $0x364] sm:%s791]
                  %1043 = vst [vmem:[%s799 + $0x1e4] sm:%s791] %v1042
                  %v1044 = vld [vmem:[%s798 + $0x368] sm:%s791]
                  %1045 = vst [vmem:[%s799 + $0x1e8] sm:%s791] %v1044
                  %v1046 = vld [vmem:[%s798 + $0x36c] sm:%s791]
                  %1047 = vst [vmem:[%s799 + $0x1ec] sm:%s791] %v1046
                  %v1048 = vld [vmem:[%s798 + $0x370] sm:%s791]
                  %1049 = vst [vmem:[%s799 + $0x1f0] sm:%s791] %v1048
                  %v1050 = vld [vmem:[%s798 + $0x374] sm:%s791]
                  %1051 = vst [vmem:[%s799 + $0x1f4] sm:%s791] %v1050
                  %v1052 = vld [vmem:[%s798 + $0x378] sm:%s791]
                  %1053 = vst [vmem:[%s799 + $0x1f8] sm:%s791] %v1052
                  %v1054 = vld [vmem:[%s798 + $0x37c] sm:%s791]
                  %1055 = vst [vmem:[%s799 + $0x1fc] sm:%s791] %v1054
                  %v1056 = vld [vmem:[%s798 + $0x400] sm:%s791]
                  %1057 = vst [vmem:[%s799 + $0x200] sm:%s791] %v1056
                  %v1058 = vld [vmem:[%s798 + $0x404] sm:%s791]
                  %1059 = vst [vmem:[%s799 + $0x204] sm:%s791] %v1058
                  %v1060 = vld [vmem:[%s798 + $0x408] sm:%s791]
                  %1061 = vst [vmem:[%s799 + $0x208] sm:%s791] %v1060
                  %v1062 = vld [vmem:[%s798 + $0x40c] sm:%s791]
                  %1063 = vst [vmem:[%s799 + $0x20c] sm:%s791] %v1062
                  %v1064 = vld [vmem:[%s798 + $0x410] sm:%s791]
                  %1065 = vst [vmem:[%s799 + $0x210] sm:%s791] %v1064
                  %v1066 = vld [vmem:[%s798 + $0x414] sm:%s791]
                  %1067 = vst [vmem:[%s799 + $0x214] sm:%s791] %v1066
                  %v1068 = vld [vmem:[%s798 + $0x418] sm:%s791]
                  %1069 = vst [vmem:[%s799 + $0x218] sm:%s791] %v1068
                  %v1070 = vld [vmem:[%s798 + $0x41c] sm:%s791]
                  %1071 = vst [vmem:[%s799 + $0x21c] sm:%s791] %v1070
                  %v1072 = vld [vmem:[%s798 + $0x420] sm:%s791]
                  %1073 = vst [vmem:[%s799 + $0x220] sm:%s791] %v1072
                  %v1074 = vld [vmem:[%s798 + $0x424] sm:%s791]
                  %1075 = vst [vmem:[%s799 + $0x224] sm:%s791] %v1074
                  %v1076 = vld [vmem:[%s798 + $0x428] sm:%s791]
                  %1077 = vst [vmem:[%s799 + $0x228] sm:%s791] %v1076
                  %v1078 = vld [vmem:[%s798 + $0x42c] sm:%s791]
                  %1079 = vst [vmem:[%s799 + $0x22c] sm:%s791] %v1078
                  %v1080 = vld [vmem:[%s798 + $0x430] sm:%s791]
                  %1081 = vst [vmem:[%s799 + $0x230] sm:%s791] %v1080
                  %v1082 = vld [vmem:[%s798 + $0x434] sm:%s791]
                  %1083 = vst [vmem:[%s799 + $0x234] sm:%s791] %v1082
                  %v1084 = vld [vmem:[%s798 + $0x438] sm:%s791]
                  %1085 = vst [vmem:[%s799 + $0x238] sm:%s791] %v1084
                  %v1086 = vld [vmem:[%s798 + $0x43c] sm:%s791]
                  %1087 = vst [vmem:[%s799 + $0x23c] sm:%s791] %v1086
                  %v1088 = vld [vmem:[%s798 + $0x440] sm:%s791]
                  %1089 = vst [vmem:[%s799 + $0x240] sm:%s791] %v1088
                  %v1090 = vld [vmem:[%s798 + $0x444] sm:%s791]
                  %1091 = vst [vmem:[%s799 + $0x244] sm:%s791] %v1090
                  %v1092 = vld [vmem:[%s798 + $0x448] sm:%s791]
                  %1093 = vst [vmem:[%s799 + $0x248] sm:%s791] %v1092
                  %v1094 = vld [vmem:[%s798 + $0x44c] sm:%s791]
                  %1095 = vst [vmem:[%s799 + $0x24c] sm:%s791] %v1094
                  %v1096 = vld [vmem:[%s798 + $0x450] sm:%s791]
                  %1097 = vst [vmem:[%s799 + $0x250] sm:%s791] %v1096
                  %v1098 = vld [vmem:[%s798 + $0x454] sm:%s791]
                  %1099 = vst [vmem:[%s799 + $0x254] sm:%s791] %v1098
                  %v1100 = vld [vmem:[%s798 + $0x458] sm:%s791]
                  %1101 = vst [vmem:[%s799 + $0x258] sm:%s791] %v1100
                  %v1102 = vld [vmem:[%s798 + $0x45c] sm:%s791]
                  %1103 = vst [vmem:[%s799 + $0x25c] sm:%s791] %v1102
                  %v1104 = vld [vmem:[%s798 + $0x460] sm:%s791]
                  %1105 = vst [vmem:[%s799 + $0x260] sm:%s791] %v1104
                  %v1106 = vld [vmem:[%s798 + $0x464] sm:%s791]
                  %1107 = vst [vmem:[%s799 + $0x264] sm:%s791] %v1106
                  %v1108 = vld [vmem:[%s798 + $0x468] sm:%s791]
                  %1109 = vst [vmem:[%s799 + $0x268] sm:%s791] %v1108
                  %v1110 = vld [vmem:[%s798 + $0x46c] sm:%s791]
                  %1111 = vst [vmem:[%s799 + $0x26c] sm:%s791] %v1110
                  %v1112 = vld [vmem:[%s798 + $0x470] sm:%s791]
                  %1113 = vst [vmem:[%s799 + $0x270] sm:%s791] %v1112
                  %v1114 = vld [vmem:[%s798 + $0x474] sm:%s791]
                  %1115 = vst [vmem:[%s799 + $0x274] sm:%s791] %v1114
                  %v1116 = vld [vmem:[%s798 + $0x478] sm:%s791]
                  %1117 = vst [vmem:[%s799 + $0x278] sm:%s791] %v1116
                  %v1118 = vld [vmem:[%s798 + $0x47c] sm:%s791]
                  %1119 = vst [vmem:[%s799 + $0x27c] sm:%s791] %v1118
                  %v1120 = vld [vmem:[%s798 + $0x500] sm:%s791]
                  %1121 = vst [vmem:[%s799 + $0x280] sm:%s791] %v1120
                  %v1122 = vld [vmem:[%s798 + $0x504] sm:%s791]
                  %1123 = vst [vmem:[%s799 + $0x284] sm:%s791] %v1122
                  %v1124 = vld [vmem:[%s798 + $0x508] sm:%s791]
                  %1125 = vst [vmem:[%s799 + $0x288] sm:%s791] %v1124
                  %v1126 = vld [vmem:[%s798 + $0x50c] sm:%s791]
                  %1127 = vst [vmem:[%s799 + $0x28c] sm:%s791] %v1126
                  %v1128 = vld [vmem:[%s798 + $0x510] sm:%s791]
                  %1129 = vst [vmem:[%s799 + $0x290] sm:%s791] %v1128
                  %v1130 = vld [vmem:[%s798 + $0x514] sm:%s791]
                  %1131 = vst [vmem:[%s799 + $0x294] sm:%s791] %v1130
                  %v1132 = vld [vmem:[%s798 + $0x518] sm:%s791]
                  %1133 = vst [vmem:[%s799 + $0x298] sm:%s791] %v1132
                  %v1134 = vld [vmem:[%s798 + $0x51c] sm:%s791]
                  %1135 = vst [vmem:[%s799 + $0x29c] sm:%s791] %v1134
                  %v1136 = vld [vmem:[%s798 + $0x520] sm:%s791]
                  %1137 = vst [vmem:[%s799 + $0x2a0] sm:%s791] %v1136
                  %v1138 = vld [vmem:[%s798 + $0x524] sm:%s791]
                  %1139 = vst [vmem:[%s799 + $0x2a4] sm:%s791] %v1138
                  %v1140 = vld [vmem:[%s798 + $0x528] sm:%s791]
                  %1141 = vst [vmem:[%s799 + $0x2a8] sm:%s791] %v1140
                  %v1142 = vld [vmem:[%s798 + $0x52c] sm:%s791]
                  %1143 = vst [vmem:[%s799 + $0x2ac] sm:%s791] %v1142
                  %v1144 = vld [vmem:[%s798 + $0x530] sm:%s791]
                  %1145 = vst [vmem:[%s799 + $0x2b0] sm:%s791] %v1144
                  %v1146 = vld [vmem:[%s798 + $0x534] sm:%s791]
                  %1147 = vst [vmem:[%s799 + $0x2b4] sm:%s791] %v1146
                  %v1148 = vld [vmem:[%s798 + $0x538] sm:%s791]
                  %1149 = vst [vmem:[%s799 + $0x2b8] sm:%s791] %v1148
                  %v1150 = vld [vmem:[%s798 + $0x53c] sm:%s791]
                  %1151 = vst [vmem:[%s799 + $0x2bc] sm:%s791] %v1150
                  %v1152 = vld [vmem:[%s798 + $0x540] sm:%s791]
                  %1153 = vst [vmem:[%s799 + $0x2c0] sm:%s791] %v1152
                  %v1154 = vld [vmem:[%s798 + $0x544] sm:%s791]
                  %1155 = vst [vmem:[%s799 + $0x2c4] sm:%s791] %v1154
                  %v1156 = vld [vmem:[%s798 + $0x548] sm:%s791]
                  %1157 = vst [vmem:[%s799 + $0x2c8] sm:%s791] %v1156
                  %v1158 = vld [vmem:[%s798 + $0x54c] sm:%s791]
                  %1159 = vst [vmem:[%s799 + $0x2cc] sm:%s791] %v1158
                  %v1160 = vld [vmem:[%s798 + $0x550] sm:%s791]
                  %1161 = vst [vmem:[%s799 + $0x2d0] sm:%s791] %v1160
                  %v1162 = vld [vmem:[%s798 + $0x554] sm:%s791]
                  %1163 = vst [vmem:[%s799 + $0x2d4] sm:%s791] %v1162
                  %v1164 = vld [vmem:[%s798 + $0x558] sm:%s791]
                  %1165 = vst [vmem:[%s799 + $0x2d8] sm:%s791] %v1164
                  %v1166 = vld [vmem:[%s798 + $0x55c] sm:%s791]
                  %1167 = vst [vmem:[%s799 + $0x2dc] sm:%s791] %v1166
                  %v1168 = vld [vmem:[%s798 + $0x560] sm:%s791]
                  %1169 = vst [vmem:[%s799 + $0x2e0] sm:%s791] %v1168
                  %v1170 = vld [vmem:[%s798 + $0x564] sm:%s791]
                  %1171 = vst [vmem:[%s799 + $0x2e4] sm:%s791] %v1170
                  %v1172 = vld [vmem:[%s798 + $0x568] sm:%s791]
                  %1173 = vst [vmem:[%s799 + $0x2e8] sm:%s791] %v1172
                  %v1174 = vld [vmem:[%s798 + $0x56c] sm:%s791]
                  %1175 = vst [vmem:[%s799 + $0x2ec] sm:%s791] %v1174
                  %v1176 = vld [vmem:[%s798 + $0x570] sm:%s791]
                  %1177 = vst [vmem:[%s799 + $0x2f0] sm:%s791] %v1176
                  %v1178 = vld [vmem:[%s798 + $0x574] sm:%s791]
                  %1179 = vst [vmem:[%s799 + $0x2f4] sm:%s791] %v1178
                  %v1180 = vld [vmem:[%s798 + $0x578] sm:%s791]
                  %1181 = vst [vmem:[%s799 + $0x2f8] sm:%s791] %v1180
                  %v1182 = vld [vmem:[%s798 + $0x57c] sm:%s791]
                  %1183 = vst [vmem:[%s799 + $0x2fc] sm:%s791] %v1182
                  %v1184 = vld [vmem:[%s798 + $0x600] sm:%s791]
                  %1185 = vst [vmem:[%s799 + $0x300] sm:%s791] %v1184
                  %v1186 = vld [vmem:[%s798 + $0x604] sm:%s791]
                  %1187 = vst [vmem:[%s799 + $0x304] sm:%s791] %v1186
                  %v1188 = vld [vmem:[%s798 + $0x608] sm:%s791]
                  %1189 = vst [vmem:[%s799 + $0x308] sm:%s791] %v1188
                  %v1190 = vld [vmem:[%s798 + $0x60c] sm:%s791]
                  %1191 = vst [vmem:[%s799 + $0x30c] sm:%s791] %v1190
                  %v1192 = vld [vmem:[%s798 + $0x610] sm:%s791]
                  %1193 = vst [vmem:[%s799 + $0x310] sm:%s791] %v1192
                  %v1194 = vld [vmem:[%s798 + $0x614] sm:%s791]
                  %1195 = vst [vmem:[%s799 + $0x314] sm:%s791] %v1194
                  %v1196 = vld [vmem:[%s798 + $0x618] sm:%s791]
                  %1197 = vst [vmem:[%s799 + $0x318] sm:%s791] %v1196
                  %v1198 = vld [vmem:[%s798 + $0x61c] sm:%s791]
                  %1199 = vst [vmem:[%s799 + $0x31c] sm:%s791] %v1198
                  %v1200 = vld [vmem:[%s798 + $0x620] sm:%s791]
                  %1201 = vst [vmem:[%s799 + $0x320] sm:%s791] %v1200
                  %v1202 = vld [vmem:[%s798 + $0x624] sm:%s791]
                  %1203 = vst [vmem:[%s799 + $0x324] sm:%s791] %v1202
                  %v1204 = vld [vmem:[%s798 + $0x628] sm:%s791]
                  %1205 = vst [vmem:[%s799 + $0x328] sm:%s791] %v1204
                  %v1206 = vld [vmem:[%s798 + $0x62c] sm:%s791]
                  %1207 = vst [vmem:[%s799 + $0x32c] sm:%s791] %v1206
                  %v1208 = vld [vmem:[%s798 + $0x630] sm:%s791]
                  %1209 = vst [vmem:[%s799 + $0x330] sm:%s791] %v1208
                  %v1210 = vld [vmem:[%s798 + $0x634] sm:%s791]
                  %1211 = vst [vmem:[%s799 + $0x334] sm:%s791] %v1210
                  %v1212 = vld [vmem:[%s798 + $0x638] sm:%s791]
                  %1213 = vst [vmem:[%s799 + $0x338] sm:%s791] %v1212
                  %v1214 = vld [vmem:[%s798 + $0x63c] sm:%s791]
                  %1215 = vst [vmem:[%s799 + $0x33c] sm:%s791] %v1214
                  %v1216 = vld [vmem:[%s798 + $0x640] sm:%s791]
                  %1217 = vst [vmem:[%s799 + $0x340] sm:%s791] %v1216
                  %v1218 = vld [vmem:[%s798 + $0x644] sm:%s791]
                  %1219 = vst [vmem:[%s799 + $0x344] sm:%s791] %v1218
                  %v1220 = vld [vmem:[%s798 + $0x648] sm:%s791]
                  %1221 = vst [vmem:[%s799 + $0x348] sm:%s791] %v1220
                  %v1222 = vld [vmem:[%s798 + $0x64c] sm:%s791]
                  %1223 = vst [vmem:[%s799 + $0x34c] sm:%s791] %v1222
                  %v1224 = vld [vmem:[%s798 + $0x650] sm:%s791]
                  %1225 = vst [vmem:[%s799 + $0x350] sm:%s791] %v1224
                  %v1226 = vld [vmem:[%s798 + $0x654] sm:%s791]
                  %1227 = vst [vmem:[%s799 + $0x354] sm:%s791] %v1226
                  %v1228 = vld [vmem:[%s798 + $0x658] sm:%s791]
                  %1229 = vst [vmem:[%s799 + $0x358] sm:%s791] %v1228
                  %v1230 = vld [vmem:[%s798 + $0x65c] sm:%s791]
                  %1231 = vst [vmem:[%s799 + $0x35c] sm:%s791] %v1230
                  %v1232 = vld [vmem:[%s798 + $0x660] sm:%s791]
                  %1233 = vst [vmem:[%s799 + $0x360] sm:%s791] %v1232
                  %v1234 = vld [vmem:[%s798 + $0x664] sm:%s791]
                  %1235 = vst [vmem:[%s799 + $0x364] sm:%s791] %v1234
                  %v1236 = vld [vmem:[%s798 + $0x668] sm:%s791]
                  %1237 = vst [vmem:[%s799 + $0x368] sm:%s791] %v1236
                  %v1238 = vld [vmem:[%s798 + $0x66c] sm:%s791]
                  %1239 = vst [vmem:[%s799 + $0x36c] sm:%s791] %v1238
                  %v1240 = vld [vmem:[%s798 + $0x670] sm:%s791]
                  %1241 = vst [vmem:[%s799 + $0x370] sm:%s791] %v1240
                  %v1242 = vld [vmem:[%s798 + $0x674] sm:%s791]
                  %1243 = vst [vmem:[%s799 + $0x374] sm:%s791] %v1242
                  %v1244 = vld [vmem:[%s798 + $0x678] sm:%s791]
                  %1245 = vst [vmem:[%s799 + $0x378] sm:%s791] %v1244
                  %v1246 = vld [vmem:[%s798 + $0x67c] sm:%s791]
                  %1247 = vst [vmem:[%s799 + $0x37c] sm:%s791] %v1246
                  %v1248 = vld [vmem:[%s798 + $0x700] sm:%s791]
                  %1249 = vst [vmem:[%s799 + $0x380] sm:%s791] %v1248
                  %v1250 = vld [vmem:[%s798 + $0x704] sm:%s791]
                  %1251 = vst [vmem:[%s799 + $0x384] sm:%s791] %v1250
                  %v1252 = vld [vmem:[%s798 + $0x708] sm:%s791]
                  %1253 = vst [vmem:[%s799 + $0x388] sm:%s791] %v1252
                  %v1254 = vld [vmem:[%s798 + $0x70c] sm:%s791]
                  %1255 = vst [vmem:[%s799 + $0x38c] sm:%s791] %v1254
                  %v1256 = vld [vmem:[%s798 + $0x710] sm:%s791]
                  %1257 = vst [vmem:[%s799 + $0x390] sm:%s791] %v1256
                  %v1258 = vld [vmem:[%s798 + $0x714] sm:%s791]
                  %1259 = vst [vmem:[%s799 + $0x394] sm:%s791] %v1258
                  %v1260 = vld [vmem:[%s798 + $0x718] sm:%s791]
                  %1261 = vst [vmem:[%s799 + $0x398] sm:%s791] %v1260
                  %v1262 = vld [vmem:[%s798 + $0x71c] sm:%s791]
                  %1263 = vst [vmem:[%s799 + $0x39c] sm:%s791] %v1262
                  %v1264 = vld [vmem:[%s798 + $0x720] sm:%s791]
                  %1265 = vst [vmem:[%s799 + $0x3a0] sm:%s791] %v1264
                  %v1266 = vld [vmem:[%s798 + $0x724] sm:%s791]
                  %1267 = vst [vmem:[%s799 + $0x3a4] sm:%s791] %v1266
                  %v1268 = vld [vmem:[%s798 + $0x728] sm:%s791]
                  %1269 = vst [vmem:[%s799 + $0x3a8] sm:%s791] %v1268
                  %v1270 = vld [vmem:[%s798 + $0x72c] sm:%s791]
                  %1271 = vst [vmem:[%s799 + $0x3ac] sm:%s791] %v1270
                  %v1272 = vld [vmem:[%s798 + $0x730] sm:%s791]
                  %1273 = vst [vmem:[%s799 + $0x3b0] sm:%s791] %v1272
                  %v1274 = vld [vmem:[%s798 + $0x734] sm:%s791]
                  %1275 = vst [vmem:[%s799 + $0x3b4] sm:%s791] %v1274
                  %v1276 = vld [vmem:[%s798 + $0x738] sm:%s791]
                  %1277 = vst [vmem:[%s799 + $0x3b8] sm:%s791] %v1276
                  %v1278 = vld [vmem:[%s798 + $0x73c] sm:%s791]
                  %1279 = vst [vmem:[%s799 + $0x3bc] sm:%s791] %v1278
                  %v1280 = vld [vmem:[%s798 + $0x740] sm:%s791]
                  %1281 = vst [vmem:[%s799 + $0x3c0] sm:%s791] %v1280
                  %v1282 = vld [vmem:[%s798 + $0x744] sm:%s791]
                  %1283 = vst [vmem:[%s799 + $0x3c4] sm:%s791] %v1282
                  %v1284 = vld [vmem:[%s798 + $0x748] sm:%s791]
                  %1285 = vst [vmem:[%s799 + $0x3c8] sm:%s791] %v1284
                  %v1286 = vld [vmem:[%s798 + $0x74c] sm:%s791]
                  %1287 = vst [vmem:[%s799 + $0x3cc] sm:%s791] %v1286
                  %v1288 = vld [vmem:[%s798 + $0x750] sm:%s791]
                  %1289 = vst [vmem:[%s799 + $0x3d0] sm:%s791] %v1288
                  %v1290 = vld [vmem:[%s798 + $0x754] sm:%s791]
                  %1291 = vst [vmem:[%s799 + $0x3d4] sm:%s791] %v1290
                  %v1292 = vld [vmem:[%s798 + $0x758] sm:%s791]
                  %1293 = vst [vmem:[%s799 + $0x3d8] sm:%s791] %v1292
                  %v1294 = vld [vmem:[%s798 + $0x75c] sm:%s791]
                  %1295 = vst [vmem:[%s799 + $0x3dc] sm:%s791] %v1294
                  %v1296 = vld [vmem:[%s798 + $0x760] sm:%s791]
                  %1297 = vst [vmem:[%s799 + $0x3e0] sm:%s791] %v1296
                  %v1298 = vld [vmem:[%s798 + $0x764] sm:%s791]
                  %1299 = vst [vmem:[%s799 + $0x3e4] sm:%s791] %v1298
                  %v1300 = vld [vmem:[%s798 + $0x768] sm:%s791]
                  %1301 = vst [vmem:[%s799 + $0x3e8] sm:%s791] %v1300
                  %v1302 = vld [vmem:[%s798 + $0x76c] sm:%s791]
                  %1303 = vst [vmem:[%s799 + $0x3ec] sm:%s791] %v1302
                  %v1304 = vld [vmem:[%s798 + $0x770] sm:%s791]
                  %1305 = vst [vmem:[%s799 + $0x3f0] sm:%s791] %v1304
                  %v1306 = vld [vmem:[%s798 + $0x774] sm:%s791]
                  %1307 = vst [vmem:[%s799 + $0x3f4] sm:%s791] %v1306
                  %v1308 = vld [vmem:[%s798 + $0x778] sm:%s791]
                  %1309 = vst [vmem:[%s799 + $0x3f8] sm:%s791] %v1308
                  %v1310 = vld [vmem:[%s798 + $0x77c] sm:%s791]
                  %1311 = vst [vmem:[%s799 + $0x3fc] sm:%s791] %v1310
                  %v1312 = vld [vmem:[%s798 + $0x800] sm:%s791]
                  %1313 = vst [vmem:[%s799 + $0x400] sm:%s791] %v1312
                  %v1314 = vld [vmem:[%s798 + $0x804] sm:%s791]
                  %1315 = vst [vmem:[%s799 + $0x404] sm:%s791] %v1314
                  %v1316 = vld [vmem:[%s798 + $0x808] sm:%s791]
                  %1317 = vst [vmem:[%s799 + $0x408] sm:%s791] %v1316
                  %v1318 = vld [vmem:[%s798 + $0x80c] sm:%s791]
                  %1319 = vst [vmem:[%s799 + $0x40c] sm:%s791] %v1318
                  %v1320 = vld [vmem:[%s798 + $0x810] sm:%s791]
                  %1321 = vst [vmem:[%s799 + $0x410] sm:%s791] %v1320
                  %v1322 = vld [vmem:[%s798 + $0x814] sm:%s791]
                  %1323 = vst [vmem:[%s799 + $0x414] sm:%s791] %v1322
                  %v1324 = vld [vmem:[%s798 + $0x818] sm:%s791]
                  %1325 = vst [vmem:[%s799 + $0x418] sm:%s791] %v1324
                  %v1326 = vld [vmem:[%s798 + $0x81c] sm:%s791]
                  %1327 = vst [vmem:[%s799 + $0x41c] sm:%s791] %v1326
                  %v1328 = vld [vmem:[%s798 + $0x820] sm:%s791]
                  %1329 = vst [vmem:[%s799 + $0x420] sm:%s791] %v1328
                  %v1330 = vld [vmem:[%s798 + $0x824] sm:%s791]
                  %1331 = vst [vmem:[%s799 + $0x424] sm:%s791] %v1330
                  %v1332 = vld [vmem:[%s798 + $0x828] sm:%s791]
                  %1333 = vst [vmem:[%s799 + $0x428] sm:%s791] %v1332
                  %v1334 = vld [vmem:[%s798 + $0x82c] sm:%s791]
                  %1335 = vst [vmem:[%s799 + $0x42c] sm:%s791] %v1334
                  %v1336 = vld [vmem:[%s798 + $0x830] sm:%s791]
                  %1337 = vst [vmem:[%s799 + $0x430] sm:%s791] %v1336
                  %v1338 = vld [vmem:[%s798 + $0x834] sm:%s791]
                  %1339 = vst [vmem:[%s799 + $0x434] sm:%s791] %v1338
                  %v1340 = vld [vmem:[%s798 + $0x838] sm:%s791]
                  %1341 = vst [vmem:[%s799 + $0x438] sm:%s791] %v1340
                  %v1342 = vld [vmem:[%s798 + $0x83c] sm:%s791]
                  %1343 = vst [vmem:[%s799 + $0x43c] sm:%s791] %v1342
                  %v1344 = vld [vmem:[%s798 + $0x840] sm:%s791]
                  %1345 = vst [vmem:[%s799 + $0x440] sm:%s791] %v1344
                  %v1346 = vld [vmem:[%s798 + $0x844] sm:%s791]
                  %1347 = vst [vmem:[%s799 + $0x444] sm:%s791] %v1346
                  %v1348 = vld [vmem:[%s798 + $0x848] sm:%s791]
                  %1349 = vst [vmem:[%s799 + $0x448] sm:%s791] %v1348
                  %v1350 = vld [vmem:[%s798 + $0x84c] sm:%s791]
                  %1351 = vst [vmem:[%s799 + $0x44c] sm:%s791] %v1350
                  %v1352 = vld [vmem:[%s798 + $0x850] sm:%s791]
                  %1353 = vst [vmem:[%s799 + $0x450] sm:%s791] %v1352
                  %v1354 = vld [vmem:[%s798 + $0x854] sm:%s791]
                  %1355 = vst [vmem:[%s799 + $0x454] sm:%s791] %v1354
                  %v1356 = vld [vmem:[%s798 + $0x858] sm:%s791]
                  %1357 = vst [vmem:[%s799 + $0x458] sm:%s791] %v1356
                  %v1358 = vld [vmem:[%s798 + $0x85c] sm:%s791]
                  %1359 = vst [vmem:[%s799 + $0x45c] sm:%s791] %v1358
                  %v1360 = vld [vmem:[%s798 + $0x860] sm:%s791]
                  %1361 = vst [vmem:[%s799 + $0x460] sm:%s791] %v1360
                  %v1362 = vld [vmem:[%s798 + $0x864] sm:%s791]
                  %1363 = vst [vmem:[%s799 + $0x464] sm:%s791] %v1362
                  %v1364 = vld [vmem:[%s798 + $0x868] sm:%s791]
                  %1365 = vst [vmem:[%s799 + $0x468] sm:%s791] %v1364
                  %v1366 = vld [vmem:[%s798 + $0x86c] sm:%s791]
                  %1367 = vst [vmem:[%s799 + $0x46c] sm:%s791] %v1366
                  %v1368 = vld [vmem:[%s798 + $0x870] sm:%s791]
                  %1369 = vst [vmem:[%s799 + $0x470] sm:%s791] %v1368
                  %v1370 = vld [vmem:[%s798 + $0x874] sm:%s791]
                  %1371 = vst [vmem:[%s799 + $0x474] sm:%s791] %v1370
                  %v1372 = vld [vmem:[%s798 + $0x878] sm:%s791]
                  %1373 = vst [vmem:[%s799 + $0x478] sm:%s791] %v1372
                  %v1374 = vld [vmem:[%s798 + $0x87c] sm:%s791]
                  %1375 = vst [vmem:[%s799 + $0x47c] sm:%s791] %v1374
                $region71: #{inception_block_pallas.3} parent=58 // loop_footer
                  %s797 = sadd.s32 1, %s793
                $region72: #{inception_block_pallas.3} parent=58 // loop_footer_branch
                  %792 = sbr.rel target = $region68
                $region73: #{inception_block_pallas.3} parent=58 // loop_exit
                  _
              $region59: #{inception_block_pallas.3} parent=43 // pred_fallthru
                _
            $region44: #{inception_block_pallas.3} parent=39 // pred_fallthru
              _
            // Predicated region
            $region45: #{inception_block_pallas.3} parent=39 // pred_check
              _
            $region46: #{inception_block_pallas.3} parent=39 // pred_check_branch
              %193 = sbr.rel (0) target = $region48
            $region47: #{inception_block_pallas.3} parent=39 // pred_region
              %s195 = ssub.s32 16, 1
              loop: start=0, step=1, limit=1
              $region49: #{inception_block_pallas.3} parent=47 // loop_pre_header
                _
              $region50: #{inception_block_pallas.3} parent=47 // loop_header
                %s197 = sphi 0, %s201
                %p198 = scmp.ge.s32.totalorder %s197, 1
                %s202 = sphi %s187, %s187
                %s203 = sphi %s184, %s184
              $region51: #{inception_block_pallas.3} parent=47 // loop_header_branch
                %200 = sbr.rel (%p198) target = $region55
              $region52: #{inception_block_pallas.3} parent=47 // loop_body
                %v204 = vld [vmem:[%s202] sm:%s195]
                %205 = vst [vmem:[%s203] sm:%s195] %v204
                %v206 = vld [vmem:[%s202 + $0x4] sm:%s195]
                %207 = vst [vmem:[%s203 + $0x4] sm:%s195] %v206
                %v208 = vld [vmem:[%s202 + $0x8] sm:%s195]
                %209 = vst [vmem:[%s203 + $0x8] sm:%s195] %v208
                %v210 = vld [vmem:[%s202 + $0xc] sm:%s195]
                %211 = vst [vmem:[%s203 + $0xc] sm:%s195] %v210
                %v212 = vld [vmem:[%s202 + $0x10] sm:%s195]
                %213 = vst [vmem:[%s203 + $0x10] sm:%s195] %v212
                %v214 = vld [vmem:[%s202 + $0x14] sm:%s195]
                %215 = vst [vmem:[%s203 + $0x14] sm:%s195] %v214
                %v216 = vld [vmem:[%s202 + $0x18] sm:%s195]
                %217 = vst [vmem:[%s203 + $0x18] sm:%s195] %v216
                %v218 = vld [vmem:[%s202 + $0x1c] sm:%s195]
                %219 = vst [vmem:[%s203 + $0x1c] sm:%s195] %v218
                %v220 = vld [vmem:[%s202 + $0x20] sm:%s195]
                %221 = vst [vmem:[%s203 + $0x20] sm:%s195] %v220
                %v222 = vld [vmem:[%s202 + $0x24] sm:%s195]
                %223 = vst [vmem:[%s203 + $0x24] sm:%s195] %v222
                %v224 = vld [vmem:[%s202 + $0x28] sm:%s195]
                %225 = vst [vmem:[%s203 + $0x28] sm:%s195] %v224
                %v226 = vld [vmem:[%s202 + $0x2c] sm:%s195]
                %227 = vst [vmem:[%s203 + $0x2c] sm:%s195] %v226
                %v228 = vld [vmem:[%s202 + $0x30] sm:%s195]
                %229 = vst [vmem:[%s203 + $0x30] sm:%s195] %v228
                %v230 = vld [vmem:[%s202 + $0x34] sm:%s195]
                %231 = vst [vmem:[%s203 + $0x34] sm:%s195] %v230
                %v232 = vld [vmem:[%s202 + $0x38] sm:%s195]
                %233 = vst [vmem:[%s203 + $0x38] sm:%s195] %v232
                %v234 = vld [vmem:[%s202 + $0x3c] sm:%s195]
                %235 = vst [vmem:[%s203 + $0x3c] sm:%s195] %v234
                %v236 = vld [vmem:[%s202 + $0x40] sm:%s195]
                %237 = vst [vmem:[%s203 + $0x40] sm:%s195] %v236
                %v238 = vld [vmem:[%s202 + $0x44] sm:%s195]
                %239 = vst [vmem:[%s203 + $0x44] sm:%s195] %v238
                %v240 = vld [vmem:[%s202 + $0x48] sm:%s195]
                %241 = vst [vmem:[%s203 + $0x48] sm:%s195] %v240
                %v242 = vld [vmem:[%s202 + $0x4c] sm:%s195]
                %243 = vst [vmem:[%s203 + $0x4c] sm:%s195] %v242
                %v244 = vld [vmem:[%s202 + $0x50] sm:%s195]
                %245 = vst [vmem:[%s203 + $0x50] sm:%s195] %v244
                %v246 = vld [vmem:[%s202 + $0x54] sm:%s195]
                %247 = vst [vmem:[%s203 + $0x54] sm:%s195] %v246
                %v248 = vld [vmem:[%s202 + $0x58] sm:%s195]
                %249 = vst [vmem:[%s203 + $0x58] sm:%s195] %v248
                %v250 = vld [vmem:[%s202 + $0x5c] sm:%s195]
                %251 = vst [vmem:[%s203 + $0x5c] sm:%s195] %v250
                %v252 = vld [vmem:[%s202 + $0x60] sm:%s195]
                %253 = vst [vmem:[%s203 + $0x60] sm:%s195] %v252
                %v254 = vld [vmem:[%s202 + $0x64] sm:%s195]
                %255 = vst [vmem:[%s203 + $0x64] sm:%s195] %v254
                %v256 = vld [vmem:[%s202 + $0x68] sm:%s195]
                %257 = vst [vmem:[%s203 + $0x68] sm:%s195] %v256
                %v258 = vld [vmem:[%s202 + $0x6c] sm:%s195]
                %259 = vst [vmem:[%s203 + $0x6c] sm:%s195] %v258
                %v260 = vld [vmem:[%s202 + $0x70] sm:%s195]
                %261 = vst [vmem:[%s203 + $0x70] sm:%s195] %v260
                %v262 = vld [vmem:[%s202 + $0x74] sm:%s195]
                %263 = vst [vmem:[%s203 + $0x74] sm:%s195] %v262
                %v264 = vld [vmem:[%s202 + $0x78] sm:%s195]
                %265 = vst [vmem:[%s203 + $0x78] sm:%s195] %v264
                %v266 = vld [vmem:[%s202 + $0x7c] sm:%s195]
                %267 = vst [vmem:[%s203 + $0x7c] sm:%s195] %v266
                %v268 = vld [vmem:[%s202 + $0x100] sm:%s195]
                %269 = vst [vmem:[%s203 + $0x80] sm:%s195] %v268
                %v270 = vld [vmem:[%s202 + $0x104] sm:%s195]
                %271 = vst [vmem:[%s203 + $0x84] sm:%s195] %v270
                %v272 = vld [vmem:[%s202 + $0x108] sm:%s195]
                %273 = vst [vmem:[%s203 + $0x88] sm:%s195] %v272
                %v274 = vld [vmem:[%s202 + $0x10c] sm:%s195]
                %275 = vst [vmem:[%s203 + $0x8c] sm:%s195] %v274
                %v276 = vld [vmem:[%s202 + $0x110] sm:%s195]
                %277 = vst [vmem:[%s203 + $0x90] sm:%s195] %v276
                %v278 = vld [vmem:[%s202 + $0x114] sm:%s195]
                %279 = vst [vmem:[%s203 + $0x94] sm:%s195] %v278
                %v280 = vld [vmem:[%s202 + $0x118] sm:%s195]
                %281 = vst [vmem:[%s203 + $0x98] sm:%s195] %v280
                %v282 = vld [vmem:[%s202 + $0x11c] sm:%s195]
                %283 = vst [vmem:[%s203 + $0x9c] sm:%s195] %v282
                %v284 = vld [vmem:[%s202 + $0x120] sm:%s195]
                %285 = vst [vmem:[%s203 + $0xa0] sm:%s195] %v284
                %v286 = vld [vmem:[%s202 + $0x124] sm:%s195]
                %287 = vst [vmem:[%s203 + $0xa4] sm:%s195] %v286
                %v288 = vld [vmem:[%s202 + $0x128] sm:%s195]
                %289 = vst [vmem:[%s203 + $0xa8] sm:%s195] %v288
                %v290 = vld [vmem:[%s202 + $0x12c] sm:%s195]
                %291 = vst [vmem:[%s203 + $0xac] sm:%s195] %v290
                %v292 = vld [vmem:[%s202 + $0x130] sm:%s195]
                %293 = vst [vmem:[%s203 + $0xb0] sm:%s195] %v292
                %v294 = vld [vmem:[%s202 + $0x134] sm:%s195]
                %295 = vst [vmem:[%s203 + $0xb4] sm:%s195] %v294
                %v296 = vld [vmem:[%s202 + $0x138] sm:%s195]
                %297 = vst [vmem:[%s203 + $0xb8] sm:%s195] %v296
                %v298 = vld [vmem:[%s202 + $0x13c] sm:%s195]
                %299 = vst [vmem:[%s203 + $0xbc] sm:%s195] %v298
                %v300 = vld [vmem:[%s202 + $0x140] sm:%s195]
                %301 = vst [vmem:[%s203 + $0xc0] sm:%s195] %v300
                %v302 = vld [vmem:[%s202 + $0x144] sm:%s195]
                %303 = vst [vmem:[%s203 + $0xc4] sm:%s195] %v302
                %v304 = vld [vmem:[%s202 + $0x148] sm:%s195]
                %305 = vst [vmem:[%s203 + $0xc8] sm:%s195] %v304
                %v306 = vld [vmem:[%s202 + $0x14c] sm:%s195]
                %307 = vst [vmem:[%s203 + $0xcc] sm:%s195] %v306
                %v308 = vld [vmem:[%s202 + $0x150] sm:%s195]
                %309 = vst [vmem:[%s203 + $0xd0] sm:%s195] %v308
                %v310 = vld [vmem:[%s202 + $0x154] sm:%s195]
                %311 = vst [vmem:[%s203 + $0xd4] sm:%s195] %v310
                %v312 = vld [vmem:[%s202 + $0x158] sm:%s195]
                %313 = vst [vmem:[%s203 + $0xd8] sm:%s195] %v312
                %v314 = vld [vmem:[%s202 + $0x15c] sm:%s195]
                %315 = vst [vmem:[%s203 + $0xdc] sm:%s195] %v314
                %v316 = vld [vmem:[%s202 + $0x160] sm:%s195]
                %317 = vst [vmem:[%s203 + $0xe0] sm:%s195] %v316
                %v318 = vld [vmem:[%s202 + $0x164] sm:%s195]
                %319 = vst [vmem:[%s203 + $0xe4] sm:%s195] %v318
                %v320 = vld [vmem:[%s202 + $0x168] sm:%s195]
                %321 = vst [vmem:[%s203 + $0xe8] sm:%s195] %v320
                %v322 = vld [vmem:[%s202 + $0x16c] sm:%s195]
                %323 = vst [vmem:[%s203 + $0xec] sm:%s195] %v322
                %v324 = vld [vmem:[%s202 + $0x170] sm:%s195]
                %325 = vst [vmem:[%s203 + $0xf0] sm:%s195] %v324
                %v326 = vld [vmem:[%s202 + $0x174] sm:%s195]
                %327 = vst [vmem:[%s203 + $0xf4] sm:%s195] %v326
                %v328 = vld [vmem:[%s202 + $0x178] sm:%s195]
                %329 = vst [vmem:[%s203 + $0xf8] sm:%s195] %v328
                %v330 = vld [vmem:[%s202 + $0x17c] sm:%s195]
                %331 = vst [vmem:[%s203 + $0xfc] sm:%s195] %v330
                %v332 = vld [vmem:[%s202 + $0x200] sm:%s195]
                %333 = vst [vmem:[%s203 + $0x100] sm:%s195] %v332
                %v334 = vld [vmem:[%s202 + $0x204] sm:%s195]
                %335 = vst [vmem:[%s203 + $0x104] sm:%s195] %v334
                %v336 = vld [vmem:[%s202 + $0x208] sm:%s195]
                %337 = vst [vmem:[%s203 + $0x108] sm:%s195] %v336
                %v338 = vld [vmem:[%s202 + $0x20c] sm:%s195]
                %339 = vst [vmem:[%s203 + $0x10c] sm:%s195] %v338
                %v340 = vld [vmem:[%s202 + $0x210] sm:%s195]
                %341 = vst [vmem:[%s203 + $0x110] sm:%s195] %v340
                %v342 = vld [vmem:[%s202 + $0x214] sm:%s195]
                %343 = vst [vmem:[%s203 + $0x114] sm:%s195] %v342
                %v344 = vld [vmem:[%s202 + $0x218] sm:%s195]
                %345 = vst [vmem:[%s203 + $0x118] sm:%s195] %v344
                %v346 = vld [vmem:[%s202 + $0x21c] sm:%s195]
                %347 = vst [vmem:[%s203 + $0x11c] sm:%s195] %v346
                %v348 = vld [vmem:[%s202 + $0x220] sm:%s195]
                %349 = vst [vmem:[%s203 + $0x120] sm:%s195] %v348
                %v350 = vld [vmem:[%s202 + $0x224] sm:%s195]
                %351 = vst [vmem:[%s203 + $0x124] sm:%s195] %v350
                %v352 = vld [vmem:[%s202 + $0x228] sm:%s195]
                %353 = vst [vmem:[%s203 + $0x128] sm:%s195] %v352
                %v354 = vld [vmem:[%s202 + $0x22c] sm:%s195]
                %355 = vst [vmem:[%s203 + $0x12c] sm:%s195] %v354
                %v356 = vld [vmem:[%s202 + $0x230] sm:%s195]
                %357 = vst [vmem:[%s203 + $0x130] sm:%s195] %v356
                %v358 = vld [vmem:[%s202 + $0x234] sm:%s195]
                %359 = vst [vmem:[%s203 + $0x134] sm:%s195] %v358
                %v360 = vld [vmem:[%s202 + $0x238] sm:%s195]
                %361 = vst [vmem:[%s203 + $0x138] sm:%s195] %v360
                %v362 = vld [vmem:[%s202 + $0x23c] sm:%s195]
                %363 = vst [vmem:[%s203 + $0x13c] sm:%s195] %v362
                %v364 = vld [vmem:[%s202 + $0x240] sm:%s195]
                %365 = vst [vmem:[%s203 + $0x140] sm:%s195] %v364
                %v366 = vld [vmem:[%s202 + $0x244] sm:%s195]
                %367 = vst [vmem:[%s203 + $0x144] sm:%s195] %v366
                %v368 = vld [vmem:[%s202 + $0x248] sm:%s195]
                %369 = vst [vmem:[%s203 + $0x148] sm:%s195] %v368
                %v370 = vld [vmem:[%s202 + $0x24c] sm:%s195]
                %371 = vst [vmem:[%s203 + $0x14c] sm:%s195] %v370
                %v372 = vld [vmem:[%s202 + $0x250] sm:%s195]
                %373 = vst [vmem:[%s203 + $0x150] sm:%s195] %v372
                %v374 = vld [vmem:[%s202 + $0x254] sm:%s195]
                %375 = vst [vmem:[%s203 + $0x154] sm:%s195] %v374
                %v376 = vld [vmem:[%s202 + $0x258] sm:%s195]
                %377 = vst [vmem:[%s203 + $0x158] sm:%s195] %v376
                %v378 = vld [vmem:[%s202 + $0x25c] sm:%s195]
                %379 = vst [vmem:[%s203 + $0x15c] sm:%s195] %v378
                %v380 = vld [vmem:[%s202 + $0x260] sm:%s195]
                %381 = vst [vmem:[%s203 + $0x160] sm:%s195] %v380
                %v382 = vld [vmem:[%s202 + $0x264] sm:%s195]
                %383 = vst [vmem:[%s203 + $0x164] sm:%s195] %v382
                %v384 = vld [vmem:[%s202 + $0x268] sm:%s195]
                %385 = vst [vmem:[%s203 + $0x168] sm:%s195] %v384
                %v386 = vld [vmem:[%s202 + $0x26c] sm:%s195]
                %387 = vst [vmem:[%s203 + $0x16c] sm:%s195] %v386
                %v388 = vld [vmem:[%s202 + $0x270] sm:%s195]
                %389 = vst [vmem:[%s203 + $0x170] sm:%s195] %v388
                %v390 = vld [vmem:[%s202 + $0x274] sm:%s195]
                %391 = vst [vmem:[%s203 + $0x174] sm:%s195] %v390
                %v392 = vld [vmem:[%s202 + $0x278] sm:%s195]
                %393 = vst [vmem:[%s203 + $0x178] sm:%s195] %v392
                %v394 = vld [vmem:[%s202 + $0x27c] sm:%s195]
                %395 = vst [vmem:[%s203 + $0x17c] sm:%s195] %v394
                %v396 = vld [vmem:[%s202 + $0x300] sm:%s195]
                %397 = vst [vmem:[%s203 + $0x180] sm:%s195] %v396
                %v398 = vld [vmem:[%s202 + $0x304] sm:%s195]
                %399 = vst [vmem:[%s203 + $0x184] sm:%s195] %v398
                %v400 = vld [vmem:[%s202 + $0x308] sm:%s195]
                %401 = vst [vmem:[%s203 + $0x188] sm:%s195] %v400
                %v402 = vld [vmem:[%s202 + $0x30c] sm:%s195]
                %403 = vst [vmem:[%s203 + $0x18c] sm:%s195] %v402
                %v404 = vld [vmem:[%s202 + $0x310] sm:%s195]
                %405 = vst [vmem:[%s203 + $0x190] sm:%s195] %v404
                %v406 = vld [vmem:[%s202 + $0x314] sm:%s195]
                %407 = vst [vmem:[%s203 + $0x194] sm:%s195] %v406
                %v408 = vld [vmem:[%s202 + $0x318] sm:%s195]
                %409 = vst [vmem:[%s203 + $0x198] sm:%s195] %v408
                %v410 = vld [vmem:[%s202 + $0x31c] sm:%s195]
                %411 = vst [vmem:[%s203 + $0x19c] sm:%s195] %v410
                %v412 = vld [vmem:[%s202 + $0x320] sm:%s195]
                %413 = vst [vmem:[%s203 + $0x1a0] sm:%s195] %v412
                %v414 = vld [vmem:[%s202 + $0x324] sm:%s195]
                %415 = vst [vmem:[%s203 + $0x1a4] sm:%s195] %v414
                %v416 = vld [vmem:[%s202 + $0x328] sm:%s195]
                %417 = vst [vmem:[%s203 + $0x1a8] sm:%s195] %v416
                %v418 = vld [vmem:[%s202 + $0x32c] sm:%s195]
                %419 = vst [vmem:[%s203 + $0x1ac] sm:%s195] %v418
                %v420 = vld [vmem:[%s202 + $0x330] sm:%s195]
                %421 = vst [vmem:[%s203 + $0x1b0] sm:%s195] %v420
                %v422 = vld [vmem:[%s202 + $0x334] sm:%s195]
                %423 = vst [vmem:[%s203 + $0x1b4] sm:%s195] %v422
                %v424 = vld [vmem:[%s202 + $0x338] sm:%s195]
                %425 = vst [vmem:[%s203 + $0x1b8] sm:%s195] %v424
                %v426 = vld [vmem:[%s202 + $0x33c] sm:%s195]
                %427 = vst [vmem:[%s203 + $0x1bc] sm:%s195] %v426
                %v428 = vld [vmem:[%s202 + $0x340] sm:%s195]
                %429 = vst [vmem:[%s203 + $0x1c0] sm:%s195] %v428
                %v430 = vld [vmem:[%s202 + $0x344] sm:%s195]
                %431 = vst [vmem:[%s203 + $0x1c4] sm:%s195] %v430
                %v432 = vld [vmem:[%s202 + $0x348] sm:%s195]
                %433 = vst [vmem:[%s203 + $0x1c8] sm:%s195] %v432
                %v434 = vld [vmem:[%s202 + $0x34c] sm:%s195]
                %435 = vst [vmem:[%s203 + $0x1cc] sm:%s195] %v434
                %v436 = vld [vmem:[%s202 + $0x350] sm:%s195]
                %437 = vst [vmem:[%s203 + $0x1d0] sm:%s195] %v436
                %v438 = vld [vmem:[%s202 + $0x354] sm:%s195]
                %439 = vst [vmem:[%s203 + $0x1d4] sm:%s195] %v438
                %v440 = vld [vmem:[%s202 + $0x358] sm:%s195]
                %441 = vst [vmem:[%s203 + $0x1d8] sm:%s195] %v440
                %v442 = vld [vmem:[%s202 + $0x35c] sm:%s195]
                %443 = vst [vmem:[%s203 + $0x1dc] sm:%s195] %v442
                %v444 = vld [vmem:[%s202 + $0x360] sm:%s195]
                %445 = vst [vmem:[%s203 + $0x1e0] sm:%s195] %v444
                %v446 = vld [vmem:[%s202 + $0x364] sm:%s195]
                %447 = vst [vmem:[%s203 + $0x1e4] sm:%s195] %v446
                %v448 = vld [vmem:[%s202 + $0x368] sm:%s195]
                %449 = vst [vmem:[%s203 + $0x1e8] sm:%s195] %v448
                %v450 = vld [vmem:[%s202 + $0x36c] sm:%s195]
                %451 = vst [vmem:[%s203 + $0x1ec] sm:%s195] %v450
                %v452 = vld [vmem:[%s202 + $0x370] sm:%s195]
                %453 = vst [vmem:[%s203 + $0x1f0] sm:%s195] %v452
                %v454 = vld [vmem:[%s202 + $0x374] sm:%s195]
                %455 = vst [vmem:[%s203 + $0x1f4] sm:%s195] %v454
                %v456 = vld [vmem:[%s202 + $0x378] sm:%s195]
                %457 = vst [vmem:[%s203 + $0x1f8] sm:%s195] %v456
                %v458 = vld [vmem:[%s202 + $0x37c] sm:%s195]
                %459 = vst [vmem:[%s203 + $0x1fc] sm:%s195] %v458
                %v460 = vld [vmem:[%s202 + $0x400] sm:%s195]
                %461 = vst [vmem:[%s203 + $0x200] sm:%s195] %v460
                %v462 = vld [vmem:[%s202 + $0x404] sm:%s195]
                %463 = vst [vmem:[%s203 + $0x204] sm:%s195] %v462
                %v464 = vld [vmem:[%s202 + $0x408] sm:%s195]
                %465 = vst [vmem:[%s203 + $0x208] sm:%s195] %v464
                %v466 = vld [vmem:[%s202 + $0x40c] sm:%s195]
                %467 = vst [vmem:[%s203 + $0x20c] sm:%s195] %v466
                %v468 = vld [vmem:[%s202 + $0x410] sm:%s195]
                %469 = vst [vmem:[%s203 + $0x210] sm:%s195] %v468
                %v470 = vld [vmem:[%s202 + $0x414] sm:%s195]
                %471 = vst [vmem:[%s203 + $0x214] sm:%s195] %v470
                %v472 = vld [vmem:[%s202 + $0x418] sm:%s195]
                %473 = vst [vmem:[%s203 + $0x218] sm:%s195] %v472
                %v474 = vld [vmem:[%s202 + $0x41c] sm:%s195]
                %475 = vst [vmem:[%s203 + $0x21c] sm:%s195] %v474
                %v476 = vld [vmem:[%s202 + $0x420] sm:%s195]
                %477 = vst [vmem:[%s203 + $0x220] sm:%s195] %v476
                %v478 = vld [vmem:[%s202 + $0x424] sm:%s195]
                %479 = vst [vmem:[%s203 + $0x224] sm:%s195] %v478
                %v480 = vld [vmem:[%s202 + $0x428] sm:%s195]
                %481 = vst [vmem:[%s203 + $0x228] sm:%s195] %v480
                %v482 = vld [vmem:[%s202 + $0x42c] sm:%s195]
                %483 = vst [vmem:[%s203 + $0x22c] sm:%s195] %v482
                %v484 = vld [vmem:[%s202 + $0x430] sm:%s195]
                %485 = vst [vmem:[%s203 + $0x230] sm:%s195] %v484
                %v486 = vld [vmem:[%s202 + $0x434] sm:%s195]
                %487 = vst [vmem:[%s203 + $0x234] sm:%s195] %v486
                %v488 = vld [vmem:[%s202 + $0x438] sm:%s195]
                %489 = vst [vmem:[%s203 + $0x238] sm:%s195] %v488
                %v490 = vld [vmem:[%s202 + $0x43c] sm:%s195]
                %491 = vst [vmem:[%s203 + $0x23c] sm:%s195] %v490
                %v492 = vld [vmem:[%s202 + $0x440] sm:%s195]
                %493 = vst [vmem:[%s203 + $0x240] sm:%s195] %v492
                %v494 = vld [vmem:[%s202 + $0x444] sm:%s195]
                %495 = vst [vmem:[%s203 + $0x244] sm:%s195] %v494
                %v496 = vld [vmem:[%s202 + $0x448] sm:%s195]
                %497 = vst [vmem:[%s203 + $0x248] sm:%s195] %v496
                %v498 = vld [vmem:[%s202 + $0x44c] sm:%s195]
                %499 = vst [vmem:[%s203 + $0x24c] sm:%s195] %v498
                %v500 = vld [vmem:[%s202 + $0x450] sm:%s195]
                %501 = vst [vmem:[%s203 + $0x250] sm:%s195] %v500
                %v502 = vld [vmem:[%s202 + $0x454] sm:%s195]
                %503 = vst [vmem:[%s203 + $0x254] sm:%s195] %v502
                %v504 = vld [vmem:[%s202 + $0x458] sm:%s195]
                %505 = vst [vmem:[%s203 + $0x258] sm:%s195] %v504
                %v506 = vld [vmem:[%s202 + $0x45c] sm:%s195]
                %507 = vst [vmem:[%s203 + $0x25c] sm:%s195] %v506
                %v508 = vld [vmem:[%s202 + $0x460] sm:%s195]
                %509 = vst [vmem:[%s203 + $0x260] sm:%s195] %v508
                %v510 = vld [vmem:[%s202 + $0x464] sm:%s195]
                %511 = vst [vmem:[%s203 + $0x264] sm:%s195] %v510
                %v512 = vld [vmem:[%s202 + $0x468] sm:%s195]
                %513 = vst [vmem:[%s203 + $0x268] sm:%s195] %v512
                %v514 = vld [vmem:[%s202 + $0x46c] sm:%s195]
                %515 = vst [vmem:[%s203 + $0x26c] sm:%s195] %v514
                %v516 = vld [vmem:[%s202 + $0x470] sm:%s195]
                %517 = vst [vmem:[%s203 + $0x270] sm:%s195] %v516
                %v518 = vld [vmem:[%s202 + $0x474] sm:%s195]
                %519 = vst [vmem:[%s203 + $0x274] sm:%s195] %v518
                %v520 = vld [vmem:[%s202 + $0x478] sm:%s195]
                %521 = vst [vmem:[%s203 + $0x278] sm:%s195] %v520
                %v522 = vld [vmem:[%s202 + $0x47c] sm:%s195]
                %523 = vst [vmem:[%s203 + $0x27c] sm:%s195] %v522
                %v524 = vld [vmem:[%s202 + $0x500] sm:%s195]
                %525 = vst [vmem:[%s203 + $0x280] sm:%s195] %v524
                %v526 = vld [vmem:[%s202 + $0x504] sm:%s195]
                %527 = vst [vmem:[%s203 + $0x284] sm:%s195] %v526
                %v528 = vld [vmem:[%s202 + $0x508] sm:%s195]
                %529 = vst [vmem:[%s203 + $0x288] sm:%s195] %v528
                %v530 = vld [vmem:[%s202 + $0x50c] sm:%s195]
                %531 = vst [vmem:[%s203 + $0x28c] sm:%s195] %v530
                %v532 = vld [vmem:[%s202 + $0x510] sm:%s195]
                %533 = vst [vmem:[%s203 + $0x290] sm:%s195] %v532
                %v534 = vld [vmem:[%s202 + $0x514] sm:%s195]
                %535 = vst [vmem:[%s203 + $0x294] sm:%s195] %v534
                %v536 = vld [vmem:[%s202 + $0x518] sm:%s195]
                %537 = vst [vmem:[%s203 + $0x298] sm:%s195] %v536
                %v538 = vld [vmem:[%s202 + $0x51c] sm:%s195]
                %539 = vst [vmem:[%s203 + $0x29c] sm:%s195] %v538
                %v540 = vld [vmem:[%s202 + $0x520] sm:%s195]
                %541 = vst [vmem:[%s203 + $0x2a0] sm:%s195] %v540
                %v542 = vld [vmem:[%s202 + $0x524] sm:%s195]
                %543 = vst [vmem:[%s203 + $0x2a4] sm:%s195] %v542
                %v544 = vld [vmem:[%s202 + $0x528] sm:%s195]
                %545 = vst [vmem:[%s203 + $0x2a8] sm:%s195] %v544
                %v546 = vld [vmem:[%s202 + $0x52c] sm:%s195]
                %547 = vst [vmem:[%s203 + $0x2ac] sm:%s195] %v546
                %v548 = vld [vmem:[%s202 + $0x530] sm:%s195]
                %549 = vst [vmem:[%s203 + $0x2b0] sm:%s195] %v548
                %v550 = vld [vmem:[%s202 + $0x534] sm:%s195]
                %551 = vst [vmem:[%s203 + $0x2b4] sm:%s195] %v550
                %v552 = vld [vmem:[%s202 + $0x538] sm:%s195]
                %553 = vst [vmem:[%s203 + $0x2b8] sm:%s195] %v552
                %v554 = vld [vmem:[%s202 + $0x53c] sm:%s195]
                %555 = vst [vmem:[%s203 + $0x2bc] sm:%s195] %v554
                %v556 = vld [vmem:[%s202 + $0x540] sm:%s195]
                %557 = vst [vmem:[%s203 + $0x2c0] sm:%s195] %v556
                %v558 = vld [vmem:[%s202 + $0x544] sm:%s195]
                %559 = vst [vmem:[%s203 + $0x2c4] sm:%s195] %v558
                %v560 = vld [vmem:[%s202 + $0x548] sm:%s195]
                %561 = vst [vmem:[%s203 + $0x2c8] sm:%s195] %v560
                %v562 = vld [vmem:[%s202 + $0x54c] sm:%s195]
                %563 = vst [vmem:[%s203 + $0x2cc] sm:%s195] %v562
                %v564 = vld [vmem:[%s202 + $0x550] sm:%s195]
                %565 = vst [vmem:[%s203 + $0x2d0] sm:%s195] %v564
                %v566 = vld [vmem:[%s202 + $0x554] sm:%s195]
                %567 = vst [vmem:[%s203 + $0x2d4] sm:%s195] %v566
                %v568 = vld [vmem:[%s202 + $0x558] sm:%s195]
                %569 = vst [vmem:[%s203 + $0x2d8] sm:%s195] %v568
                %v570 = vld [vmem:[%s202 + $0x55c] sm:%s195]
                %571 = vst [vmem:[%s203 + $0x2dc] sm:%s195] %v570
                %v572 = vld [vmem:[%s202 + $0x560] sm:%s195]
                %573 = vst [vmem:[%s203 + $0x2e0] sm:%s195] %v572
                %v574 = vld [vmem:[%s202 + $0x564] sm:%s195]
                %575 = vst [vmem:[%s203 + $0x2e4] sm:%s195] %v574
                %v576 = vld [vmem:[%s202 + $0x568] sm:%s195]
                %577 = vst [vmem:[%s203 + $0x2e8] sm:%s195] %v576
                %v578 = vld [vmem:[%s202 + $0x56c] sm:%s195]
                %579 = vst [vmem:[%s203 + $0x2ec] sm:%s195] %v578
                %v580 = vld [vmem:[%s202 + $0x570] sm:%s195]
                %581 = vst [vmem:[%s203 + $0x2f0] sm:%s195] %v580
                %v582 = vld [vmem:[%s202 + $0x574] sm:%s195]
                %583 = vst [vmem:[%s203 + $0x2f4] sm:%s195] %v582
                %v584 = vld [vmem:[%s202 + $0x578] sm:%s195]
                %585 = vst [vmem:[%s203 + $0x2f8] sm:%s195] %v584
                %v586 = vld [vmem:[%s202 + $0x57c] sm:%s195]
                %587 = vst [vmem:[%s203 + $0x2fc] sm:%s195] %v586
                %v588 = vld [vmem:[%s202 + $0x600] sm:%s195]
                %589 = vst [vmem:[%s203 + $0x300] sm:%s195] %v588
                %v590 = vld [vmem:[%s202 + $0x604] sm:%s195]
                %591 = vst [vmem:[%s203 + $0x304] sm:%s195] %v590
                %v592 = vld [vmem:[%s202 + $0x608] sm:%s195]
                %593 = vst [vmem:[%s203 + $0x308] sm:%s195] %v592
                %v594 = vld [vmem:[%s202 + $0x60c] sm:%s195]
                %595 = vst [vmem:[%s203 + $0x30c] sm:%s195] %v594
                %v596 = vld [vmem:[%s202 + $0x610] sm:%s195]
                %597 = vst [vmem:[%s203 + $0x310] sm:%s195] %v596
                %v598 = vld [vmem:[%s202 + $0x614] sm:%s195]
                %599 = vst [vmem:[%s203 + $0x314] sm:%s195] %v598
                %v600 = vld [vmem:[%s202 + $0x618] sm:%s195]
                %601 = vst [vmem:[%s203 + $0x318] sm:%s195] %v600
                %v602 = vld [vmem:[%s202 + $0x61c] sm:%s195]
                %603 = vst [vmem:[%s203 + $0x31c] sm:%s195] %v602
                %v604 = vld [vmem:[%s202 + $0x620] sm:%s195]
                %605 = vst [vmem:[%s203 + $0x320] sm:%s195] %v604
                %v606 = vld [vmem:[%s202 + $0x624] sm:%s195]
                %607 = vst [vmem:[%s203 + $0x324] sm:%s195] %v606
                %v608 = vld [vmem:[%s202 + $0x628] sm:%s195]
                %609 = vst [vmem:[%s203 + $0x328] sm:%s195] %v608
                %v610 = vld [vmem:[%s202 + $0x62c] sm:%s195]
                %611 = vst [vmem:[%s203 + $0x32c] sm:%s195] %v610
                %v612 = vld [vmem:[%s202 + $0x630] sm:%s195]
                %613 = vst [vmem:[%s203 + $0x330] sm:%s195] %v612
                %v614 = vld [vmem:[%s202 + $0x634] sm:%s195]
                %615 = vst [vmem:[%s203 + $0x334] sm:%s195] %v614
                %v616 = vld [vmem:[%s202 + $0x638] sm:%s195]
                %617 = vst [vmem:[%s203 + $0x338] sm:%s195] %v616
                %v618 = vld [vmem:[%s202 + $0x63c] sm:%s195]
                %619 = vst [vmem:[%s203 + $0x33c] sm:%s195] %v618
                %v620 = vld [vmem:[%s202 + $0x640] sm:%s195]
                %621 = vst [vmem:[%s203 + $0x340] sm:%s195] %v620
                %v622 = vld [vmem:[%s202 + $0x644] sm:%s195]
                %623 = vst [vmem:[%s203 + $0x344] sm:%s195] %v622
                %v624 = vld [vmem:[%s202 + $0x648] sm:%s195]
                %625 = vst [vmem:[%s203 + $0x348] sm:%s195] %v624
                %v626 = vld [vmem:[%s202 + $0x64c] sm:%s195]
                %627 = vst [vmem:[%s203 + $0x34c] sm:%s195] %v626
                %v628 = vld [vmem:[%s202 + $0x650] sm:%s195]
                %629 = vst [vmem:[%s203 + $0x350] sm:%s195] %v628
                %v630 = vld [vmem:[%s202 + $0x654] sm:%s195]
                %631 = vst [vmem:[%s203 + $0x354] sm:%s195] %v630
                %v632 = vld [vmem:[%s202 + $0x658] sm:%s195]
                %633 = vst [vmem:[%s203 + $0x358] sm:%s195] %v632
                %v634 = vld [vmem:[%s202 + $0x65c] sm:%s195]
                %635 = vst [vmem:[%s203 + $0x35c] sm:%s195] %v634
                %v636 = vld [vmem:[%s202 + $0x660] sm:%s195]
                %637 = vst [vmem:[%s203 + $0x360] sm:%s195] %v636
                %v638 = vld [vmem:[%s202 + $0x664] sm:%s195]
                %639 = vst [vmem:[%s203 + $0x364] sm:%s195] %v638
                %v640 = vld [vmem:[%s202 + $0x668] sm:%s195]
                %641 = vst [vmem:[%s203 + $0x368] sm:%s195] %v640
                %v642 = vld [vmem:[%s202 + $0x66c] sm:%s195]
                %643 = vst [vmem:[%s203 + $0x36c] sm:%s195] %v642
                %v644 = vld [vmem:[%s202 + $0x670] sm:%s195]
                %645 = vst [vmem:[%s203 + $0x370] sm:%s195] %v644
                %v646 = vld [vmem:[%s202 + $0x674] sm:%s195]
                %647 = vst [vmem:[%s203 + $0x374] sm:%s195] %v646
                %v648 = vld [vmem:[%s202 + $0x678] sm:%s195]
                %649 = vst [vmem:[%s203 + $0x378] sm:%s195] %v648
                %v650 = vld [vmem:[%s202 + $0x67c] sm:%s195]
                %651 = vst [vmem:[%s203 + $0x37c] sm:%s195] %v650
                %v652 = vld [vmem:[%s202 + $0x700] sm:%s195]
                %653 = vst [vmem:[%s203 + $0x380] sm:%s195] %v652
                %v654 = vld [vmem:[%s202 + $0x704] sm:%s195]
                %655 = vst [vmem:[%s203 + $0x384] sm:%s195] %v654
                %v656 = vld [vmem:[%s202 + $0x708] sm:%s195]
                %657 = vst [vmem:[%s203 + $0x388] sm:%s195] %v656
                %v658 = vld [vmem:[%s202 + $0x70c] sm:%s195]
                %659 = vst [vmem:[%s203 + $0x38c] sm:%s195] %v658
                %v660 = vld [vmem:[%s202 + $0x710] sm:%s195]
                %661 = vst [vmem:[%s203 + $0x390] sm:%s195] %v660
                %v662 = vld [vmem:[%s202 + $0x714] sm:%s195]
                %663 = vst [vmem:[%s203 + $0x394] sm:%s195] %v662
                %v664 = vld [vmem:[%s202 + $0x718] sm:%s195]
                %665 = vst [vmem:[%s203 + $0x398] sm:%s195] %v664
                %v666 = vld [vmem:[%s202 + $0x71c] sm:%s195]
                %667 = vst [vmem:[%s203 + $0x39c] sm:%s195] %v666
                %v668 = vld [vmem:[%s202 + $0x720] sm:%s195]
                %669 = vst [vmem:[%s203 + $0x3a0] sm:%s195] %v668
                %v670 = vld [vmem:[%s202 + $0x724] sm:%s195]
                %671 = vst [vmem:[%s203 + $0x3a4] sm:%s195] %v670
                %v672 = vld [vmem:[%s202 + $0x728] sm:%s195]
                %673 = vst [vmem:[%s203 + $0x3a8] sm:%s195] %v672
                %v674 = vld [vmem:[%s202 + $0x72c] sm:%s195]
                %675 = vst [vmem:[%s203 + $0x3ac] sm:%s195] %v674
                %v676 = vld [vmem:[%s202 + $0x730] sm:%s195]
                %677 = vst [vmem:[%s203 + $0x3b0] sm:%s195] %v676
                %v678 = vld [vmem:[%s202 + $0x734] sm:%s195]
                %679 = vst [vmem:[%s203 + $0x3b4] sm:%s195] %v678
                %v680 = vld [vmem:[%s202 + $0x738] sm:%s195]
                %681 = vst [vmem:[%s203 + $0x3b8] sm:%s195] %v680
                %v682 = vld [vmem:[%s202 + $0x73c] sm:%s195]
                %683 = vst [vmem:[%s203 + $0x3bc] sm:%s195] %v682
                %v684 = vld [vmem:[%s202 + $0x740] sm:%s195]
                %685 = vst [vmem:[%s203 + $0x3c0] sm:%s195] %v684
                %v686 = vld [vmem:[%s202 + $0x744] sm:%s195]
                %687 = vst [vmem:[%s203 + $0x3c4] sm:%s195] %v686
                %v688 = vld [vmem:[%s202 + $0x748] sm:%s195]
                %689 = vst [vmem:[%s203 + $0x3c8] sm:%s195] %v688
                %v690 = vld [vmem:[%s202 + $0x74c] sm:%s195]
                %691 = vst [vmem:[%s203 + $0x3cc] sm:%s195] %v690
                %v692 = vld [vmem:[%s202 + $0x750] sm:%s195]
                %693 = vst [vmem:[%s203 + $0x3d0] sm:%s195] %v692
                %v694 = vld [vmem:[%s202 + $0x754] sm:%s195]
                %695 = vst [vmem:[%s203 + $0x3d4] sm:%s195] %v694
                %v696 = vld [vmem:[%s202 + $0x758] sm:%s195]
                %697 = vst [vmem:[%s203 + $0x3d8] sm:%s195] %v696
                %v698 = vld [vmem:[%s202 + $0x75c] sm:%s195]
                %699 = vst [vmem:[%s203 + $0x3dc] sm:%s195] %v698
                %v700 = vld [vmem:[%s202 + $0x760] sm:%s195]
                %701 = vst [vmem:[%s203 + $0x3e0] sm:%s195] %v700
                %v702 = vld [vmem:[%s202 + $0x764] sm:%s195]
                %703 = vst [vmem:[%s203 + $0x3e4] sm:%s195] %v702
                %v704 = vld [vmem:[%s202 + $0x768] sm:%s195]
                %705 = vst [vmem:[%s203 + $0x3e8] sm:%s195] %v704
                %v706 = vld [vmem:[%s202 + $0x76c] sm:%s195]
                %707 = vst [vmem:[%s203 + $0x3ec] sm:%s195] %v706
                %v708 = vld [vmem:[%s202 + $0x770] sm:%s195]
                %709 = vst [vmem:[%s203 + $0x3f0] sm:%s195] %v708
                %v710 = vld [vmem:[%s202 + $0x774] sm:%s195]
                %711 = vst [vmem:[%s203 + $0x3f4] sm:%s195] %v710
                %v712 = vld [vmem:[%s202 + $0x778] sm:%s195]
                %713 = vst [vmem:[%s203 + $0x3f8] sm:%s195] %v712
                %v714 = vld [vmem:[%s202 + $0x77c] sm:%s195]
                %715 = vst [vmem:[%s203 + $0x3fc] sm:%s195] %v714
                %v716 = vld [vmem:[%s202 + $0x800] sm:%s195]
                %717 = vst [vmem:[%s203 + $0x400] sm:%s195] %v716
                %v718 = vld [vmem:[%s202 + $0x804] sm:%s195]
                %719 = vst [vmem:[%s203 + $0x404] sm:%s195] %v718
                %v720 = vld [vmem:[%s202 + $0x808] sm:%s195]
                %721 = vst [vmem:[%s203 + $0x408] sm:%s195] %v720
                %v722 = vld [vmem:[%s202 + $0x80c] sm:%s195]
                %723 = vst [vmem:[%s203 + $0x40c] sm:%s195] %v722
                %v724 = vld [vmem:[%s202 + $0x810] sm:%s195]
                %725 = vst [vmem:[%s203 + $0x410] sm:%s195] %v724
                %v726 = vld [vmem:[%s202 + $0x814] sm:%s195]
                %727 = vst [vmem:[%s203 + $0x414] sm:%s195] %v726
                %v728 = vld [vmem:[%s202 + $0x818] sm:%s195]
                %729 = vst [vmem:[%s203 + $0x418] sm:%s195] %v728
                %v730 = vld [vmem:[%s202 + $0x81c] sm:%s195]
                %731 = vst [vmem:[%s203 + $0x41c] sm:%s195] %v730
                %v732 = vld [vmem:[%s202 + $0x820] sm:%s195]
                %733 = vst [vmem:[%s203 + $0x420] sm:%s195] %v732
                %v734 = vld [vmem:[%s202 + $0x824] sm:%s195]
                %735 = vst [vmem:[%s203 + $0x424] sm:%s195] %v734
                %v736 = vld [vmem:[%s202 + $0x828] sm:%s195]
                %737 = vst [vmem:[%s203 + $0x428] sm:%s195] %v736
                %v738 = vld [vmem:[%s202 + $0x82c] sm:%s195]
                %739 = vst [vmem:[%s203 + $0x42c] sm:%s195] %v738
                %v740 = vld [vmem:[%s202 + $0x830] sm:%s195]
                %741 = vst [vmem:[%s203 + $0x430] sm:%s195] %v740
                %v742 = vld [vmem:[%s202 + $0x834] sm:%s195]
                %743 = vst [vmem:[%s203 + $0x434] sm:%s195] %v742
                %v744 = vld [vmem:[%s202 + $0x838] sm:%s195]
                %745 = vst [vmem:[%s203 + $0x438] sm:%s195] %v744
                %v746 = vld [vmem:[%s202 + $0x83c] sm:%s195]
                %747 = vst [vmem:[%s203 + $0x43c] sm:%s195] %v746
                %v748 = vld [vmem:[%s202 + $0x840] sm:%s195]
                %749 = vst [vmem:[%s203 + $0x440] sm:%s195] %v748
                %v750 = vld [vmem:[%s202 + $0x844] sm:%s195]
                %751 = vst [vmem:[%s203 + $0x444] sm:%s195] %v750
                %v752 = vld [vmem:[%s202 + $0x848] sm:%s195]
                %753 = vst [vmem:[%s203 + $0x448] sm:%s195] %v752
                %v754 = vld [vmem:[%s202 + $0x84c] sm:%s195]
                %755 = vst [vmem:[%s203 + $0x44c] sm:%s195] %v754
                %v756 = vld [vmem:[%s202 + $0x850] sm:%s195]
                %757 = vst [vmem:[%s203 + $0x450] sm:%s195] %v756
                %v758 = vld [vmem:[%s202 + $0x854] sm:%s195]
                %759 = vst [vmem:[%s203 + $0x454] sm:%s195] %v758
                %v760 = vld [vmem:[%s202 + $0x858] sm:%s195]
                %761 = vst [vmem:[%s203 + $0x458] sm:%s195] %v760
                %v762 = vld [vmem:[%s202 + $0x85c] sm:%s195]
                %763 = vst [vmem:[%s203 + $0x45c] sm:%s195] %v762
                %v764 = vld [vmem:[%s202 + $0x860] sm:%s195]
                %765 = vst [vmem:[%s203 + $0x460] sm:%s195] %v764
                %v766 = vld [vmem:[%s202 + $0x864] sm:%s195]
                %767 = vst [vmem:[%s203 + $0x464] sm:%s195] %v766
                %v768 = vld [vmem:[%s202 + $0x868] sm:%s195]
                %769 = vst [vmem:[%s203 + $0x468] sm:%s195] %v768
                %v770 = vld [vmem:[%s202 + $0x86c] sm:%s195]
                %771 = vst [vmem:[%s203 + $0x46c] sm:%s195] %v770
                %v772 = vld [vmem:[%s202 + $0x870] sm:%s195]
                %773 = vst [vmem:[%s203 + $0x470] sm:%s195] %v772
                %v774 = vld [vmem:[%s202 + $0x874] sm:%s195]
                %775 = vst [vmem:[%s203 + $0x474] sm:%s195] %v774
                %v776 = vld [vmem:[%s202 + $0x878] sm:%s195]
                %777 = vst [vmem:[%s203 + $0x478] sm:%s195] %v776
                %v778 = vld [vmem:[%s202 + $0x87c] sm:%s195]
                %779 = vst [vmem:[%s203 + $0x47c] sm:%s195] %v778
              $region53: #{inception_block_pallas.3} parent=47 // loop_footer
                %s201 = sadd.s32 1, %s197
              $region54: #{inception_block_pallas.3} parent=47 // loop_footer_branch
                %196 = sbr.rel target = $region50
              $region55: #{inception_block_pallas.3} parent=47 // loop_exit
                _
            $region48: #{inception_block_pallas.3} parent=39 // pred_fallthru
              _
          $region40: #{inception_block_pallas.3} parent=35 // pred_fallthru
            _
          %1376 = vnop
        $region36: #{inception_block_pallas.3} parent=31 // pred_fallthru
          _
      $region32: #{inception_block_pallas.3} parent=5 // pred_fallthru
        _
      %p1377 = scmp.le.s32.totalorder 1, %s11
      %p1378 = scmp.lt.s32.totalorder %s11, 3
      %p1379 = pnand %p1377, %p1378
      %p1380 = pneg %p1379
      // Predicated region
      $region74: #{inception_block_pallas.3} parent=5 // pred_check
        _
      $region75: #{inception_block_pallas.3} parent=5 // pred_check_branch
        %1382 = sbr.rel (%p1379) target = $region77
      $region76: #{inception_block_pallas.3} parent=5 // pred_region
        %s1383 = ssub.s32 %s11, 1
        %s1384 = sand.u32 %s24, 1
        %s1385 = sand.u32 %s24, 1
        %s1386 = smul.addr %s1385, 1152
        %s1387 = scalar_lea.vmem [#allocation2], %s1386
        // Predicated region
        $region78: #{inception_block_pallas.3} parent=76 // pred_check
          %p1388 = pneg %p37
        $region79: #{inception_block_pallas.3} parent=76 // pred_check_branch
          %1390 = sbr.rel (%p1388) target = $region81
        $region80: #{inception_block_pallas.3} parent=76 // pred_region
          _
        $region81: #{inception_block_pallas.3} parent=76 // pred_fallthru
          _
        %s1391 = sand.u32 %s24, 1
        %s1392 = sand.u32 %s24, 1
        %s1393 = smul.addr %s1392, 1152
        %s1394 = scalar_lea.vmem [#allocation2], %s1393
        %p1395 = pneg %p37
        %p1396 = pneg %p34
        %p1397 = pneg %p58
        %p1398 = pneg %p55
        %p1399 = pneg %p79
        %p1400 = pneg %p76
        %p1401 = pneg %p100
        %p1402 = pneg %p97
        %p1403 = pneg %p121
        %p1404 = pneg %p118
        %p1405 = pneg %p147
        %p1406 = pneg %p144
        %s1407 = smul.u32 32, %s16
        %p1408 = scmp.lt.s32.totalorder %s1407, 63
        %s1409 = scalar_select %p1408, %s1407, 63
        %s1410 = smul.addr %s1409, 8
        %s1411 = scalar_lea.vmem %s5, %s1410
        %s1412 = smul.u32 32, %s16
        %s1413 = smul.u32 32, %s16
        %p1414 = scmp.lt.s32.totalorder %s1413, 63
        %s1415 = scalar_select %p1414, %s1413, 63
        %s1416 = smul.addr %s1415, 8
        %s1417 = scalar_lea.vmem %s5, %s1416
        %s1418 = smul.u32 32, %s16
        %s1420 = scalar_lea.vmem %s1387, 512 [#allocation2]
        %v1421 = vld [vmem:[%s1420] sm:$0xf]
        %v1422 = vld [vmem:[%s1420 + $0x4] sm:$0xf]
        %v1423 = vld [vmem:[%s1420 + $0x8] sm:$0xf]
        %v1424 = vld [vmem:[%s1420 + $0xc] sm:$0xf]
        %v1425 = vld [vmem:[%s1420 + $0x10] sm:$0xf]
        %v1426 = vld [vmem:[%s1420 + $0x14] sm:$0xf]
        %v1427 = vld [vmem:[%s1420 + $0x18] sm:$0xf]
        %v1428 = vld [vmem:[%s1420 + $0x1c] sm:$0xf]
        %v1429 = vld [vmem:[%s1420 + $0x20] sm:$0xf]
        %v1430 = vld [vmem:[%s1420 + $0x24] sm:$0xf]
        %v1431 = vld [vmem:[%s1420 + $0x28] sm:$0xf]
        %v1432 = vld [vmem:[%s1420 + $0x2c] sm:$0xf]
        %v1433 = vld [vmem:[%s1420 + $0x30] sm:$0xf]
        %v1434 = vld [vmem:[%s1420 + $0x34] sm:$0xf]
        %v1435 = vld [vmem:[%s1420 + $0x38] sm:$0xf]
        %v1436 = vld [vmem:[%s1420 + $0x3c] sm:$0xf]
        %v1437 = vld [vmem:[%s1420 + $0x40] sm:$0xf]
        %v1438 = vld [vmem:[%s1420 + $0x44] sm:$0xf]
        %v1439 = vld [vmem:[%s1420 + $0x48] sm:$0xf]
        %v1440 = vld [vmem:[%s1420 + $0x4c] sm:$0xf]
        %v1441 = vld [vmem:[%s1420 + $0x50] sm:$0xf]
        %v1442 = vld [vmem:[%s1420 + $0x54] sm:$0xf]
        %v1443 = vld [vmem:[%s1420 + $0x58] sm:$0xf]
        %v1444 = vld [vmem:[%s1420 + $0x5c] sm:$0xf]
        %v1445 = vld [vmem:[%s1420 + $0x60] sm:$0xf]
        %v1446 = vld [vmem:[%s1420 + $0x64] sm:$0xf]
        %v1447 = vld [vmem:[%s1420 + $0x68] sm:$0xf]
        %v1448 = vld [vmem:[%s1420 + $0x6c] sm:$0xf]
        %v1449 = vld [vmem:[%s1420 + $0x70] sm:$0xf]
        %v1450 = vld [vmem:[%s1420 + $0x74] sm:$0xf]
        %v1451 = vld [vmem:[%s1420 + $0x78] sm:$0xf]
        %v1452 = vld [vmem:[%s1420 + $0x7c] sm:$0xf]
        %v1453 = vld [vmem:[%s1] sm:$0x3]
        %v1454 = vld [vmem:[%s2] sm:$0x1]
        %v1456 = vlaneseq
        %v1457 = vshrl.u32 %v1456, 7
        %v1458 = vsub.s32 0, %v1457
        %v1459 = vrot.slane %v1454, %v1458
        %v1493 = vunpack.c.l.b16 %v1421
        %v1494 = vunpack.c.l.b16 %v1422
        %v1495 = vunpack.c.l.b16 %v1423
        %v1496 = vunpack.c.l.b16 %v1424
        %v1497 = vunpack.c.l.b16 %v1425
        %v1498 = vunpack.c.l.b16 %v1426
        %v1499 = vunpack.c.l.b16 %v1427
        %v1500 = vunpack.c.l.b16 %v1428
        %v1501 = vunpack.c.l.b16 %v1429
        %v1502 = vunpack.c.l.b16 %v1430
        %v1503 = vunpack.c.l.b16 %v1431
        %v1504 = vunpack.c.l.b16 %v1432
        %v1505 = vunpack.c.l.b16 %v1433
        %v1506 = vunpack.c.l.b16 %v1434
        %v1507 = vunpack.c.l.b16 %v1435
        %v1508 = vunpack.c.l.b16 %v1436
        %v1509 = vunpack.c.l.b16 %v1437
        %v1510 = vunpack.c.l.b16 %v1438
        %v1511 = vunpack.c.l.b16 %v1439
        %v1512 = vunpack.c.l.b16 %v1440
        %v1513 = vunpack.c.l.b16 %v1441
        %v1514 = vunpack.c.l.b16 %v1442
        %v1515 = vunpack.c.l.b16 %v1443
        %v1516 = vunpack.c.l.b16 %v1444
        %v1517 = vunpack.c.l.b16 %v1445
        %v1518 = vunpack.c.l.b16 %v1446
        %v1519 = vunpack.c.l.b16 %v1447
        %v1520 = vunpack.c.l.b16 %v1448
        %v1521 = vunpack.c.l.b16 %v1449
        %v1522 = vunpack.c.l.b16 %v1450
        %v1523 = vunpack.c.l.b16 %v1451
        %v1524 = vunpack.c.l.b16 %v1452
        %v1525 = vpack.c.b16 %v1494, %v1493
        %v1526 = vpack.c.b16 %v1496, %v1495
        %v1527 = vpack.c.b16 %v1498, %v1497
        %v1528 = vpack.c.b16 %v1500, %v1499
        %v1529 = vpack.c.b16 %v1502, %v1501
        %v1530 = vpack.c.b16 %v1504, %v1503
        %v1531 = vpack.c.b16 %v1506, %v1505
        %v1532 = vpack.c.b16 %v1508, %v1507
        %v1533 = vpack.c.b16 %v1510, %v1509
        %v1534 = vpack.c.b16 %v1512, %v1511
        %v1535 = vpack.c.b16 %v1514, %v1513
        %v1536 = vpack.c.b16 %v1516, %v1515
        %v1537 = vpack.c.b16 %v1518, %v1517
        %v1538 = vpack.c.b16 %v1520, %v1519
        %v1539 = vpack.c.b16 %v1522, %v1521
        %v1540 = vpack.c.b16 %v1524, %v1523
        %vm1541 = vcmask 31744
        %v1543 = vsel %vm1541, %v1525, 0
        %v1546 = vsel %vm1541, %v1526, 0
        %v1549 = vsel %vm1541, %v1527, 0
        %v1552 = vsel %vm1541, %v1528, 0
        %v1555 = vsel %vm1541, %v1529, 0
        %v1558 = vsel %vm1541, %v1530, 0
        %v1561 = vsel %vm1541, %v1531, 0
        %v1564 = vsel %vm1541, %v1532, 0
        %v1567 = vsel %vm1541, %v1533, 0
        %v1570 = vsel %vm1541, %v1534, 0
        %v1573 = vsel %vm1541, %v1535, 0
        %v1576 = vsel %vm1541, %v1536, 0
        %v1579 = vsel %vm1541, %v1537, 0
        %v1582 = vsel %vm1541, %v1538, 0
        %v1585 = vsel %vm1541, %v1539, 0
        %v1588 = vsel %vm1541, %v1540, 0
        %vm1590 = vcmask 1041408
        %v1592 = vsel %vm1590, %v1453, 0
        %1594 = vmatprep.subr.bf16.mxu0 0
        %1595 = vmatpush1.bf16.msra.mxu0 0
        %1596 = vmatprep.subr.bf16.mxu0 0
        %1597 = vmatpush1.bf16.msra.mxu0 0
        %1598 = vmatprep.subr.bf16.mxu0 0
        %1599 = vmatpush1.bf16.msra.mxu0 0
        %1600 = vmatprep.subr.bf16.mxu0 0
        %1601 = vmatpush1.bf16.msra.mxu0 0
        %1602 = vmatprep.subr.bf16.mxu0 0
        %1603 = vmatpush1.bf16.msra.mxu0 0
        %1604 = vmatprep.subr.bf16.mxu0 0
        %1605 = vmatpush1.bf16.msra.mxu0 0
        %1606 = vmatprep.subr.bf16.mxu0 0
        %1607 = vmatpush1.bf16.msra.mxu0 0
        %1608 = vmatprep.subr.bf16.mxu0 0
        %1609 = vmatpush1.bf16.msra.mxu0 %v1592
        %1610 = vmatprep.subr.bf16.mxu0 0
        %1611 = vmatpush2.bf16.msra.mxu0 0
        %1612 = vmatprep.subr.bf16.mxu0 0
        %1613 = vmatpush2.bf16.msra.mxu0 0
        %1614 = vmatprep.subr.bf16.mxu0 0
        %1615 = vmatpush2.bf16.msra.mxu0 0
        %1616 = vmatprep.subr.bf16.mxu0 0
        %1617 = vmatpush2.bf16.msra.mxu0 0
        %1618 = vmatprep.subr.bf16.mxu0 0
        %1619 = vmatpush2.bf16.msra.mxu0 0
        %1620 = vmatprep.subr.bf16.mxu0 0
        %1621 = vmatpush2.bf16.msra.mxu0 0
        %1622 = vmatprep.subr.bf16.mxu0 0
        %1623 = vmatpush2.bf16.msra.mxu0 0
        %1624 = vmatprep.subr.bf16.mxu0 0
        %1625 = vmatpush2.bf16.msra.mxu0 0
        %1626 = vmatprep.mubr.bf16.mxu0 0
        %1627 = vmatmul.mubr.bf16.gmra.mxu0 %v1543
        %v1628 = vpop.f32.mrf.mxu0
        %v1629 = vadd.f32 %v1459, %v1628
        %v1630 = vpop.f32.mrf.mxu0
        %v1631 = vpop.f32.mrf.mxu0
        %v1632 = vadd.f32 %v1459, %v1631
        %v1633 = vpop.f32.mrf.mxu0
        %1634 = vmatprep.mubr.bf16.mxu0 0
        %1635 = vmatmul.mubr.bf16.gmra.mxu0 %v1546
        %v1636 = vpop.f32.mrf.mxu0
        %v1637 = vadd.f32 %v1459, %v1636
        %v1638 = vpop.f32.mrf.mxu0
        %v1639 = vpop.f32.mrf.mxu0
        %v1640 = vadd.f32 %v1459, %v1639
        %v1641 = vpop.f32.mrf.mxu0
        %1642 = vmatprep.mubr.bf16.mxu0 0
        %1643 = vmatmul.mubr.bf16.gmra.mxu0 %v1549
        %v1644 = vpop.f32.mrf.mxu0
        %v1645 = vadd.f32 %v1459, %v1644
        %v1646 = vpop.f32.mrf.mxu0
        %v1647 = vpop.f32.mrf.mxu0
        %v1648 = vadd.f32 %v1459, %v1647
        %v1649 = vpop.f32.mrf.mxu0
        %1650 = vmatprep.mubr.bf16.mxu0 0
        %1651 = vmatmul.mubr.bf16.gmra.mxu0 %v1552
        %v1652 = vpop.f32.mrf.mxu0
        %v1653 = vadd.f32 %v1459, %v1652
        %v1654 = vpop.f32.mrf.mxu0
        %v1655 = vpop.f32.mrf.mxu0
        %v1656 = vadd.f32 %v1459, %v1655
        %v1657 = vpop.f32.mrf.mxu0
        %1658 = vmatprep.mubr.bf16.mxu0 0
        %1659 = vmatmul.mubr.bf16.gmra.mxu0 %v1555
        %v1660 = vpop.f32.mrf.mxu0
        %v1661 = vadd.f32 %v1459, %v1660
        %v1662 = vpop.f32.mrf.mxu0
        %v1663 = vpop.f32.mrf.mxu0
        %v1664 = vadd.f32 %v1459, %v1663
        %v1665 = vpop.f32.mrf.mxu0
        %1666 = vmatprep.mubr.bf16.mxu0 0
        %1667 = vmatmul.mubr.bf16.gmra.mxu0 %v1558
        %v1668 = vpop.f32.mrf.mxu0
        %v1669 = vadd.f32 %v1459, %v1668
        %v1670 = vpop.f32.mrf.mxu0
        %v1671 = vpop.f32.mrf.mxu0
        %v1672 = vadd.f32 %v1459, %v1671
        %v1673 = vpop.f32.mrf.mxu0
        %1674 = vmatprep.mubr.bf16.mxu0 0
        %1675 = vmatmul.mubr.bf16.gmra.mxu0 %v1561
        %v1676 = vpop.f32.mrf.mxu0
        %v1677 = vadd.f32 %v1459, %v1676
        %v1678 = vpop.f32.mrf.mxu0
        %v1679 = vpop.f32.mrf.mxu0
        %v1680 = vadd.f32 %v1459, %v1679
        %v1681 = vpop.f32.mrf.mxu0
        %1682 = vmatprep.mubr.bf16.mxu0 0
        %1683 = vmatmul.mubr.bf16.gmra.mxu0 %v1564
        %v1684 = vpop.f32.mrf.mxu0
        %v1685 = vadd.f32 %v1459, %v1684
        %v1686 = vpop.f32.mrf.mxu0
        %v1687 = vpop.f32.mrf.mxu0
        %v1688 = vadd.f32 %v1459, %v1687
        %v1689 = vpop.f32.mrf.mxu0
        %1690 = vmatprep.mubr.bf16.mxu0 0
        %1691 = vmatmul.mubr.bf16.gmra.mxu0 %v1567
        %v1692 = vpop.f32.mrf.mxu0
        %v1693 = vadd.f32 %v1459, %v1692
        %v1694 = vpop.f32.mrf.mxu0
        %v1695 = vpop.f32.mrf.mxu0
        %v1696 = vadd.f32 %v1459, %v1695
        %v1697 = vpop.f32.mrf.mxu0
        %1698 = vmatprep.mubr.bf16.mxu0 0
        %1699 = vmatmul.mubr.bf16.gmra.mxu0 %v1570
        %v1700 = vpop.f32.mrf.mxu0
        %v1701 = vadd.f32 %v1459, %v1700
        %v1702 = vpop.f32.mrf.mxu0
        %v1703 = vpop.f32.mrf.mxu0
        %v1704 = vadd.f32 %v1459, %v1703
        %v1705 = vpop.f32.mrf.mxu0
        %1706 = vmatprep.mubr.bf16.mxu0 0
        %1707 = vmatmul.mubr.bf16.gmra.mxu0 %v1573
        %v1708 = vpop.f32.mrf.mxu0
        %v1709 = vadd.f32 %v1459, %v1708
        %v1710 = vpop.f32.mrf.mxu0
        %v1711 = vpop.f32.mrf.mxu0
        %v1712 = vadd.f32 %v1459, %v1711
        %v1713 = vpop.f32.mrf.mxu0
        %1714 = vmatprep.mubr.bf16.mxu0 0
        %1715 = vmatmul.mubr.bf16.gmra.mxu0 %v1576
        %v1716 = vpop.f32.mrf.mxu0
        %v1717 = vadd.f32 %v1459, %v1716
        %v1718 = vpop.f32.mrf.mxu0
        %v1719 = vpop.f32.mrf.mxu0
        %v1720 = vadd.f32 %v1459, %v1719
        %v1721 = vpop.f32.mrf.mxu0
        %1722 = vmatprep.mubr.bf16.mxu0 0
        %1723 = vmatmul.mubr.bf16.gmra.mxu0 %v1579
        %v1724 = vpop.f32.mrf.mxu0
        %v1725 = vadd.f32 %v1459, %v1724
        %v1726 = vpop.f32.mrf.mxu0
        %v1727 = vpop.f32.mrf.mxu0
        %v1728 = vadd.f32 %v1459, %v1727
        %v1729 = vpop.f32.mrf.mxu0
        %1730 = vmatprep.mubr.bf16.mxu0 0
        %1731 = vmatmul.mubr.bf16.gmra.mxu0 %v1582
        %v1732 = vpop.f32.mrf.mxu0
        %v1733 = vadd.f32 %v1459, %v1732
        %v1734 = vpop.f32.mrf.mxu0
        %v1735 = vpop.f32.mrf.mxu0
        %v1736 = vadd.f32 %v1459, %v1735
        %v1737 = vpop.f32.mrf.mxu0
        %1738 = vmatprep.mubr.bf16.mxu0 0
        %1739 = vmatmul.mubr.bf16.gmra.mxu0 %v1585
        %v1740 = vpop.f32.mrf.mxu0
        %v1741 = vadd.f32 %v1459, %v1740
        %v1742 = vpop.f32.mrf.mxu0
        %v1743 = vpop.f32.mrf.mxu0
        %v1744 = vadd.f32 %v1459, %v1743
        %v1745 = vpop.f32.mrf.mxu0
        %1746 = vmatprep.mubr.bf16.mxu0 0
        %1747 = vmatmul.mubr.bf16.gmra.mxu0 %v1588
        %v1748 = vpop.f32.mrf.mxu0
        %v1749 = vadd.f32 %v1459, %v1748
        %v1750 = vpop.f32.mrf.mxu0
        %v1751 = vpop.f32.mrf.mxu0
        %v1752 = vadd.f32 %v1459, %v1751
        %v1753 = vpop.f32.mrf.mxu0
        %1754 = vdwg.mxu0
        %v1755 = vmax.f32 %v1629, 0.0
        %v1756 = vmax.f32 %v1632, 0.0
        %v1757 = vmax.f32 %v1637, 0.0
        %v1758 = vmax.f32 %v1640, 0.0
        %v1759 = vmax.f32 %v1645, 0.0
        %v1760 = vmax.f32 %v1648, 0.0
        %v1761 = vmax.f32 %v1653, 0.0
        %v1762 = vmax.f32 %v1656, 0.0
        %v1763 = vmax.f32 %v1661, 0.0
        %v1764 = vmax.f32 %v1664, 0.0
        %v1765 = vmax.f32 %v1669, 0.0
        %v1766 = vmax.f32 %v1672, 0.0
        %v1767 = vmax.f32 %v1677, 0.0
        %v1768 = vmax.f32 %v1680, 0.0
        %v1769 = vmax.f32 %v1685, 0.0
        %v1770 = vmax.f32 %v1688, 0.0
        %v1771 = vmax.f32 %v1693, 0.0
        %v1772 = vmax.f32 %v1696, 0.0
        %v1773 = vmax.f32 %v1701, 0.0
        %v1774 = vmax.f32 %v1704, 0.0
        %v1775 = vmax.f32 %v1709, 0.0
        %v1776 = vmax.f32 %v1712, 0.0
        %v1777 = vmax.f32 %v1717, 0.0
        %v1778 = vmax.f32 %v1720, 0.0
        %v1779 = vmax.f32 %v1725, 0.0
        %v1780 = vmax.f32 %v1728, 0.0
        %v1781 = vmax.f32 %v1733, 0.0
        %v1782 = vmax.f32 %v1736, 0.0
        %v1783 = vmax.f32 %v1741, 0.0
        %v1784 = vmax.f32 %v1744, 0.0
        %v1785 = vmax.f32 %v1749, 0.0
        %v1786 = vmax.f32 %v1752, 0.0
        %v1787 = vld [vmem:[%s1387] sm:$0xf]
        %v1788 = vld [vmem:[%s1387 + $0x4] sm:$0xf]
        %v1789 = vld [vmem:[%s1387 + $0x8] sm:$0xf]
        %v1790 = vld [vmem:[%s1387 + $0xc] sm:$0xf]
        %v1791 = vld [vmem:[%s1387 + $0x10] sm:$0xf]
        %v1792 = vld [vmem:[%s1387 + $0x14] sm:$0xf]
        %v1793 = vld [vmem:[%s1387 + $0x18] sm:$0xf]
        %v1794 = vld [vmem:[%s1387 + $0x1c] sm:$0xf]
        %v1795 = vld [vmem:[%s1387 + $0x20] sm:$0xf]
        %v1796 = vld [vmem:[%s1387 + $0x24] sm:$0xf]
        %v1797 = vld [vmem:[%s1387 + $0x28] sm:$0xf]
        %v1798 = vld [vmem:[%s1387 + $0x2c] sm:$0xf]
        %v1799 = vld [vmem:[%s1387 + $0x30] sm:$0xf]
        %v1800 = vld [vmem:[%s1387 + $0x34] sm:$0xf]
        %v1801 = vld [vmem:[%s1387 + $0x38] sm:$0xf]
        %v1802 = vld [vmem:[%s1387 + $0x3c] sm:$0xf]
        %v1803 = vld [vmem:[%s1387 + $0x40] sm:$0xf]
        %v1804 = vld [vmem:[%s1387 + $0x44] sm:$0xf]
        %v1805 = vld [vmem:[%s1387 + $0x48] sm:$0xf]
        %v1806 = vld [vmem:[%s1387 + $0x4c] sm:$0xf]
        %v1807 = vld [vmem:[%s1387 + $0x50] sm:$0xf]
        %v1808 = vld [vmem:[%s1387 + $0x54] sm:$0xf]
        %v1809 = vld [vmem:[%s1387 + $0x58] sm:$0xf]
        %v1810 = vld [vmem:[%s1387 + $0x5c] sm:$0xf]
        %v1811 = vld [vmem:[%s1387 + $0x60] sm:$0xf]
        %v1812 = vld [vmem:[%s1387 + $0x64] sm:$0xf]
        %v1813 = vld [vmem:[%s1387 + $0x68] sm:$0xf]
        %v1814 = vld [vmem:[%s1387 + $0x6c] sm:$0xf]
        %v1815 = vld [vmem:[%s1387 + $0x70] sm:$0xf]
        %v1816 = vld [vmem:[%s1387 + $0x74] sm:$0xf]
        %v1817 = vld [vmem:[%s1387 + $0x78] sm:$0xf]
        %v1818 = vld [vmem:[%s1387 + $0x7c] sm:$0xf]
        %s1819 = scalar_lea.vmem %s1387, 128 [#allocation2]
        %v1820 = vld [vmem:[%s1819] sm:$0xf]
        %v1821 = vld [vmem:[%s1819 + $0x4] sm:$0xf]
        %v1822 = vld [vmem:[%s1819 + $0x8] sm:$0xf]
        %v1823 = vld [vmem:[%s1819 + $0xc] sm:$0xf]
        %v1824 = vld [vmem:[%s1819 + $0x10] sm:$0xf]
        %v1825 = vld [vmem:[%s1819 + $0x14] sm:$0xf]
        %v1826 = vld [vmem:[%s1819 + $0x18] sm:$0xf]
        %v1827 = vld [vmem:[%s1819 + $0x1c] sm:$0xf]
        %v1828 = vld [vmem:[%s1819 + $0x20] sm:$0xf]
        %v1829 = vld [vmem:[%s1819 + $0x24] sm:$0xf]
        %v1830 = vld [vmem:[%s1819 + $0x28] sm:$0xf]
        %v1831 = vld [vmem:[%s1819 + $0x2c] sm:$0xf]
        %v1832 = vld [vmem:[%s1819 + $0x30] sm:$0xf]
        %v1833 = vld [vmem:[%s1819 + $0x34] sm:$0xf]
        %v1834 = vld [vmem:[%s1819 + $0x38] sm:$0xf]
        %v1835 = vld [vmem:[%s1819 + $0x3c] sm:$0xf]
        %v1836 = vld [vmem:[%s1819 + $0x40] sm:$0xf]
        %v1837 = vld [vmem:[%s1819 + $0x44] sm:$0xf]
        %v1838 = vld [vmem:[%s1819 + $0x48] sm:$0xf]
        %v1839 = vld [vmem:[%s1819 + $0x4c] sm:$0xf]
        %v1840 = vld [vmem:[%s1819 + $0x50] sm:$0xf]
        %v1841 = vld [vmem:[%s1819 + $0x54] sm:$0xf]
        %v1842 = vld [vmem:[%s1819 + $0x58] sm:$0xf]
        %v1843 = vld [vmem:[%s1819 + $0x5c] sm:$0xf]
        %v1844 = vld [vmem:[%s1819 + $0x60] sm:$0xf]
        %v1845 = vld [vmem:[%s1819 + $0x64] sm:$0xf]
        %v1846 = vld [vmem:[%s1819 + $0x68] sm:$0xf]
        %v1847 = vld [vmem:[%s1819 + $0x6c] sm:$0xf]
        %v1848 = vld [vmem:[%s1819 + $0x70] sm:$0xf]
        %v1849 = vld [vmem:[%s1819 + $0x74] sm:$0xf]
        %v1850 = vld [vmem:[%s1819 + $0x78] sm:$0xf]
        %v1851 = vld [vmem:[%s1819 + $0x7c] sm:$0xf]
        %v1852 = vmax.bf16 %v1787, %v1820
        %v1853 = vmax.bf16 %v1788, %v1821
        %v1854 = vmax.bf16 %v1789, %v1822
        %v1855 = vmax.bf16 %v1790, %v1823
        %v1856 = vmax.bf16 %v1791, %v1824
        %v1857 = vmax.bf16 %v1792, %v1825
        %v1858 = vmax.bf16 %v1793, %v1826
        %v1859 = vmax.bf16 %v1794, %v1827
        %v1860 = vmax.bf16 %v1795, %v1828
        %v1861 = vmax.bf16 %v1796, %v1829
        %v1862 = vmax.bf16 %v1797, %v1830
        %v1863 = vmax.bf16 %v1798, %v1831
        %v1864 = vmax.bf16 %v1799, %v1832
        %v1865 = vmax.bf16 %v1800, %v1833
        %v1866 = vmax.bf16 %v1801, %v1834
        %v1867 = vmax.bf16 %v1802, %v1835
        %v1868 = vmax.bf16 %v1803, %v1836
        %v1869 = vmax.bf16 %v1804, %v1837
        %v1870 = vmax.bf16 %v1805, %v1838
        %v1871 = vmax.bf16 %v1806, %v1839
        %v1872 = vmax.bf16 %v1807, %v1840
        %v1873 = vmax.bf16 %v1808, %v1841
        %v1874 = vmax.bf16 %v1809, %v1842
        %v1875 = vmax.bf16 %v1810, %v1843
        %v1876 = vmax.bf16 %v1811, %v1844
        %v1877 = vmax.bf16 %v1812, %v1845
        %v1878 = vmax.bf16 %v1813, %v1846
        %v1879 = vmax.bf16 %v1814, %v1847
        %v1880 = vmax.bf16 %v1815, %v1848
        %v1881 = vmax.bf16 %v1816, %v1849
        %v1882 = vmax.bf16 %v1817, %v1850
        %v1883 = vmax.bf16 %v1818, %v1851
        %s1884 = scalar_lea.vmem %s1387, 256 [#allocation2]
        %v1885 = vld [vmem:[%s1884] sm:$0xf]
        %v1886 = vld [vmem:[%s1884 + $0x4] sm:$0xf]
        %v1887 = vld [vmem:[%s1884 + $0x8] sm:$0xf]
        %v1888 = vld [vmem:[%s1884 + $0xc] sm:$0xf]
        %v1889 = vld [vmem:[%s1884 + $0x10] sm:$0xf]
        %v1890 = vld [vmem:[%s1884 + $0x14] sm:$0xf]
        %v1891 = vld [vmem:[%s1884 + $0x18] sm:$0xf]
        %v1892 = vld [vmem:[%s1884 + $0x1c] sm:$0xf]
        %v1893 = vld [vmem:[%s1884 + $0x20] sm:$0xf]
        %v1894 = vld [vmem:[%s1884 + $0x24] sm:$0xf]
        %v1895 = vld [vmem:[%s1884 + $0x28] sm:$0xf]
        %v1896 = vld [vmem:[%s1884 + $0x2c] sm:$0xf]
        %v1897 = vld [vmem:[%s1884 + $0x30] sm:$0xf]
        %v1898 = vld [vmem:[%s1884 + $0x34] sm:$0xf]
        %v1899 = vld [vmem:[%s1884 + $0x38] sm:$0xf]
        %v1900 = vld [vmem:[%s1884 + $0x3c] sm:$0xf]
        %v1901 = vld [vmem:[%s1884 + $0x40] sm:$0xf]
        %v1902 = vld [vmem:[%s1884 + $0x44] sm:$0xf]
        %v1903 = vld [vmem:[%s1884 + $0x48] sm:$0xf]
        %v1904 = vld [vmem:[%s1884 + $0x4c] sm:$0xf]
        %v1905 = vld [vmem:[%s1884 + $0x50] sm:$0xf]
        %v1906 = vld [vmem:[%s1884 + $0x54] sm:$0xf]
        %v1907 = vld [vmem:[%s1884 + $0x58] sm:$0xf]
        %v1908 = vld [vmem:[%s1884 + $0x5c] sm:$0xf]
        %v1909 = vld [vmem:[%s1884 + $0x60] sm:$0xf]
        %v1910 = vld [vmem:[%s1884 + $0x64] sm:$0xf]
        %v1911 = vld [vmem:[%s1884 + $0x68] sm:$0xf]
        %v1912 = vld [vmem:[%s1884 + $0x6c] sm:$0xf]
        %v1913 = vld [vmem:[%s1884 + $0x70] sm:$0xf]
        %v1914 = vld [vmem:[%s1884 + $0x74] sm:$0xf]
        %v1915 = vld [vmem:[%s1884 + $0x78] sm:$0xf]
        %v1916 = vld [vmem:[%s1884 + $0x7c] sm:$0xf]
        %v1917 = vmax.bf16 %v1852, %v1885
        %v1918 = vmax.bf16 %v1853, %v1886
        %v1919 = vmax.bf16 %v1854, %v1887
        %v1920 = vmax.bf16 %v1855, %v1888
        %v1921 = vmax.bf16 %v1856, %v1889
        %v1922 = vmax.bf16 %v1857, %v1890
        %v1923 = vmax.bf16 %v1858, %v1891
        %v1924 = vmax.bf16 %v1859, %v1892
        %v1925 = vmax.bf16 %v1860, %v1893
        %v1926 = vmax.bf16 %v1861, %v1894
        %v1927 = vmax.bf16 %v1862, %v1895
        %v1928 = vmax.bf16 %v1863, %v1896
        %v1929 = vmax.bf16 %v1864, %v1897
        %v1930 = vmax.bf16 %v1865, %v1898
        %v1931 = vmax.bf16 %v1866, %v1899
        %v1932 = vmax.bf16 %v1867, %v1900
        %v1933 = vmax.bf16 %v1868, %v1901
        %v1934 = vmax.bf16 %v1869, %v1902
        %v1935 = vmax.bf16 %v1870, %v1903
        %v1936 = vmax.bf16 %v1871, %v1904
        %v1937 = vmax.bf16 %v1872, %v1905
        %v1938 = vmax.bf16 %v1873, %v1906
        %v1939 = vmax.bf16 %v1874, %v1907
        %v1940 = vmax.bf16 %v1875, %v1908
        %v1941 = vmax.bf16 %v1876, %v1909
        %v1942 = vmax.bf16 %v1877, %v1910
        %v1943 = vmax.bf16 %v1878, %v1911
        %v1944 = vmax.bf16 %v1879, %v1912
        %v1945 = vmax.bf16 %v1880, %v1913
        %v1946 = vmax.bf16 %v1881, %v1914
        %v1947 = vmax.bf16 %v1882, %v1915
        %v1948 = vmax.bf16 %v1883, %v1916
        %s1949 = scalar_lea.vmem %s1387, 384 [#allocation2]
        %v1950 = vld [vmem:[%s1949] sm:$0xf]
        %v1951 = vld [vmem:[%s1949 + $0x4] sm:$0xf]
        %v1952 = vld [vmem:[%s1949 + $0x8] sm:$0xf]
        %v1953 = vld [vmem:[%s1949 + $0xc] sm:$0xf]
        %v1954 = vld [vmem:[%s1949 + $0x10] sm:$0xf]
        %v1955 = vld [vmem:[%s1949 + $0x14] sm:$0xf]
        %v1956 = vld [vmem:[%s1949 + $0x18] sm:$0xf]
        %v1957 = vld [vmem:[%s1949 + $0x1c] sm:$0xf]
        %v1958 = vld [vmem:[%s1949 + $0x20] sm:$0xf]
        %v1959 = vld [vmem:[%s1949 + $0x24] sm:$0xf]
        %v1960 = vld [vmem:[%s1949 + $0x28] sm:$0xf]
        %v1961 = vld [vmem:[%s1949 + $0x2c] sm:$0xf]
        %v1962 = vld [vmem:[%s1949 + $0x30] sm:$0xf]
        %v1963 = vld [vmem:[%s1949 + $0x34] sm:$0xf]
        %v1964 = vld [vmem:[%s1949 + $0x38] sm:$0xf]
        %v1965 = vld [vmem:[%s1949 + $0x3c] sm:$0xf]
        %v1966 = vld [vmem:[%s1949 + $0x40] sm:$0xf]
        %v1967 = vld [vmem:[%s1949 + $0x44] sm:$0xf]
        %v1968 = vld [vmem:[%s1949 + $0x48] sm:$0xf]
        %v1969 = vld [vmem:[%s1949 + $0x4c] sm:$0xf]
        %v1970 = vld [vmem:[%s1949 + $0x50] sm:$0xf]
        %v1971 = vld [vmem:[%s1949 + $0x54] sm:$0xf]
        %v1972 = vld [vmem:[%s1949 + $0x58] sm:$0xf]
        %v1973 = vld [vmem:[%s1949 + $0x5c] sm:$0xf]
        %v1974 = vld [vmem:[%s1949 + $0x60] sm:$0xf]
        %v1975 = vld [vmem:[%s1949 + $0x64] sm:$0xf]
        %v1976 = vld [vmem:[%s1949 + $0x68] sm:$0xf]
        %v1977 = vld [vmem:[%s1949 + $0x6c] sm:$0xf]
        %v1978 = vld [vmem:[%s1949 + $0x70] sm:$0xf]
        %v1979 = vld [vmem:[%s1949 + $0x74] sm:$0xf]
        %v1980 = vld [vmem:[%s1949 + $0x78] sm:$0xf]
        %v1981 = vld [vmem:[%s1949 + $0x7c] sm:$0xf]
        %v1982 = vmax.bf16 %v1917, %v1950
        %v1983 = vmax.bf16 %v1918, %v1951
        %v1984 = vmax.bf16 %v1919, %v1952
        %v1985 = vmax.bf16 %v1920, %v1953
        %v1986 = vmax.bf16 %v1921, %v1954
        %v1987 = vmax.bf16 %v1922, %v1955
        %v1988 = vmax.bf16 %v1923, %v1956
        %v1989 = vmax.bf16 %v1924, %v1957
        %v1990 = vmax.bf16 %v1925, %v1958
        %v1991 = vmax.bf16 %v1926, %v1959
        %v1992 = vmax.bf16 %v1927, %v1960
        %v1993 = vmax.bf16 %v1928, %v1961
        %v1994 = vmax.bf16 %v1929, %v1962
        %v1995 = vmax.bf16 %v1930, %v1963
        %v1996 = vmax.bf16 %v1931, %v1964
        %v1997 = vmax.bf16 %v1932, %v1965
        %v1998 = vmax.bf16 %v1933, %v1966
        %v1999 = vmax.bf16 %v1934, %v1967
        %v2000 = vmax.bf16 %v1935, %v1968
        %v2001 = vmax.bf16 %v1936, %v1969
        %v2002 = vmax.bf16 %v1937, %v1970
        %v2003 = vmax.bf16 %v1938, %v1971
        %v2004 = vmax.bf16 %v1939, %v1972
        %v2005 = vmax.bf16 %v1940, %v1973
        %v2006 = vmax.bf16 %v1941, %v1974
        %v2007 = vmax.bf16 %v1942, %v1975
        %v2008 = vmax.bf16 %v1943, %v1976
        %v2009 = vmax.bf16 %v1944, %v1977
        %v2010 = vmax.bf16 %v1945, %v1978
        %v2011 = vmax.bf16 %v1946, %v1979
        %v2012 = vmax.bf16 %v1947, %v1980
        %v2013 = vmax.bf16 %v1948, %v1981
        %v2014 = vmax.bf16 %v1982, %v1421
        %v2015 = vmax.bf16 %v1983, %v1422
        %v2016 = vmax.bf16 %v1984, %v1423
        %v2017 = vmax.bf16 %v1985, %v1424
        %v2018 = vmax.bf16 %v1986, %v1425
        %v2019 = vmax.bf16 %v1987, %v1426
        %v2020 = vmax.bf16 %v1988, %v1427
        %v2021 = vmax.bf16 %v1989, %v1428
        %v2022 = vmax.bf16 %v1990, %v1429
        %v2023 = vmax.bf16 %v1991, %v1430
        %v2024 = vmax.bf16 %v1992, %v1431
        %v2025 = vmax.bf16 %v1993, %v1432
        %v2026 = vmax.bf16 %v1994, %v1433
        %v2027 = vmax.bf16 %v1995, %v1434
        %v2028 = vmax.bf16 %v1996, %v1435
        %v2029 = vmax.bf16 %v1997, %v1436
        %v2030 = vmax.bf16 %v1998, %v1437
        %v2031 = vmax.bf16 %v1999, %v1438
        %v2032 = vmax.bf16 %v2000, %v1439
        %v2033 = vmax.bf16 %v2001, %v1440
        %v2034 = vmax.bf16 %v2002, %v1441
        %v2035 = vmax.bf16 %v2003, %v1442
        %v2036 = vmax.bf16 %v2004, %v1443
        %v2037 = vmax.bf16 %v2005, %v1444
        %v2038 = vmax.bf16 %v2006, %v1445
        %v2039 = vmax.bf16 %v2007, %v1446
        %v2040 = vmax.bf16 %v2008, %v1447
        %v2041 = vmax.bf16 %v2009, %v1448
        %v2042 = vmax.bf16 %v2010, %v1449
        %v2043 = vmax.bf16 %v2011, %v1450
        %v2044 = vmax.bf16 %v2012, %v1451
        %v2045 = vmax.bf16 %v2013, %v1452
        %s2046 = scalar_lea.vmem %s1387, 640 [#allocation2]
        %v2047 = vld [vmem:[%s2046] sm:$0xf]
        %v2048 = vld [vmem:[%s2046 + $0x4] sm:$0xf]
        %v2049 = vld [vmem:[%s2046 + $0x8] sm:$0xf]
        %v2050 = vld [vmem:[%s2046 + $0xc] sm:$0xf]
        %v2051 = vld [vmem:[%s2046 + $0x10] sm:$0xf]
        %v2052 = vld [vmem:[%s2046 + $0x14] sm:$0xf]
        %v2053 = vld [vmem:[%s2046 + $0x18] sm:$0xf]
        %v2054 = vld [vmem:[%s2046 + $0x1c] sm:$0xf]
        %v2055 = vld [vmem:[%s2046 + $0x20] sm:$0xf]
        %v2056 = vld [vmem:[%s2046 + $0x24] sm:$0xf]
        %v2057 = vld [vmem:[%s2046 + $0x28] sm:$0xf]
        %v2058 = vld [vmem:[%s2046 + $0x2c] sm:$0xf]
        %v2059 = vld [vmem:[%s2046 + $0x30] sm:$0xf]
        %v2060 = vld [vmem:[%s2046 + $0x34] sm:$0xf]
        %v2061 = vld [vmem:[%s2046 + $0x38] sm:$0xf]
        %v2062 = vld [vmem:[%s2046 + $0x3c] sm:$0xf]
        %v2063 = vld [vmem:[%s2046 + $0x40] sm:$0xf]
        %v2064 = vld [vmem:[%s2046 + $0x44] sm:$0xf]
        %v2065 = vld [vmem:[%s2046 + $0x48] sm:$0xf]
        %v2066 = vld [vmem:[%s2046 + $0x4c] sm:$0xf]
        %v2067 = vld [vmem:[%s2046 + $0x50] sm:$0xf]
        %v2068 = vld [vmem:[%s2046 + $0x54] sm:$0xf]
        %v2069 = vld [vmem:[%s2046 + $0x58] sm:$0xf]
        %v2070 = vld [vmem:[%s2046 + $0x5c] sm:$0xf]
        %v2071 = vld [vmem:[%s2046 + $0x60] sm:$0xf]
        %v2072 = vld [vmem:[%s2046 + $0x64] sm:$0xf]
        %v2073 = vld [vmem:[%s2046 + $0x68] sm:$0xf]
        %v2074 = vld [vmem:[%s2046 + $0x6c] sm:$0xf]
        %v2075 = vld [vmem:[%s2046 + $0x70] sm:$0xf]
        %v2076 = vld [vmem:[%s2046 + $0x74] sm:$0xf]
        %v2077 = vld [vmem:[%s2046 + $0x78] sm:$0xf]
        %v2078 = vld [vmem:[%s2046 + $0x7c] sm:$0xf]
        %v2079 = vmax.bf16 %v2014, %v2047
        %v2080 = vmax.bf16 %v2015, %v2048
        %v2081 = vmax.bf16 %v2016, %v2049
        %v2082 = vmax.bf16 %v2017, %v2050
        %v2083 = vmax.bf16 %v2018, %v2051
        %v2084 = vmax.bf16 %v2019, %v2052
        %v2085 = vmax.bf16 %v2020, %v2053
        %v2086 = vmax.bf16 %v2021, %v2054
        %v2087 = vmax.bf16 %v2022, %v2055
        %v2088 = vmax.bf16 %v2023, %v2056
        %v2089 = vmax.bf16 %v2024, %v2057
        %v2090 = vmax.bf16 %v2025, %v2058
        %v2091 = vmax.bf16 %v2026, %v2059
        %v2092 = vmax.bf16 %v2027, %v2060
        %v2093 = vmax.bf16 %v2028, %v2061
        %v2094 = vmax.bf16 %v2029, %v2062
        %v2095 = vmax.bf16 %v2030, %v2063
        %v2096 = vmax.bf16 %v2031, %v2064
        %v2097 = vmax.bf16 %v2032, %v2065
        %v2098 = vmax.bf16 %v2033, %v2066
        %v2099 = vmax.bf16 %v2034, %v2067
        %v2100 = vmax.bf16 %v2035, %v2068
        %v2101 = vmax.bf16 %v2036, %v2069
        %v2102 = vmax.bf16 %v2037, %v2070
        %v2103 = vmax.bf16 %v2038, %v2071
        %v2104 = vmax.bf16 %v2039, %v2072
        %v2105 = vmax.bf16 %v2040, %v2073
        %v2106 = vmax.bf16 %v2041, %v2074
        %v2107 = vmax.bf16 %v2042, %v2075
        %v2108 = vmax.bf16 %v2043, %v2076
        %v2109 = vmax.bf16 %v2044, %v2077
        %v2110 = vmax.bf16 %v2045, %v2078
        %s2111 = scalar_lea.vmem %s1387, 768 [#allocation2]
        %v2112 = vld [vmem:[%s2111] sm:$0xf]
        %v2113 = vld [vmem:[%s2111 + $0x4] sm:$0xf]
        %v2114 = vld [vmem:[%s2111 + $0x8] sm:$0xf]
        %v2115 = vld [vmem:[%s2111 + $0xc] sm:$0xf]
        %v2116 = vld [vmem:[%s2111 + $0x10] sm:$0xf]
        %v2117 = vld [vmem:[%s2111 + $0x14] sm:$0xf]
        %v2118 = vld [vmem:[%s2111 + $0x18] sm:$0xf]
        %v2119 = vld [vmem:[%s2111 + $0x1c] sm:$0xf]
        %v2120 = vld [vmem:[%s2111 + $0x20] sm:$0xf]
        %v2121 = vld [vmem:[%s2111 + $0x24] sm:$0xf]
        %v2122 = vld [vmem:[%s2111 + $0x28] sm:$0xf]
        %v2123 = vld [vmem:[%s2111 + $0x2c] sm:$0xf]
        %v2124 = vld [vmem:[%s2111 + $0x30] sm:$0xf]
        %v2125 = vld [vmem:[%s2111 + $0x34] sm:$0xf]
        %v2126 = vld [vmem:[%s2111 + $0x38] sm:$0xf]
        %v2127 = vld [vmem:[%s2111 + $0x3c] sm:$0xf]
        %v2128 = vld [vmem:[%s2111 + $0x40] sm:$0xf]
        %v2129 = vld [vmem:[%s2111 + $0x44] sm:$0xf]
        %v2130 = vld [vmem:[%s2111 + $0x48] sm:$0xf]
        %v2131 = vld [vmem:[%s2111 + $0x4c] sm:$0xf]
        %v2132 = vld [vmem:[%s2111 + $0x50] sm:$0xf]
        %v2133 = vld [vmem:[%s2111 + $0x54] sm:$0xf]
        %v2134 = vld [vmem:[%s2111 + $0x58] sm:$0xf]
        %v2135 = vld [vmem:[%s2111 + $0x5c] sm:$0xf]
        %v2136 = vld [vmem:[%s2111 + $0x60] sm:$0xf]
        %v2137 = vld [vmem:[%s2111 + $0x64] sm:$0xf]
        %v2138 = vld [vmem:[%s2111 + $0x68] sm:$0xf]
        %v2139 = vld [vmem:[%s2111 + $0x6c] sm:$0xf]
        %v2140 = vld [vmem:[%s2111 + $0x70] sm:$0xf]
        %v2141 = vld [vmem:[%s2111 + $0x74] sm:$0xf]
        %v2142 = vld [vmem:[%s2111 + $0x78] sm:$0xf]
        %v2143 = vld [vmem:[%s2111 + $0x7c] sm:$0xf]
        %v2144 = vmax.bf16 %v2079, %v2112
        %v2145 = vmax.bf16 %v2080, %v2113
        %v2146 = vmax.bf16 %v2081, %v2114
        %v2147 = vmax.bf16 %v2082, %v2115
        %v2148 = vmax.bf16 %v2083, %v2116
        %v2149 = vmax.bf16 %v2084, %v2117
        %v2150 = vmax.bf16 %v2085, %v2118
        %v2151 = vmax.bf16 %v2086, %v2119
        %v2152 = vmax.bf16 %v2087, %v2120
        %v2153 = vmax.bf16 %v2088, %v2121
        %v2154 = vmax.bf16 %v2089, %v2122
        %v2155 = vmax.bf16 %v2090, %v2123
        %v2156 = vmax.bf16 %v2091, %v2124
        %v2157 = vmax.bf16 %v2092, %v2125
        %v2158 = vmax.bf16 %v2093, %v2126
        %v2159 = vmax.bf16 %v2094, %v2127
        %v2160 = vmax.bf16 %v2095, %v2128
        %v2161 = vmax.bf16 %v2096, %v2129
        %v2162 = vmax.bf16 %v2097, %v2130
        %v2163 = vmax.bf16 %v2098, %v2131
        %v2164 = vmax.bf16 %v2099, %v2132
        %v2165 = vmax.bf16 %v2100, %v2133
        %v2166 = vmax.bf16 %v2101, %v2134
        %v2167 = vmax.bf16 %v2102, %v2135
        %v2168 = vmax.bf16 %v2103, %v2136
        %v2169 = vmax.bf16 %v2104, %v2137
        %v2170 = vmax.bf16 %v2105, %v2138
        %v2171 = vmax.bf16 %v2106, %v2139
        %v2172 = vmax.bf16 %v2107, %v2140
        %v2173 = vmax.bf16 %v2108, %v2141
        %v2174 = vmax.bf16 %v2109, %v2142
        %v2175 = vmax.bf16 %v2110, %v2143
        %s2176 = scalar_lea.vmem %s1387, 896 [#allocation2]
        %v2177 = vld [vmem:[%s2176] sm:$0xf]
        %v2178 = vld [vmem:[%s2176 + $0x4] sm:$0xf]
        %v2179 = vld [vmem:[%s2176 + $0x8] sm:$0xf]
        %v2180 = vld [vmem:[%s2176 + $0xc] sm:$0xf]
        %v2181 = vld [vmem:[%s2176 + $0x10] sm:$0xf]
        %v2182 = vld [vmem:[%s2176 + $0x14] sm:$0xf]
        %v2183 = vld [vmem:[%s2176 + $0x18] sm:$0xf]
        %v2184 = vld [vmem:[%s2176 + $0x1c] sm:$0xf]
        %v2185 = vld [vmem:[%s2176 + $0x20] sm:$0xf]
        %v2186 = vld [vmem:[%s2176 + $0x24] sm:$0xf]
        %v2187 = vld [vmem:[%s2176 + $0x28] sm:$0xf]
        %v2188 = vld [vmem:[%s2176 + $0x2c] sm:$0xf]
        %v2189 = vld [vmem:[%s2176 + $0x30] sm:$0xf]
        %v2190 = vld [vmem:[%s2176 + $0x34] sm:$0xf]
        %v2191 = vld [vmem:[%s2176 + $0x38] sm:$0xf]
        %v2192 = vld [vmem:[%s2176 + $0x3c] sm:$0xf]
        %v2193 = vld [vmem:[%s2176 + $0x40] sm:$0xf]
        %v2194 = vld [vmem:[%s2176 + $0x44] sm:$0xf]
        %v2195 = vld [vmem:[%s2176 + $0x48] sm:$0xf]
        %v2196 = vld [vmem:[%s2176 + $0x4c] sm:$0xf]
        %v2197 = vld [vmem:[%s2176 + $0x50] sm:$0xf]
        %v2198 = vld [vmem:[%s2176 + $0x54] sm:$0xf]
        %v2199 = vld [vmem:[%s2176 + $0x58] sm:$0xf]
        %v2200 = vld [vmem:[%s2176 + $0x5c] sm:$0xf]
        %v2201 = vld [vmem:[%s2176 + $0x60] sm:$0xf]
        %v2202 = vld [vmem:[%s2176 + $0x64] sm:$0xf]
        %v2203 = vld [vmem:[%s2176 + $0x68] sm:$0xf]
        %v2204 = vld [vmem:[%s2176 + $0x6c] sm:$0xf]
        %v2205 = vld [vmem:[%s2176 + $0x70] sm:$0xf]
        %v2206 = vld [vmem:[%s2176 + $0x74] sm:$0xf]
        %v2207 = vld [vmem:[%s2176 + $0x78] sm:$0xf]
        %v2208 = vld [vmem:[%s2176 + $0x7c] sm:$0xf]
        %v2209 = vmax.bf16 %v2144, %v2177
        %v2210 = vmax.bf16 %v2145, %v2178
        %v2211 = vmax.bf16 %v2146, %v2179
        %v2212 = vmax.bf16 %v2147, %v2180
        %v2213 = vmax.bf16 %v2148, %v2181
        %v2214 = vmax.bf16 %v2149, %v2182
        %v2215 = vmax.bf16 %v2150, %v2183
        %v2216 = vmax.bf16 %v2151, %v2184
        %v2217 = vmax.bf16 %v2152, %v2185
        %v2218 = vmax.bf16 %v2153, %v2186
        %v2219 = vmax.bf16 %v2154, %v2187
        %v2220 = vmax.bf16 %v2155, %v2188
        %v2221 = vmax.bf16 %v2156, %v2189
        %v2222 = vmax.bf16 %v2157, %v2190
        %v2223 = vmax.bf16 %v2158, %v2191
        %v2224 = vmax.bf16 %v2159, %v2192
        %v2225 = vmax.bf16 %v2160, %v2193
        %v2226 = vmax.bf16 %v2161, %v2194
        %v2227 = vmax.bf16 %v2162, %v2195
        %v2228 = vmax.bf16 %v2163, %v2196
        %v2229 = vmax.bf16 %v2164, %v2197
        %v2230 = vmax.bf16 %v2165, %v2198
        %v2231 = vmax.bf16 %v2166, %v2199
        %v2232 = vmax.bf16 %v2167, %v2200
        %v2233 = vmax.bf16 %v2168, %v2201
        %v2234 = vmax.bf16 %v2169, %v2202
        %v2235 = vmax.bf16 %v2170, %v2203
        %v2236 = vmax.bf16 %v2171, %v2204
        %v2237 = vmax.bf16 %v2172, %v2205
        %v2238 = vmax.bf16 %v2173, %v2206
        %v2239 = vmax.bf16 %v2174, %v2207
        %v2240 = vmax.bf16 %v2175, %v2208
        %s2241 = scalar_lea.vmem %s1387, 1024 [#allocation2]
        %v2242 = vld [vmem:[%s2241] sm:$0xf]
        %v2243 = vld [vmem:[%s2241 + $0x4] sm:$0xf]
        %v2244 = vld [vmem:[%s2241 + $0x8] sm:$0xf]
        %v2245 = vld [vmem:[%s2241 + $0xc] sm:$0xf]
        %v2246 = vld [vmem:[%s2241 + $0x10] sm:$0xf]
        %v2247 = vld [vmem:[%s2241 + $0x14] sm:$0xf]
        %v2248 = vld [vmem:[%s2241 + $0x18] sm:$0xf]
        %v2249 = vld [vmem:[%s2241 + $0x1c] sm:$0xf]
        %v2250 = vld [vmem:[%s2241 + $0x20] sm:$0xf]
        %v2251 = vld [vmem:[%s2241 + $0x24] sm:$0xf]
        %v2252 = vld [vmem:[%s2241 + $0x28] sm:$0xf]
        %v2253 = vld [vmem:[%s2241 + $0x2c] sm:$0xf]
        %v2254 = vld [vmem:[%s2241 + $0x30] sm:$0xf]
        %v2255 = vld [vmem:[%s2241 + $0x34] sm:$0xf]
        %v2256 = vld [vmem:[%s2241 + $0x38] sm:$0xf]
        %v2257 = vld [vmem:[%s2241 + $0x3c] sm:$0xf]
        %v2258 = vld [vmem:[%s2241 + $0x40] sm:$0xf]
        %v2259 = vld [vmem:[%s2241 + $0x44] sm:$0xf]
        %v2260 = vld [vmem:[%s2241 + $0x48] sm:$0xf]
        %v2261 = vld [vmem:[%s2241 + $0x4c] sm:$0xf]
        %v2262 = vld [vmem:[%s2241 + $0x50] sm:$0xf]
        %v2263 = vld [vmem:[%s2241 + $0x54] sm:$0xf]
        %v2264 = vld [vmem:[%s2241 + $0x58] sm:$0xf]
        %v2265 = vld [vmem:[%s2241 + $0x5c] sm:$0xf]
        %v2266 = vld [vmem:[%s2241 + $0x60] sm:$0xf]
        %v2267 = vld [vmem:[%s2241 + $0x64] sm:$0xf]
        %v2268 = vld [vmem:[%s2241 + $0x68] sm:$0xf]
        %v2269 = vld [vmem:[%s2241 + $0x6c] sm:$0xf]
        %v2270 = vld [vmem:[%s2241 + $0x70] sm:$0xf]
        %v2271 = vld [vmem:[%s2241 + $0x74] sm:$0xf]
        %v2272 = vld [vmem:[%s2241 + $0x78] sm:$0xf]
        %v2273 = vld [vmem:[%s2241 + $0x7c] sm:$0xf]
        %v2274 = vmax.bf16 %v2209, %v2242
        %v2275 = vmax.bf16 %v2210, %v2243
        %v2276 = vmax.bf16 %v2211, %v2244
        %v2277 = vmax.bf16 %v2212, %v2245
        %v2278 = vmax.bf16 %v2213, %v2246
        %v2279 = vmax.bf16 %v2214, %v2247
        %v2280 = vmax.bf16 %v2215, %v2248
        %v2281 = vmax.bf16 %v2216, %v2249
        %v2282 = vmax.bf16 %v2217, %v2250
        %v2283 = vmax.bf16 %v2218, %v2251
        %v2284 = vmax.bf16 %v2219, %v2252
        %v2285 = vmax.bf16 %v2220, %v2253
        %v2286 = vmax.bf16 %v2221, %v2254
        %v2287 = vmax.bf16 %v2222, %v2255
        %v2288 = vmax.bf16 %v2223, %v2256
        %v2289 = vmax.bf16 %v2224, %v2257
        %v2290 = vmax.bf16 %v2225, %v2258
        %v2291 = vmax.bf16 %v2226, %v2259
        %v2292 = vmax.bf16 %v2227, %v2260
        %v2293 = vmax.bf16 %v2228, %v2261
        %v2294 = vmax.bf16 %v2229, %v2262
        %v2295 = vmax.bf16 %v2230, %v2263
        %v2296 = vmax.bf16 %v2231, %v2264
        %v2297 = vmax.bf16 %v2232, %v2265
        %v2298 = vmax.bf16 %v2233, %v2266
        %v2299 = vmax.bf16 %v2234, %v2267
        %v2300 = vmax.bf16 %v2235, %v2268
        %v2301 = vmax.bf16 %v2236, %v2269
        %v2302 = vmax.bf16 %v2237, %v2270
        %v2303 = vmax.bf16 %v2238, %v2271
        %v2304 = vmax.bf16 %v2239, %v2272
        %v2305 = vmax.bf16 %v2240, %v2273
        %v2306 = vmax.bf16 %v2274, 0
        %v2307 = vmax.bf16 %v2275, 0
        %v2308 = vmax.bf16 %v2276, 0
        %v2309 = vmax.bf16 %v2277, 0
        %v2310 = vmax.bf16 %v2278, 0
        %v2311 = vmax.bf16 %v2279, 0
        %v2312 = vmax.bf16 %v2280, 0
        %v2313 = vmax.bf16 %v2281, 0
        %v2314 = vmax.bf16 %v2282, 0
        %v2315 = vmax.bf16 %v2283, 0
        %v2316 = vmax.bf16 %v2284, 0
        %v2317 = vmax.bf16 %v2285, 0
        %v2318 = vmax.bf16 %v2286, 0
        %v2319 = vmax.bf16 %v2287, 0
        %v2320 = vmax.bf16 %v2288, 0
        %v2321 = vmax.bf16 %v2289, 0
        %v2322 = vmax.bf16 %v2290, 0
        %v2323 = vmax.bf16 %v2291, 0
        %v2324 = vmax.bf16 %v2292, 0
        %v2325 = vmax.bf16 %v2293, 0
        %v2326 = vmax.bf16 %v2294, 0
        %v2327 = vmax.bf16 %v2295, 0
        %v2328 = vmax.bf16 %v2296, 0
        %v2329 = vmax.bf16 %v2297, 0
        %v2330 = vmax.bf16 %v2298, 0
        %v2331 = vmax.bf16 %v2299, 0
        %v2332 = vmax.bf16 %v2300, 0
        %v2333 = vmax.bf16 %v2301, 0
        %v2334 = vmax.bf16 %v2302, 0
        %v2335 = vmax.bf16 %v2303, 0
        %v2336 = vmax.bf16 %v2304, 0
        %v2337 = vmax.bf16 %v2305, 0
        %v2338 = vld [vmem:[%s3] sm:$0x3]
        %v2339 = vld [vmem:[%s4] sm:$0x1]
        %v2341 = vlaneseq
        %v2342 = vshrl.u32 %v2341, 7
        %v2343 = vsub.s32 0, %v2342
        %v2344 = vrot.slane %v2339, %v2343
        %v2378 = vunpack.c.l.b16 %v2306
        %v2379 = vunpack.c.l.b16 %v2307
        %v2380 = vunpack.c.l.b16 %v2308
        %v2381 = vunpack.c.l.b16 %v2309
        %v2382 = vunpack.c.l.b16 %v2310
        %v2383 = vunpack.c.l.b16 %v2311
        %v2384 = vunpack.c.l.b16 %v2312
        %v2385 = vunpack.c.l.b16 %v2313
        %v2386 = vunpack.c.l.b16 %v2314
        %v2387 = vunpack.c.l.b16 %v2315
        %v2388 = vunpack.c.l.b16 %v2316
        %v2389 = vunpack.c.l.b16 %v2317
        %v2390 = vunpack.c.l.b16 %v2318
        %v2391 = vunpack.c.l.b16 %v2319
        %v2392 = vunpack.c.l.b16 %v2320
        %v2393 = vunpack.c.l.b16 %v2321
        %v2394 = vunpack.c.l.b16 %v2322
        %v2395 = vunpack.c.l.b16 %v2323
        %v2396 = vunpack.c.l.b16 %v2324
        %v2397 = vunpack.c.l.b16 %v2325
        %v2398 = vunpack.c.l.b16 %v2326
        %v2399 = vunpack.c.l.b16 %v2327
        %v2400 = vunpack.c.l.b16 %v2328
        %v2401 = vunpack.c.l.b16 %v2329
        %v2402 = vunpack.c.l.b16 %v2330
        %v2403 = vunpack.c.l.b16 %v2331
        %v2404 = vunpack.c.l.b16 %v2332
        %v2405 = vunpack.c.l.b16 %v2333
        %v2406 = vunpack.c.l.b16 %v2334
        %v2407 = vunpack.c.l.b16 %v2335
        %v2408 = vunpack.c.l.b16 %v2336
        %v2409 = vunpack.c.l.b16 %v2337
        %v2410 = vpack.c.b16 %v2379, %v2378
        %v2411 = vpack.c.b16 %v2381, %v2380
        %v2412 = vpack.c.b16 %v2383, %v2382
        %v2413 = vpack.c.b16 %v2385, %v2384
        %v2414 = vpack.c.b16 %v2387, %v2386
        %v2415 = vpack.c.b16 %v2389, %v2388
        %v2416 = vpack.c.b16 %v2391, %v2390
        %v2417 = vpack.c.b16 %v2393, %v2392
        %v2418 = vpack.c.b16 %v2395, %v2394
        %v2419 = vpack.c.b16 %v2397, %v2396
        %v2420 = vpack.c.b16 %v2399, %v2398
        %v2421 = vpack.c.b16 %v2401, %v2400
        %v2422 = vpack.c.b16 %v2403, %v2402
        %v2423 = vpack.c.b16 %v2405, %v2404
        %v2424 = vpack.c.b16 %v2407, %v2406
        %v2425 = vpack.c.b16 %v2409, %v2408
        %v2427 = vsel %vm1541, %v2410, 0
        %v2430 = vsel %vm1541, %v2411, 0
        %v2433 = vsel %vm1541, %v2412, 0
        %v2436 = vsel %vm1541, %v2413, 0
        %v2439 = vsel %vm1541, %v2414, 0
        %v2442 = vsel %vm1541, %v2415, 0
        %v2445 = vsel %vm1541, %v2416, 0
        %v2448 = vsel %vm1541, %v2417, 0
        %v2451 = vsel %vm1541, %v2418, 0
        %v2454 = vsel %vm1541, %v2419, 0
        %v2457 = vsel %vm1541, %v2420, 0
        %v2460 = vsel %vm1541, %v2421, 0
        %v2463 = vsel %vm1541, %v2422, 0
        %v2466 = vsel %vm1541, %v2423, 0
        %v2469 = vsel %vm1541, %v2424, 0
        %v2472 = vsel %vm1541, %v2425, 0
        %v2475 = vsel %vm1590, %v2338, 0
        %2477 = vmatprep.subr.bf16.mxu0 0
        %2478 = vmatpush1.bf16.msra.mxu0 0
        %2479 = vmatprep.subr.bf16.mxu0 0
        %2480 = vmatpush1.bf16.msra.mxu0 0
        %2481 = vmatprep.subr.bf16.mxu0 0
        %2482 = vmatpush1.bf16.msra.mxu0 0
        %2483 = vmatprep.subr.bf16.mxu0 0
        %2484 = vmatpush1.bf16.msra.mxu0 0
        %2485 = vmatprep.subr.bf16.mxu0 0
        %2486 = vmatpush1.bf16.msra.mxu0 0
        %2487 = vmatprep.subr.bf16.mxu0 0
        %2488 = vmatpush1.bf16.msra.mxu0 0
        %2489 = vmatprep.subr.bf16.mxu0 0
        %2490 = vmatpush1.bf16.msra.mxu0 0
        %2491 = vmatprep.subr.bf16.mxu0 0
        %2492 = vmatpush1.bf16.msra.mxu0 %v2475
        %2493 = vmatprep.subr.bf16.mxu0 0
        %2494 = vmatpush2.bf16.msra.mxu0 0
        %2495 = vmatprep.subr.bf16.mxu0 0
        %2496 = vmatpush2.bf16.msra.mxu0 0
        %2497 = vmatprep.subr.bf16.mxu0 0
        %2498 = vmatpush2.bf16.msra.mxu0 0
        %2499 = vmatprep.subr.bf16.mxu0 0
        %2500 = vmatpush2.bf16.msra.mxu0 0
        %2501 = vmatprep.subr.bf16.mxu0 0
        %2502 = vmatpush2.bf16.msra.mxu0 0
        %2503 = vmatprep.subr.bf16.mxu0 0
        %2504 = vmatpush2.bf16.msra.mxu0 0
        %2505 = vmatprep.subr.bf16.mxu0 0
        %2506 = vmatpush2.bf16.msra.mxu0 0
        %2507 = vmatprep.subr.bf16.mxu0 0
        %2508 = vmatpush2.bf16.msra.mxu0 0
        %2509 = vmatprep.mubr.bf16.mxu0 0
        %2510 = vmatmul.mubr.bf16.gmra.mxu0 %v2427
        %v2511 = vpop.f32.mrf.mxu0
        %v2512 = vadd.f32 %v2344, %v2511
        %v2513 = vpop.f32.mrf.mxu0
        %v2514 = vpop.f32.mrf.mxu0
        %v2515 = vadd.f32 %v2344, %v2514
        %v2516 = vpop.f32.mrf.mxu0
        %2517 = vmatprep.mubr.bf16.mxu0 0
        %2518 = vmatmul.mubr.bf16.gmra.mxu0 %v2430
        %v2519 = vpop.f32.mrf.mxu0
        %v2520 = vadd.f32 %v2344, %v2519
        %v2521 = vpop.f32.mrf.mxu0
        %v2522 = vpop.f32.mrf.mxu0
        %v2523 = vadd.f32 %v2344, %v2522
        %v2524 = vpop.f32.mrf.mxu0
        %2525 = vmatprep.mubr.bf16.mxu0 0
        %2526 = vmatmul.mubr.bf16.gmra.mxu0 %v2433
        %v2527 = vpop.f32.mrf.mxu0
        %v2528 = vadd.f32 %v2344, %v2527
        %v2529 = vpop.f32.mrf.mxu0
        %v2530 = vpop.f32.mrf.mxu0
        %v2531 = vadd.f32 %v2344, %v2530
        %v2532 = vpop.f32.mrf.mxu0
        %2533 = vmatprep.mubr.bf16.mxu0 0
        %2534 = vmatmul.mubr.bf16.gmra.mxu0 %v2436
        %v2535 = vpop.f32.mrf.mxu0
        %v2536 = vadd.f32 %v2344, %v2535
        %v2537 = vpop.f32.mrf.mxu0
        %v2538 = vpop.f32.mrf.mxu0
        %v2539 = vadd.f32 %v2344, %v2538
        %v2540 = vpop.f32.mrf.mxu0
        %2541 = vmatprep.mubr.bf16.mxu0 0
        %2542 = vmatmul.mubr.bf16.gmra.mxu0 %v2439
        %v2543 = vpop.f32.mrf.mxu0
        %v2544 = vadd.f32 %v2344, %v2543
        %v2545 = vpop.f32.mrf.mxu0
        %v2546 = vpop.f32.mrf.mxu0
        %v2547 = vadd.f32 %v2344, %v2546
        %v2548 = vpop.f32.mrf.mxu0
        %2549 = vmatprep.mubr.bf16.mxu0 0
        %2550 = vmatmul.mubr.bf16.gmra.mxu0 %v2442
        %v2551 = vpop.f32.mrf.mxu0
        %v2552 = vadd.f32 %v2344, %v2551
        %v2553 = vpop.f32.mrf.mxu0
        %v2554 = vpop.f32.mrf.mxu0
        %v2555 = vadd.f32 %v2344, %v2554
        %v2556 = vpop.f32.mrf.mxu0
        %2557 = vmatprep.mubr.bf16.mxu0 0
        %2558 = vmatmul.mubr.bf16.gmra.mxu0 %v2445
        %v2559 = vpop.f32.mrf.mxu0
        %v2560 = vadd.f32 %v2344, %v2559
        %v2561 = vpop.f32.mrf.mxu0
        %v2562 = vpop.f32.mrf.mxu0
        %v2563 = vadd.f32 %v2344, %v2562
        %v2564 = vpop.f32.mrf.mxu0
        %2565 = vmatprep.mubr.bf16.mxu0 0
        %2566 = vmatmul.mubr.bf16.gmra.mxu0 %v2448
        %v2567 = vpop.f32.mrf.mxu0
        %v2568 = vadd.f32 %v2344, %v2567
        %v2569 = vpop.f32.mrf.mxu0
        %v2570 = vpop.f32.mrf.mxu0
        %v2571 = vadd.f32 %v2344, %v2570
        %v2572 = vpop.f32.mrf.mxu0
        %2573 = vmatprep.mubr.bf16.mxu0 0
        %2574 = vmatmul.mubr.bf16.gmra.mxu0 %v2451
        %v2575 = vpop.f32.mrf.mxu0
        %v2576 = vadd.f32 %v2344, %v2575
        %v2577 = vpop.f32.mrf.mxu0
        %v2578 = vpop.f32.mrf.mxu0
        %v2579 = vadd.f32 %v2344, %v2578
        %v2580 = vpop.f32.mrf.mxu0
        %2581 = vmatprep.mubr.bf16.mxu0 0
        %2582 = vmatmul.mubr.bf16.gmra.mxu0 %v2454
        %v2583 = vpop.f32.mrf.mxu0
        %v2584 = vadd.f32 %v2344, %v2583
        %v2585 = vpop.f32.mrf.mxu0
        %v2586 = vpop.f32.mrf.mxu0
        %v2587 = vadd.f32 %v2344, %v2586
        %v2588 = vpop.f32.mrf.mxu0
        %2589 = vmatprep.mubr.bf16.mxu0 0
        %2590 = vmatmul.mubr.bf16.gmra.mxu0 %v2457
        %v2591 = vpop.f32.mrf.mxu0
        %v2592 = vadd.f32 %v2344, %v2591
        %v2593 = vpop.f32.mrf.mxu0
        %v2594 = vpop.f32.mrf.mxu0
        %v2595 = vadd.f32 %v2344, %v2594
        %v2596 = vpop.f32.mrf.mxu0
        %2597 = vmatprep.mubr.bf16.mxu0 0
        %2598 = vmatmul.mubr.bf16.gmra.mxu0 %v2460
        %v2599 = vpop.f32.mrf.mxu0
        %v2600 = vadd.f32 %v2344, %v2599
        %v2601 = vpop.f32.mrf.mxu0
        %v2602 = vpop.f32.mrf.mxu0
        %v2603 = vadd.f32 %v2344, %v2602
        %v2604 = vpop.f32.mrf.mxu0
        %2605 = vmatprep.mubr.bf16.mxu0 0
        %2606 = vmatmul.mubr.bf16.gmra.mxu0 %v2463
        %v2607 = vpop.f32.mrf.mxu0
        %v2608 = vadd.f32 %v2344, %v2607
        %v2609 = vpop.f32.mrf.mxu0
        %v2610 = vpop.f32.mrf.mxu0
        %v2611 = vadd.f32 %v2344, %v2610
        %v2612 = vpop.f32.mrf.mxu0
        %2613 = vmatprep.mubr.bf16.mxu0 0
        %2614 = vmatmul.mubr.bf16.gmra.mxu0 %v2466
        %v2615 = vpop.f32.mrf.mxu0
        %v2616 = vadd.f32 %v2344, %v2615
        %v2617 = vpop.f32.mrf.mxu0
        %v2618 = vpop.f32.mrf.mxu0
        %v2619 = vadd.f32 %v2344, %v2618
        %v2620 = vpop.f32.mrf.mxu0
        %2621 = vmatprep.mubr.bf16.mxu0 0
        %2622 = vmatmul.mubr.bf16.gmra.mxu0 %v2469
        %v2623 = vpop.f32.mrf.mxu0
        %v2624 = vadd.f32 %v2344, %v2623
        %v2625 = vpop.f32.mrf.mxu0
        %v2626 = vpop.f32.mrf.mxu0
        %v2627 = vadd.f32 %v2344, %v2626
        %v2628 = vpop.f32.mrf.mxu0
        %2629 = vmatprep.mubr.bf16.mxu0 0
        %2630 = vmatmul.mubr.bf16.gmra.mxu0 %v2472
        %v2631 = vpop.f32.mrf.mxu0
        %v2632 = vadd.f32 %v2344, %v2631
        %v2633 = vpop.f32.mrf.mxu0
        %v2634 = vpop.f32.mrf.mxu0
        %v2635 = vadd.f32 %v2344, %v2634
        %v2636 = vpop.f32.mrf.mxu0
        %2637 = vdwg.mxu0
        %v2638 = vmax.f32 %v2512, 0.0
        %v2639 = vmax.f32 %v2515, 0.0
        %v2640 = vmax.f32 %v2520, 0.0
        %v2641 = vmax.f32 %v2523, 0.0
        %v2642 = vmax.f32 %v2528, 0.0
        %v2643 = vmax.f32 %v2531, 0.0
        %v2644 = vmax.f32 %v2536, 0.0
        %v2645 = vmax.f32 %v2539, 0.0
        %v2646 = vmax.f32 %v2544, 0.0
        %v2647 = vmax.f32 %v2547, 0.0
        %v2648 = vmax.f32 %v2552, 0.0
        %v2649 = vmax.f32 %v2555, 0.0
        %v2650 = vmax.f32 %v2560, 0.0
        %v2651 = vmax.f32 %v2563, 0.0
        %v2652 = vmax.f32 %v2568, 0.0
        %v2653 = vmax.f32 %v2571, 0.0
        %v2654 = vmax.f32 %v2576, 0.0
        %v2655 = vmax.f32 %v2579, 0.0
        %v2656 = vmax.f32 %v2584, 0.0
        %v2657 = vmax.f32 %v2587, 0.0
        %v2658 = vmax.f32 %v2592, 0.0
        %v2659 = vmax.f32 %v2595, 0.0
        %v2660 = vmax.f32 %v2600, 0.0
        %v2661 = vmax.f32 %v2603, 0.0
        %v2662 = vmax.f32 %v2608, 0.0
        %v2663 = vmax.f32 %v2611, 0.0
        %v2664 = vmax.f32 %v2616, 0.0
        %v2665 = vmax.f32 %v2619, 0.0
        %v2666 = vmax.f32 %v2624, 0.0
        %v2667 = vmax.f32 %v2627, 0.0
        %v2668 = vmax.f32 %v2632, 0.0
        %v2669 = vmax.f32 %v2635, 0.0
        %2702 = vrot.lane.b32.xlu0 %v2638, 20
        %v2703 = vpop.permute.xlu0 %2702
        %2704 = vrot.lane.b32.xlu0 %v2639, 20
        %v2705 = vpop.permute.xlu0 %2704
        %2706 = vrot.lane.b32.xlu0 %v2640, 20
        %v2707 = vpop.permute.xlu0 %2706
        %2708 = vrot.lane.b32.xlu0 %v2641, 20
        %v2709 = vpop.permute.xlu0 %2708
        %2710 = vrot.lane.b32.xlu0 %v2642, 20
        %v2711 = vpop.permute.xlu0 %2710
        %2712 = vrot.lane.b32.xlu0 %v2643, 20
        %v2713 = vpop.permute.xlu0 %2712
        %2714 = vrot.lane.b32.xlu0 %v2644, 20
        %v2715 = vpop.permute.xlu0 %2714
        %2716 = vrot.lane.b32.xlu0 %v2645, 20
        %v2717 = vpop.permute.xlu0 %2716
        %2718 = vrot.lane.b32.xlu0 %v2646, 20
        %v2719 = vpop.permute.xlu0 %2718
        %2720 = vrot.lane.b32.xlu0 %v2647, 20
        %v2721 = vpop.permute.xlu0 %2720
        %2722 = vrot.lane.b32.xlu0 %v2648, 20
        %v2723 = vpop.permute.xlu0 %2722
        %2724 = vrot.lane.b32.xlu0 %v2649, 20
        %v2725 = vpop.permute.xlu0 %2724
        %2726 = vrot.lane.b32.xlu0 %v2650, 20
        %v2727 = vpop.permute.xlu0 %2726
        %2728 = vrot.lane.b32.xlu0 %v2651, 20
        %v2729 = vpop.permute.xlu0 %2728
        %2730 = vrot.lane.b32.xlu0 %v2652, 20
        %v2731 = vpop.permute.xlu0 %2730
        %2732 = vrot.lane.b32.xlu0 %v2653, 20
        %v2733 = vpop.permute.xlu0 %2732
        %2734 = vrot.lane.b32.xlu0 %v2654, 20
        %v2735 = vpop.permute.xlu0 %2734
        %2736 = vrot.lane.b32.xlu0 %v2655, 20
        %v2737 = vpop.permute.xlu0 %2736
        %2738 = vrot.lane.b32.xlu0 %v2656, 20
        %v2739 = vpop.permute.xlu0 %2738
        %2740 = vrot.lane.b32.xlu0 %v2657, 20
        %v2741 = vpop.permute.xlu0 %2740
        %2742 = vrot.lane.b32.xlu0 %v2658, 20
        %v2743 = vpop.permute.xlu0 %2742
        %2744 = vrot.lane.b32.xlu0 %v2659, 20
        %v2745 = vpop.permute.xlu0 %2744
        %2746 = vrot.lane.b32.xlu0 %v2660, 20
        %v2747 = vpop.permute.xlu0 %2746
        %2748 = vrot.lane.b32.xlu0 %v2661, 20
        %v2749 = vpop.permute.xlu0 %2748
        %2750 = vrot.lane.b32.xlu0 %v2662, 20
        %v2751 = vpop.permute.xlu0 %2750
        %2752 = vrot.lane.b32.xlu0 %v2663, 20
        %v2753 = vpop.permute.xlu0 %2752
        %2754 = vrot.lane.b32.xlu0 %v2664, 20
        %v2755 = vpop.permute.xlu0 %2754
        %2756 = vrot.lane.b32.xlu0 %v2665, 20
        %v2757 = vpop.permute.xlu0 %2756
        %2758 = vrot.lane.b32.xlu0 %v2666, 20
        %v2759 = vpop.permute.xlu0 %2758
        %2760 = vrot.lane.b32.xlu0 %v2667, 20
        %v2761 = vpop.permute.xlu0 %2760
        %2762 = vrot.lane.b32.xlu0 %v2668, 20
        %v2763 = vpop.permute.xlu0 %2762
        %2764 = vrot.lane.b32.xlu0 %v2669, 20
        %v2765 = vpop.permute.xlu0 %2764
        %vm2798 = vcmask 162816
        %v2799 = vsel %vm2798, %v1755, %v2703
        %v2800 = vsel %vm2798, %v1756, %v2705
        %v2801 = vsel %vm2798, %v1757, %v2707
        %v2802 = vsel %vm2798, %v1758, %v2709
        %v2803 = vsel %vm2798, %v1759, %v2711
        %v2804 = vsel %vm2798, %v1760, %v2713
        %v2805 = vsel %vm2798, %v1761, %v2715
        %v2806 = vsel %vm2798, %v1762, %v2717
        %v2807 = vsel %vm2798, %v1763, %v2719
        %v2808 = vsel %vm2798, %v1764, %v2721
        %v2809 = vsel %vm2798, %v1765, %v2723
        %v2810 = vsel %vm2798, %v1766, %v2725
        %v2811 = vsel %vm2798, %v1767, %v2727
        %v2812 = vsel %vm2798, %v1768, %v2729
        %v2813 = vsel %vm2798, %v1769, %v2731
        %v2814 = vsel %vm2798, %v1770, %v2733
        %v2815 = vsel %vm2798, %v1771, %v2735
        %v2816 = vsel %vm2798, %v1772, %v2737
        %v2817 = vsel %vm2798, %v1773, %v2739
        %v2818 = vsel %vm2798, %v1774, %v2741
        %v2819 = vsel %vm2798, %v1775, %v2743
        %v2820 = vsel %vm2798, %v1776, %v2745
        %v2821 = vsel %vm2798, %v1777, %v2747
        %v2822 = vsel %vm2798, %v1778, %v2749
        %v2823 = vsel %vm2798, %v1779, %v2751
        %v2824 = vsel %vm2798, %v1780, %v2753
        %v2825 = vsel %vm2798, %v1781, %v2755
        %v2826 = vsel %vm2798, %v1782, %v2757
        %v2827 = vsel %vm2798, %v1783, %v2759
        %v2828 = vsel %vm2798, %v1784, %v2761
        %v2829 = vsel %vm2798, %v1785, %v2763
        %v2830 = vsel %vm2798, %v1786, %v2765
        %vm2831 = vcmask 228352
        %2832 = vst.msk [vmem:[%s1417] sm:$0xff] %vm2831, %v2799
        %2833 = vst.msk [vmem:[%s1417 + $0x8] sm:$0xff] %vm2831, %v2800
        %2834 = vst.msk [vmem:[%s1417 + $0x10] sm:$0xff] %vm2831, %v2801
        %2835 = vst.msk [vmem:[%s1417 + $0x18] sm:$0xff] %vm2831, %v2802
        %2836 = vst.msk [vmem:[%s1417 + $0x20] sm:$0xff] %vm2831, %v2803
        %2837 = vst.msk [vmem:[%s1417 + $0x28] sm:$0xff] %vm2831, %v2804
        %2838 = vst.msk [vmem:[%s1417 + $0x30] sm:$0xff] %vm2831, %v2805
        %2839 = vst.msk [vmem:[%s1417 + $0x38] sm:$0xff] %vm2831, %v2806
        %2840 = vst.msk [vmem:[%s1417 + $0x40] sm:$0xff] %vm2831, %v2807
        %2841 = vst.msk [vmem:[%s1417 + $0x48] sm:$0xff] %vm2831, %v2808
        %2842 = vst.msk [vmem:[%s1417 + $0x50] sm:$0xff] %vm2831, %v2809
        %2843 = vst.msk [vmem:[%s1417 + $0x58] sm:$0xff] %vm2831, %v2810
        %2844 = vst.msk [vmem:[%s1417 + $0x60] sm:$0xff] %vm2831, %v2811
        %2845 = vst.msk [vmem:[%s1417 + $0x68] sm:$0xff] %vm2831, %v2812
        %2846 = vst.msk [vmem:[%s1417 + $0x70] sm:$0xff] %vm2831, %v2813
        %2847 = vst.msk [vmem:[%s1417 + $0x78] sm:$0xff] %vm2831, %v2814
        %2848 = vst.msk [vmem:[%s1417 + $0x80] sm:$0xff] %vm2831, %v2815
        %2849 = vst.msk [vmem:[%s1417 + $0x88] sm:$0xff] %vm2831, %v2816
        %2850 = vst.msk [vmem:[%s1417 + $0x90] sm:$0xff] %vm2831, %v2817
        %2851 = vst.msk [vmem:[%s1417 + $0x98] sm:$0xff] %vm2831, %v2818
        %2852 = vst.msk [vmem:[%s1417 + $0xa0] sm:$0xff] %vm2831, %v2819
        %2853 = vst.msk [vmem:[%s1417 + $0xa8] sm:$0xff] %vm2831, %v2820
        %2854 = vst.msk [vmem:[%s1417 + $0xb0] sm:$0xff] %vm2831, %v2821
        %2855 = vst.msk [vmem:[%s1417 + $0xb8] sm:$0xff] %vm2831, %v2822
        %2856 = vst.msk [vmem:[%s1417 + $0xc0] sm:$0xff] %vm2831, %v2823
        %2857 = vst.msk [vmem:[%s1417 + $0xc8] sm:$0xff] %vm2831, %v2824
        %2858 = vst.msk [vmem:[%s1417 + $0xd0] sm:$0xff] %vm2831, %v2825
        %2859 = vst.msk [vmem:[%s1417 + $0xd8] sm:$0xff] %vm2831, %v2826
        %2860 = vst.msk [vmem:[%s1417 + $0xe0] sm:$0xff] %vm2831, %v2827
        %2861 = vst.msk [vmem:[%s1417 + $0xe8] sm:$0xff] %vm2831, %v2828
        %2862 = vst.msk [vmem:[%s1417 + $0xf0] sm:$0xff] %vm2831, %v2829
        %2863 = vst.msk [vmem:[%s1417 + $0xf8] sm:$0xff] %vm2831, %v2830
        %s2864 = smul.u32 32, %s16
        %p2865 = scmp.lt.s32.totalorder %s2864, 63
        %s2866 = scalar_select %p2865, %s2864, 63
        %s2867 = smul.addr %s2866, 8
        %s2868 = scalar_lea.vmem %s5, %s2867
        // Predicated region
        $region82: #{inception_block_pallas.3} parent=76 // pred_check
          %p2869 = pneg %p144
        $region83: #{inception_block_pallas.3} parent=76 // pred_check_branch
          %2871 = sbr.rel (%p2869) target = $region85
        $region84: #{inception_block_pallas.3} parent=76 // pred_region
          %s2872 = smul.u32 32, %s16
        $region85: #{inception_block_pallas.3} parent=76 // pred_fallthru
          _
      $region77: #{inception_block_pallas.3} parent=5 // pred_fallthru
        _
      %p2873 = scmp.le.s32.totalorder 2, %s11
      // Predicated region
      $region86: #{inception_block_pallas.3} parent=5 // pred_check
        %p2874 = pneg %p2873
      $region87: #{inception_block_pallas.3} parent=5 // pred_check_branch
        %2876 = sbr.rel (%p2874) target = $region89
      $region88: #{inception_block_pallas.3} parent=5 // pred_region
        %s2877 = ssub.s32 %s11, 2
        // Predicated region
        $region90: #{inception_block_pallas.3} parent=88 // pred_check
          %p2878 = pneg %p150
        $region91: #{inception_block_pallas.3} parent=88 // pred_check_branch
          %2880 = sbr.rel (%p2878) target = $region93
        $region92: #{inception_block_pallas.3} parent=88 // pred_region
          %s2881 = smul.u32 32, %s17
          %p2882 = scmp.lt.s32.totalorder %s2881, 63
          %s2883 = scalar_select %p2882, %s2881, 63
          %s2884 = smul.addr %s2883, 8
          %s2885 = scalar_lea.vmem %s5, %s2884
        $region93: #{inception_block_pallas.3} parent=88 // pred_fallthru
          _
      $region89: #{inception_block_pallas.3} parent=5 // pred_fallthru
        _
    $region6: #{inception_block_pallas.3} parent=1 // loop_footer
      %s15 = sadd.s32 1, %s11
    $region7: #{inception_block_pallas.3} parent=1 // loop_footer_branch
      %10 = sbr.rel target = $region3
    $region8: #{inception_block_pallas.3} parent=1 // loop_exit
      _

// kernel: inception_block_pallas.4
$region0: #{inception_block_pallas.4}
  #allocation0 [shape = 'u32[]', space=smem, size = 0x4, offset = 0x4, fixed_abs, tag = 'smem constant byte address 0x4 - core index']
  #allocation1 [shape = 'u32[144,128]{1,0:T(1,128)}', space=vmem, size = 0x12000, scoped, tag = 'internal scratch']
  %s0 = inlined_call_operand.vmem [shape: bf16[512,54], index: 0, kind: input, shape index: {}]
  %s1 = inlined_call_operand.vmem [shape: bf16[54,8], index: 1, kind: input, shape index: {}]
  %s2 = inlined_call_operand.vmem [shape: f32[1,8], index: 2, kind: input, shape index: {}]
  %s3 = inlined_call_operand.vmem [shape: f32[512,8], index: 3, kind: output, shape index: {}]
  %s4 = sld [smem:[#allocation0]]
  $region45: #{inception_block_pallas.4} parent=0
    _
  %s6 = ssub.s32 1, %s4
  %s7 = scalar_select 0, %s6, %s4
  loop: start=0, step=1, limit=4
  $region2: #{inception_block_pallas.4} parent=0 // loop_pre_header
    _
  $region3: #{inception_block_pallas.4} parent=0 // loop_header
    %s9 = sphi 0, %s13
    %p10 = scmp.ge.s32.totalorder %s9, 4
    %s19 = sphi 0, %s21
    %s22 = sphi 0, %s19
    %s23 = sphi 0, %s22
    %s39 = sphi 0, %s23
    %s43 = sphi 0, %s43
    %s45 = sphi 0, %s43
    %s46 = sphi 0, %s45
    %s60 = sphi 0, %s46
    %s64 = sphi 0, %s64
    %s66 = sphi 0, %s64
    %s67 = sphi 0, %s66
    %s81 = sphi 0, %s67
    %s87 = sphi 0, %s89
    %s90 = sphi 0, %s87
    %s91 = sphi 0, %s90
    %s107 = sphi 0, %s91
  $region4: #{inception_block_pallas.4} parent=0 // loop_header_branch
    %12 = sbr.rel (%p10) target = $region8
  $region5: #{inception_block_pallas.4} parent=0 // loop_body
    %s14 = ssub.s32 %s9, 1
    %s15 = ssub.s32 %s9, 2
    %s16 = sadd.s32 %s9, 1
    %s17 = ssub.s32 %s9, %s16
    %p18 = scmp.eq.s32.totalorder %s17, 0
    %s20 = sadd.s32 %s19, 1
    %s21 = scalar_select %p18, %s19, %s20
    %p24 = pneg %p18
    %p25 = scmp.eq.s32.totalorder %s9, 1
    %p26 = por %p24, %p25
    %p27 = scmp.ne.s32.totalorder %s19, %s22
    %p28 = scmp.eq.s32.totalorder %s9, 0
    %p29 = por %p27, %p28
    %p30 = scmp.ne.s32.totalorder %s19, %s22
    %p31 = scmp.eq.s32.totalorder %s14, 1
    %p32 = por %p30, %p31
    %p33 = scmp.ne.s32.totalorder %s22, %s23
    %p34 = scmp.eq.s32.totalorder %s14, 0
    %p35 = por %p33, %p34
    %p36 = scmp.ne.s32.totalorder %s22, %s23
    %p37 = scmp.eq.s32.totalorder %s15, 1
    %p38 = por %p36, %p37
    %p40 = scmp.ne.s32.totalorder %s23, %s39
    %p41 = scmp.eq.s32.totalorder %s15, 0
    %p42 = por %p40, %p41
    %s44 = sadd.s32 %s43, 1
    %p47 = scmp.eq.s32.totalorder %s9, 1
    %p48 = scmp.ne.s32.totalorder %s43, %s45
    %p49 = scmp.eq.s32.totalorder %s9, 0
    %p50 = por %p48, %p49
    %p51 = scmp.ne.s32.totalorder %s43, %s45
    %p52 = scmp.eq.s32.totalorder %s14, 1
    %p53 = por %p51, %p52
    %p54 = scmp.ne.s32.totalorder %s45, %s46
    %p55 = scmp.eq.s32.totalorder %s14, 0
    %p56 = por %p54, %p55
    %p57 = scmp.ne.s32.totalorder %s45, %s46
    %p58 = scmp.eq.s32.totalorder %s15, 1
    %p59 = por %p57, %p58
    %p61 = scmp.ne.s32.totalorder %s46, %s60
    %p62 = scmp.eq.s32.totalorder %s15, 0
    %p63 = por %p61, %p62
    %s65 = sadd.s32 %s64, 1
    %p68 = scmp.eq.s32.totalorder %s9, 1
    %p69 = scmp.ne.s32.totalorder %s64, %s66
    %p70 = scmp.eq.s32.totalorder %s9, 0
    %p71 = por %p69, %p70
    %p72 = scmp.ne.s32.totalorder %s64, %s66
    %p73 = scmp.eq.s32.totalorder %s14, 1
    %p74 = por %p72, %p73
    %p75 = scmp.ne.s32.totalorder %s66, %s67
    %p76 = scmp.eq.s32.totalorder %s14, 0
    %p77 = por %p75, %p76
    %p78 = scmp.ne.s32.totalorder %s66, %s67
    %p79 = scmp.eq.s32.totalorder %s15, 1
    %p80 = por %p78, %p79
    %p82 = scmp.ne.s32.totalorder %s67, %s81
    %p83 = scmp.eq.s32.totalorder %s15, 0
    %p84 = por %p82, %p83
    %s85 = ssub.s32 %s9, %s16
    %p86 = scmp.eq.s32.totalorder %s85, 0
    %s88 = sadd.s32 %s87, 1
    %s89 = scalar_select %p86, %s87, %s88
    %p92 = pneg %p86
    %p93 = scmp.eq.s32.totalorder %s9, 1
    %p94 = por %p92, %p93
    %p95 = scmp.ne.s32.totalorder %s87, %s90
    %p96 = scmp.eq.s32.totalorder %s9, 0
    %p97 = por %p95, %p96
    %p98 = scmp.ne.s32.totalorder %s87, %s90
    %p99 = scmp.eq.s32.totalorder %s14, 1
    %p100 = por %p98, %p99
    %p101 = scmp.ne.s32.totalorder %s90, %s91
    %p102 = scmp.eq.s32.totalorder %s14, 0
    %p103 = por %p101, %p102
    %p104 = scmp.ne.s32.totalorder %s90, %s91
    %p105 = scmp.eq.s32.totalorder %s15, 1
    %p106 = por %p104, %p105
    %p108 = scmp.ne.s32.totalorder %s91, %s107
    %p109 = scmp.eq.s32.totalorder %s15, 0
    %p110 = por %p108, %p109
    %p111 = scmp.le.s32.totalorder 1, %s9
    %p112 = scmp.lt.s32.totalorder %s9, 3
    %p113 = pnand %p111, %p112
    %p114 = pneg %p113
    // Predicated region
    $region9: #{inception_block_pallas.4} parent=5 // pred_check
      _
    $region10: #{inception_block_pallas.4} parent=5 // pred_check_branch
      %116 = sbr.rel (%p113) target = $region12
    $region11: #{inception_block_pallas.4} parent=5 // pred_region
      %s117 = ssub.s32 %s9, 1
      // Predicated region
      $region13: #{inception_block_pallas.4} parent=11 // pred_check
        %p118 = pneg %p56
      $region14: #{inception_block_pallas.4} parent=11 // pred_check_branch
        %120 = sbr.rel (%p118) target = $region16
      $region15: #{inception_block_pallas.4} parent=11 // pred_region
        _
      $region16: #{inception_block_pallas.4} parent=11 // pred_fallthru
        _
      // Predicated region
      $region17: #{inception_block_pallas.4} parent=11 // pred_check
        %p121 = pneg %p77
      $region18: #{inception_block_pallas.4} parent=11 // pred_check_branch
        %123 = sbr.rel (%p121) target = $region20
      $region19: #{inception_block_pallas.4} parent=11 // pred_region
        _
      $region20: #{inception_block_pallas.4} parent=11 // pred_fallthru
        _
    $region12: #{inception_block_pallas.4} parent=5 // pred_fallthru
      _
    %p124 = scmp.lt.s32.totalorder %s9, 2
    // Predicated region
    $region21: #{inception_block_pallas.4} parent=5 // pred_check
      %p125 = pneg %p124
    $region22: #{inception_block_pallas.4} parent=5 // pred_check_branch
      %127 = sbr.rel (%p125) target = $region24
    $region23: #{inception_block_pallas.4} parent=5 // pred_region
      // Predicated region
      $region25: #{inception_block_pallas.4} parent=23 // pred_check
        %p128 = pneg %p29
      $region26: #{inception_block_pallas.4} parent=23 // pred_check_branch
        %130 = sbr.rel (%p128) target = $region28
      $region27: #{inception_block_pallas.4} parent=23 // pred_region
        %s131 = smul.u32 32, %s9
        %p132 = scmp.lt.s32.totalorder %s131, 63
        %s133 = scalar_select %p132, %s131, 63
        %s134 = smul.addr %s133, 4
        %s135 = scalar_lea.vmem %s0, %s134
        %s136 = smul.u32 32, %s9
      $region28: #{inception_block_pallas.4} parent=23 // pred_fallthru
        _
    $region24: #{inception_block_pallas.4} parent=5 // pred_fallthru
      _
    %p137 = scmp.le.s32.totalorder 1, %s9
    %p138 = scmp.lt.s32.totalorder %s9, 3
    %p139 = pnand %p137, %p138
    %p140 = pneg %p139
    // Predicated region
    $region29: #{inception_block_pallas.4} parent=5 // pred_check
      _
    $region30: #{inception_block_pallas.4} parent=5 // pred_check_branch
      %142 = sbr.rel (%p139) target = $region32
    $region31: #{inception_block_pallas.4} parent=5 // pred_region
      %s143 = ssub.s32 %s9, 1
      %s144 = smul.u32 32, %s14
      %p145 = scmp.lt.s32.totalorder %s144, 63
      %s146 = scalar_select %p145, %s144, 63
      %s147 = smul.addr %s146, 4
      %s148 = scalar_lea.vmem %s0, %s147
      %p149 = pneg %p35
      %p150 = pneg %p32
      %p151 = pneg %p56
      %p152 = pneg %p53
      %p153 = pneg %p77
      %p154 = pneg %p74
      %p155 = pneg %p103
      %p156 = pneg %p100
      %s157 = smul.u32 32, %s14
      %p158 = scmp.lt.s32.totalorder %s157, 63
      %s159 = scalar_select %p158, %s157, 63
      %s160 = smul.addr %s159, 8
      %s161 = scalar_lea.vmem %s3, %s160
      %s162 = smul.u32 32, %s14
      %p163 = scmp.lt.s32.totalorder %s162, 63
      %s164 = scalar_select %p163, %s162, 63
      %s165 = smul.addr %s164, 4
      %s166 = scalar_lea.vmem %s0, %s165
      %s167 = smul.u32 32, %s14
      %s168 = smul.u32 32, %s14
      %p169 = scmp.lt.s32.totalorder %s168, 63
      %s170 = scalar_select %p169, %s168, 63
      %s171 = smul.addr %s170, 8
      %s172 = scalar_lea.vmem %s3, %s171
      %s173 = smul.u32 32, %s14
      %v175 = vld [vmem:[%s166] sm:$0xf]
      %v176 = vld [vmem:[%s166 + $0x4] sm:$0xf]
      %v177 = vld [vmem:[%s166 + $0x8] sm:$0xf]
      %v178 = vld [vmem:[%s166 + $0xc] sm:$0xf]
      %v179 = vld [vmem:[%s166 + $0x10] sm:$0xf]
      %v180 = vld [vmem:[%s166 + $0x14] sm:$0xf]
      %v181 = vld [vmem:[%s166 + $0x18] sm:$0xf]
      %v182 = vld [vmem:[%s166 + $0x1c] sm:$0xf]
      %v183 = vld [vmem:[%s166 + $0x20] sm:$0xf]
      %v184 = vld [vmem:[%s166 + $0x24] sm:$0xf]
      %v185 = vld [vmem:[%s166 + $0x28] sm:$0xf]
      %v186 = vld [vmem:[%s166 + $0x2c] sm:$0xf]
      %v187 = vld [vmem:[%s166 + $0x30] sm:$0xf]
      %v188 = vld [vmem:[%s166 + $0x34] sm:$0xf]
      %v189 = vld [vmem:[%s166 + $0x38] sm:$0xf]
      %v190 = vld [vmem:[%s166 + $0x3c] sm:$0xf]
      %v191 = vld [vmem:[%s166 + $0x40] sm:$0xf]
      %v192 = vld [vmem:[%s166 + $0x44] sm:$0xf]
      %v193 = vld [vmem:[%s166 + $0x48] sm:$0xf]
      %v194 = vld [vmem:[%s166 + $0x4c] sm:$0xf]
      %v195 = vld [vmem:[%s166 + $0x50] sm:$0xf]
      %v196 = vld [vmem:[%s166 + $0x54] sm:$0xf]
      %v197 = vld [vmem:[%s166 + $0x58] sm:$0xf]
      %v198 = vld [vmem:[%s166 + $0x5c] sm:$0xf]
      %v199 = vld [vmem:[%s166 + $0x60] sm:$0xf]
      %v200 = vld [vmem:[%s166 + $0x64] sm:$0xf]
      %v201 = vld [vmem:[%s166 + $0x68] sm:$0xf]
      %v202 = vld [vmem:[%s166 + $0x6c] sm:$0xf]
      %v203 = vld [vmem:[%s166 + $0x70] sm:$0xf]
      %v204 = vld [vmem:[%s166 + $0x74] sm:$0xf]
      %v205 = vld [vmem:[%s166 + $0x78] sm:$0xf]
      %v206 = vld [vmem:[%s166 + $0x7c] sm:$0xf]
      %v207 = vld [vmem:[%s1] sm:$0xf]
      %v208 = vld [vmem:[%s1 + $0x4] sm:$0xf]
      %v209 = vld [vmem:[%s1 + $0x8] sm:$0xf]
      %v210 = vld [vmem:[%s1 + $0xc] sm:$0xf]
      %v211 = vld [vmem:[%s1 + $0x10] sm:$0xf]
      %v212 = vld [vmem:[%s1 + $0x14] sm:$0xf]
      %v213 = vld [vmem:[%s1 + $0x18] sm:$0x7]
      %v214 = vld [vmem:[%s2] sm:$0x1]
      %v216 = vlaneseq
      %v217 = vshrl.u32 %v216, 7
      %v218 = vsub.s32 0, %v217
      %v219 = vrot.slane %v214, %v218
      %v253 = vunpack.c.l.b16 %v175
      %v254 = vunpack.c.l.b16 %v176
      %v255 = vunpack.c.l.b16 %v177
      %v256 = vunpack.c.l.b16 %v178
      %v257 = vunpack.c.l.b16 %v179
      %v258 = vunpack.c.l.b16 %v180
      %v259 = vunpack.c.l.b16 %v181
      %v260 = vunpack.c.l.b16 %v182
      %v261 = vunpack.c.l.b16 %v183
      %v262 = vunpack.c.l.b16 %v184
      %v263 = vunpack.c.l.b16 %v185
      %v264 = vunpack.c.l.b16 %v186
      %v265 = vunpack.c.l.b16 %v187
      %v266 = vunpack.c.l.b16 %v188
      %v267 = vunpack.c.l.b16 %v189
      %v268 = vunpack.c.l.b16 %v190
      %v269 = vunpack.c.l.b16 %v191
      %v270 = vunpack.c.l.b16 %v192
      %v271 = vunpack.c.l.b16 %v193
      %v272 = vunpack.c.l.b16 %v194
      %v273 = vunpack.c.l.b16 %v195
      %v274 = vunpack.c.l.b16 %v196
      %v275 = vunpack.c.l.b16 %v197
      %v276 = vunpack.c.l.b16 %v198
      %v277 = vunpack.c.l.b16 %v199
      %v278 = vunpack.c.l.b16 %v200
      %v279 = vunpack.c.l.b16 %v201
      %v280 = vunpack.c.l.b16 %v202
      %v281 = vunpack.c.l.b16 %v203
      %v282 = vunpack.c.l.b16 %v204
      %v283 = vunpack.c.l.b16 %v205
      %v284 = vunpack.c.l.b16 %v206
      %v285 = vpack.c.b16 %v254, %v253
      %v286 = vpack.c.b16 %v256, %v255
      %v287 = vpack.c.b16 %v258, %v257
      %v288 = vpack.c.b16 %v260, %v259
      %v289 = vpack.c.b16 %v262, %v261
      %v290 = vpack.c.b16 %v264, %v263
      %v291 = vpack.c.b16 %v266, %v265
      %v292 = vpack.c.b16 %v268, %v267
      %v293 = vpack.c.b16 %v270, %v269
      %v294 = vpack.c.b16 %v272, %v271
      %v295 = vpack.c.b16 %v274, %v273
      %v296 = vpack.c.b16 %v276, %v275
      %v297 = vpack.c.b16 %v278, %v277
      %v298 = vpack.c.b16 %v280, %v279
      %v299 = vpack.c.b16 %v282, %v281
      %v300 = vpack.c.b16 %v284, %v283
      %v308 = vunpack.c.l.b16 %v207
      %v309 = vunpack.c.l.b16 %v208
      %v310 = vunpack.c.l.b16 %v209
      %v311 = vunpack.c.l.b16 %v210
      %v312 = vunpack.c.l.b16 %v211
      %v313 = vunpack.c.l.b16 %v212
      %v314 = vunpack.c.l.b16 %v213
      %v315 = vpack.c.b16 %v309, %v308
      %v316 = vpack.c.b16 %v311, %v310
      %v317 = vpack.c.b16 %v313, %v312
      %v318 = vpack.c.b16 %v314, %v314
      %vm322 = vcmask 441344
      %v324 = vsel %vm322, %v285, 0
      %v327 = vsel %vm322, %v286, 0
      %v330 = vsel %vm322, %v287, 0
      %v333 = vsel %vm322, %v288, 0
      %v336 = vsel %vm322, %v289, 0
      %v339 = vsel %vm322, %v290, 0
      %v342 = vsel %vm322, %v291, 0
      %v345 = vsel %vm322, %v292, 0
      %v348 = vsel %vm322, %v293, 0
      %v351 = vsel %vm322, %v294, 0
      %v354 = vsel %vm322, %v295, 0
      %v357 = vsel %vm322, %v296, 0
      %v360 = vsel %vm322, %v297, 0
      %v363 = vsel %vm322, %v298, 0
      %v366 = vsel %vm322, %v299, 0
      %v369 = vsel %vm322, %v300, 0
      %vm371 = vcmask 1042432
      %v373 = vsel %vm371, %v318, 0
      %375 = vmatprep.subr.bf16.mxu0 0
      %376 = vmatpush1.bf16.msra.mxu0 0
      %377 = vmatprep.subr.bf16.mxu0 0
      %378 = vmatpush1.bf16.msra.mxu0 0
      %379 = vmatprep.subr.bf16.mxu0 0
      %380 = vmatpush1.bf16.msra.mxu0 0
      %381 = vmatprep.subr.bf16.mxu0 0
      %382 = vmatpush1.bf16.msra.mxu0 0
      %383 = vmatprep.subr.bf16.mxu0 0
      %384 = vmatpush1.bf16.msra.mxu0 %v373
      %385 = vmatprep.subr.bf16.mxu0 0
      %386 = vmatpush1.bf16.msra.mxu0 %v317
      %387 = vmatprep.subr.bf16.mxu0 0
      %388 = vmatpush1.bf16.msra.mxu0 %v316
      %389 = vmatprep.subr.bf16.mxu0 0
      %390 = vmatpush1.bf16.msra.mxu0 %v315
      %391 = vmatprep.subr.bf16.mxu0 0
      %392 = vmatpush2.bf16.msra.mxu0 0
      %393 = vmatprep.subr.bf16.mxu0 0
      %394 = vmatpush2.bf16.msra.mxu0 0
      %395 = vmatprep.subr.bf16.mxu0 0
      %396 = vmatpush2.bf16.msra.mxu0 0
      %397 = vmatprep.subr.bf16.mxu0 0
      %398 = vmatpush2.bf16.msra.mxu0 0
      %399 = vmatprep.subr.bf16.mxu0 0
      %400 = vmatpush2.bf16.msra.mxu0 0
      %401 = vmatprep.subr.bf16.mxu0 0
      %402 = vmatpush2.bf16.msra.mxu0 0
      %403 = vmatprep.subr.bf16.mxu0 0
      %404 = vmatpush2.bf16.msra.mxu0 0
      %405 = vmatprep.subr.bf16.mxu0 0
      %406 = vmatpush2.bf16.msra.mxu0 0
      %407 = vmatprep.mubr.bf16.mxu0 0
      %408 = vmatmul.mubr.bf16.gmra.mxu0 %v324
      %v409 = vpop.f32.mrf.mxu0
      %v410 = vadd.f32 %v219, %v409
      %v411 = vpop.f32.mrf.mxu0
      %v412 = vpop.f32.mrf.mxu0
      %v413 = vadd.f32 %v219, %v412
      %v414 = vpop.f32.mrf.mxu0
      %415 = vmatprep.mubr.bf16.mxu0 0
      %416 = vmatmul.mubr.bf16.gmra.mxu0 %v327
      %v417 = vpop.f32.mrf.mxu0
      %v418 = vadd.f32 %v219, %v417
      %v419 = vpop.f32.mrf.mxu0
      %v420 = vpop.f32.mrf.mxu0
      %v421 = vadd.f32 %v219, %v420
      %v422 = vpop.f32.mrf.mxu0
      %423 = vmatprep.mubr.bf16.mxu0 0
      %424 = vmatmul.mubr.bf16.gmra.mxu0 %v330
      %v425 = vpop.f32.mrf.mxu0
      %v426 = vadd.f32 %v219, %v425
      %v427 = vpop.f32.mrf.mxu0
      %v428 = vpop.f32.mrf.mxu0
      %v429 = vadd.f32 %v219, %v428
      %v430 = vpop.f32.mrf.mxu0
      %431 = vmatprep.mubr.bf16.mxu0 0
      %432 = vmatmul.mubr.bf16.gmra.mxu0 %v333
      %v433 = vpop.f32.mrf.mxu0
      %v434 = vadd.f32 %v219, %v433
      %v435 = vpop.f32.mrf.mxu0
      %v436 = vpop.f32.mrf.mxu0
      %v437 = vadd.f32 %v219, %v436
      %v438 = vpop.f32.mrf.mxu0
      %439 = vmatprep.mubr.bf16.mxu0 0
      %440 = vmatmul.mubr.bf16.gmra.mxu0 %v336
      %v441 = vpop.f32.mrf.mxu0
      %v442 = vadd.f32 %v219, %v441
      %v443 = vpop.f32.mrf.mxu0
      %v444 = vpop.f32.mrf.mxu0
      %v445 = vadd.f32 %v219, %v444
      %v446 = vpop.f32.mrf.mxu0
      %447 = vmatprep.mubr.bf16.mxu0 0
      %448 = vmatmul.mubr.bf16.gmra.mxu0 %v339
      %v449 = vpop.f32.mrf.mxu0
      %v450 = vadd.f32 %v219, %v449
      %v451 = vpop.f32.mrf.mxu0
      %v452 = vpop.f32.mrf.mxu0
      %v453 = vadd.f32 %v219, %v452
      %v454 = vpop.f32.mrf.mxu0
      %455 = vmatprep.mubr.bf16.mxu0 0
      %456 = vmatmul.mubr.bf16.gmra.mxu0 %v342
      %v457 = vpop.f32.mrf.mxu0
      %v458 = vadd.f32 %v219, %v457
      %v459 = vpop.f32.mrf.mxu0
      %v460 = vpop.f32.mrf.mxu0
      %v461 = vadd.f32 %v219, %v460
      %v462 = vpop.f32.mrf.mxu0
      %463 = vmatprep.mubr.bf16.mxu0 0
      %464 = vmatmul.mubr.bf16.gmra.mxu0 %v345
      %v465 = vpop.f32.mrf.mxu0
      %v466 = vadd.f32 %v219, %v465
      %v467 = vpop.f32.mrf.mxu0
      %v468 = vpop.f32.mrf.mxu0
      %v469 = vadd.f32 %v219, %v468
      %v470 = vpop.f32.mrf.mxu0
      %471 = vmatprep.mubr.bf16.mxu0 0
      %472 = vmatmul.mubr.bf16.gmra.mxu0 %v348
      %v473 = vpop.f32.mrf.mxu0
      %v474 = vadd.f32 %v219, %v473
      %v475 = vpop.f32.mrf.mxu0
      %v476 = vpop.f32.mrf.mxu0
      %v477 = vadd.f32 %v219, %v476
      %v478 = vpop.f32.mrf.mxu0
      %479 = vmatprep.mubr.bf16.mxu0 0
      %480 = vmatmul.mubr.bf16.gmra.mxu0 %v351
      %v481 = vpop.f32.mrf.mxu0
      %v482 = vadd.f32 %v219, %v481
      %v483 = vpop.f32.mrf.mxu0
      %v484 = vpop.f32.mrf.mxu0
      %v485 = vadd.f32 %v219, %v484
      %v486 = vpop.f32.mrf.mxu0
      %487 = vmatprep.mubr.bf16.mxu0 0
      %488 = vmatmul.mubr.bf16.gmra.mxu0 %v354
      %v489 = vpop.f32.mrf.mxu0
      %v490 = vadd.f32 %v219, %v489
      %v491 = vpop.f32.mrf.mxu0
      %v492 = vpop.f32.mrf.mxu0
      %v493 = vadd.f32 %v219, %v492
      %v494 = vpop.f32.mrf.mxu0
      %495 = vmatprep.mubr.bf16.mxu0 0
      %496 = vmatmul.mubr.bf16.gmra.mxu0 %v357
      %v497 = vpop.f32.mrf.mxu0
      %v498 = vadd.f32 %v219, %v497
      %v499 = vpop.f32.mrf.mxu0
      %v500 = vpop.f32.mrf.mxu0
      %v501 = vadd.f32 %v219, %v500
      %v502 = vpop.f32.mrf.mxu0
      %503 = vmatprep.mubr.bf16.mxu0 0
      %504 = vmatmul.mubr.bf16.gmra.mxu0 %v360
      %v505 = vpop.f32.mrf.mxu0
      %v506 = vadd.f32 %v219, %v505
      %v507 = vpop.f32.mrf.mxu0
      %v508 = vpop.f32.mrf.mxu0
      %v509 = vadd.f32 %v219, %v508
      %v510 = vpop.f32.mrf.mxu0
      %511 = vmatprep.mubr.bf16.mxu0 0
      %512 = vmatmul.mubr.bf16.gmra.mxu0 %v363
      %v513 = vpop.f32.mrf.mxu0
      %v514 = vadd.f32 %v219, %v513
      %v515 = vpop.f32.mrf.mxu0
      %v516 = vpop.f32.mrf.mxu0
      %v517 = vadd.f32 %v219, %v516
      %v518 = vpop.f32.mrf.mxu0
      %519 = vmatprep.mubr.bf16.mxu0 0
      %520 = vmatmul.mubr.bf16.gmra.mxu0 %v366
      %v521 = vpop.f32.mrf.mxu0
      %v522 = vadd.f32 %v219, %v521
      %v523 = vpop.f32.mrf.mxu0
      %v524 = vpop.f32.mrf.mxu0
      %v525 = vadd.f32 %v219, %v524
      %v526 = vpop.f32.mrf.mxu0
      %527 = vmatprep.mubr.bf16.mxu0 0
      %528 = vmatmul.mubr.bf16.gmra.mxu0 %v369
      %v529 = vpop.f32.mrf.mxu0
      %v530 = vadd.f32 %v219, %v529
      %v531 = vpop.f32.mrf.mxu0
      %v532 = vpop.f32.mrf.mxu0
      %v533 = vadd.f32 %v219, %v532
      %v534 = vpop.f32.mrf.mxu0
      %535 = vdwg.mxu0
      %v536 = vmax.f32 %v410, 0.0
      %v537 = vmax.f32 %v413, 0.0
      %v538 = vmax.f32 %v418, 0.0
      %v539 = vmax.f32 %v421, 0.0
      %v540 = vmax.f32 %v426, 0.0
      %v541 = vmax.f32 %v429, 0.0
      %v542 = vmax.f32 %v434, 0.0
      %v543 = vmax.f32 %v437, 0.0
      %v544 = vmax.f32 %v442, 0.0
      %v545 = vmax.f32 %v445, 0.0
      %v546 = vmax.f32 %v450, 0.0
      %v547 = vmax.f32 %v453, 0.0
      %v548 = vmax.f32 %v458, 0.0
      %v549 = vmax.f32 %v461, 0.0
      %v550 = vmax.f32 %v466, 0.0
      %v551 = vmax.f32 %v469, 0.0
      %v552 = vmax.f32 %v474, 0.0
      %v553 = vmax.f32 %v477, 0.0
      %v554 = vmax.f32 %v482, 0.0
      %v555 = vmax.f32 %v485, 0.0
      %v556 = vmax.f32 %v490, 0.0
      %v557 = vmax.f32 %v493, 0.0
      %v558 = vmax.f32 %v498, 0.0
      %v559 = vmax.f32 %v501, 0.0
      %v560 = vmax.f32 %v506, 0.0
      %v561 = vmax.f32 %v509, 0.0
      %v562 = vmax.f32 %v514, 0.0
      %v563 = vmax.f32 %v517, 0.0
      %v564 = vmax.f32 %v522, 0.0
      %v565 = vmax.f32 %v525, 0.0
      %v566 = vmax.f32 %v530, 0.0
      %v567 = vmax.f32 %v533, 0.0
      %vm568 = vcmask 64512
      %569 = vst.msk [vmem:[%s172] sm:$0xff] %vm568, %v536
      %570 = vst.msk [vmem:[%s172 + $0x8] sm:$0xff] %vm568, %v537
      %571 = vst.msk [vmem:[%s172 + $0x10] sm:$0xff] %vm568, %v538
      %572 = vst.msk [vmem:[%s172 + $0x18] sm:$0xff] %vm568, %v539
      %573 = vst.msk [vmem:[%s172 + $0x20] sm:$0xff] %vm568, %v540
      %574 = vst.msk [vmem:[%s172 + $0x28] sm:$0xff] %vm568, %v541
      %575 = vst.msk [vmem:[%s172 + $0x30] sm:$0xff] %vm568, %v542
      %576 = vst.msk [vmem:[%s172 + $0x38] sm:$0xff] %vm568, %v543
      %577 = vst.msk [vmem:[%s172 + $0x40] sm:$0xff] %vm568, %v544
      %578 = vst.msk [vmem:[%s172 + $0x48] sm:$0xff] %vm568, %v545
      %579 = vst.msk [vmem:[%s172 + $0x50] sm:$0xff] %vm568, %v546
      %580 = vst.msk [vmem:[%s172 + $0x58] sm:$0xff] %vm568, %v547
      %581 = vst.msk [vmem:[%s172 + $0x60] sm:$0xff] %vm568, %v548
      %582 = vst.msk [vmem:[%s172 + $0x68] sm:$0xff] %vm568, %v549
      %583 = vst.msk [vmem:[%s172 + $0x70] sm:$0xff] %vm568, %v550
      %584 = vst.msk [vmem:[%s172 + $0x78] sm:$0xff] %vm568, %v551
      %585 = vst.msk [vmem:[%s172 + $0x80] sm:$0xff] %vm568, %v552
      %586 = vst.msk [vmem:[%s172 + $0x88] sm:$0xff] %vm568, %v553
      %587 = vst.msk [vmem:[%s172 + $0x90] sm:$0xff] %vm568, %v554
      %588 = vst.msk [vmem:[%s172 + $0x98] sm:$0xff] %vm568, %v555
      %589 = vst.msk [vmem:[%s172 + $0xa0] sm:$0xff] %vm568, %v556
      %590 = vst.msk [vmem:[%s172 + $0xa8] sm:$0xff] %vm568, %v557
      %591 = vst.msk [vmem:[%s172 + $0xb0] sm:$0xff] %vm568, %v558
      %592 = vst.msk [vmem:[%s172 + $0xb8] sm:$0xff] %vm568, %v559
      %593 = vst.msk [vmem:[%s172 + $0xc0] sm:$0xff] %vm568, %v560
      %594 = vst.msk [vmem:[%s172 + $0xc8] sm:$0xff] %vm568, %v561
      %595 = vst.msk [vmem:[%s172 + $0xd0] sm:$0xff] %vm568, %v562
      %596 = vst.msk [vmem:[%s172 + $0xd8] sm:$0xff] %vm568, %v563
      %597 = vst.msk [vmem:[%s172 + $0xe0] sm:$0xff] %vm568, %v564
      %598 = vst.msk [vmem:[%s172 + $0xe8] sm:$0xff] %vm568, %v565
      %599 = vst.msk [vmem:[%s172 + $0xf0] sm:$0xff] %vm568, %v566
      %600 = vst.msk [vmem:[%s172 + $0xf8] sm:$0xff] %vm568, %v567
      %s601 = smul.u32 32, %s14
      %p602 = scmp.lt.s32.totalorder %s601, 63
      %s603 = scalar_select %p602, %s601, 63
      %s604 = smul.addr %s603, 8
      %s605 = scalar_lea.vmem %s3, %s604
      // Predicated region
      $region33: #{inception_block_pallas.4} parent=31 // pred_check
        %p606 = pneg %p100
      $region34: #{inception_block_pallas.4} parent=31 // pred_check_branch
        %608 = sbr.rel (%p606) target = $region36
      $region35: #{inception_block_pallas.4} parent=31 // pred_region
        %s609 = smul.u32 32, %s14
      $region36: #{inception_block_pallas.4} parent=31 // pred_fallthru
        _
    $region32: #{inception_block_pallas.4} parent=5 // pred_fallthru
      _
    %p610 = scmp.le.s32.totalorder 2, %s9
    // Predicated region
    $region37: #{inception_block_pallas.4} parent=5 // pred_check
      %p611 = pneg %p610
    $region38: #{inception_block_pallas.4} parent=5 // pred_check_branch
      %613 = sbr.rel (%p611) target = $region40
    $region39: #{inception_block_pallas.4} parent=5 // pred_region
      %s614 = ssub.s32 %s9, 2
      // Predicated region
      $region41: #{inception_block_pallas.4} parent=39 // pred_check
        %p615 = pneg %p106
      $region42: #{inception_block_pallas.4} parent=39 // pred_check_branch
        %617 = sbr.rel (%p615) target = $region44
      $region43: #{inception_block_pallas.4} parent=39 // pred_region
        %s618 = smul.u32 32, %s15
        %p619 = scmp.lt.s32.totalorder %s618, 63
        %s620 = scalar_select %p619, %s618, 63
        %s621 = smul.addr %s620, 8
        %s622 = scalar_lea.vmem %s3, %s621
      $region44: #{inception_block_pallas.4} parent=39 // pred_fallthru
        _
    $region40: #{inception_block_pallas.4} parent=5 // pred_fallthru
      _
  $region6: #{inception_block_pallas.4} parent=0 // loop_footer
    %s13 = sadd.s32 1, %s9
  $region7: #{inception_block_pallas.4} parent=0 // loop_footer_branch
    %8 = sbr.rel target = $region3
  $region8: #{inception_block_pallas.4} parent=0 // loop_exit
    _

// kernel: inception_block_pallas.5
$region0: #{inception_block_pallas.5}
  #allocation0 [shape = 'u32[]', space=smem, size = 0x4, offset = 0x4, fixed_abs, tag = 'smem constant byte address 0x4 - core index']
  #allocation1 [shape = 'u32[144,128]{1,0:T(1,128)}', space=vmem, size = 0x12000, scoped, tag = 'internal scratch']
  %s0 = inlined_call_operand.vmem [shape: bf16[512,150], index: 0, kind: input, shape index: {}]
  %s1 = inlined_call_operand.vmem [shape: bf16[150,8], index: 1, kind: input, shape index: {}]
  %s2 = inlined_call_operand.vmem [shape: f32[1,8], index: 2, kind: input, shape index: {}]
  %s3 = inlined_call_operand.vmem [shape: f32[512,8], index: 3, kind: output, shape index: {}]
  %s4 = sld [smem:[#allocation0]]
  $region45: #{inception_block_pallas.5} parent=0
    _
  %s6 = ssub.s32 1, %s4
  %s7 = scalar_select 0, %s6, %s4
  loop: start=0, step=1, limit=4
  $region2: #{inception_block_pallas.5} parent=0 // loop_pre_header
    _
  $region3: #{inception_block_pallas.5} parent=0 // loop_header
    %s9 = sphi 0, %s13
    %p10 = scmp.ge.s32.totalorder %s9, 4
    %s19 = sphi 0, %s21
    %s22 = sphi 0, %s19
    %s23 = sphi 0, %s22
    %s39 = sphi 0, %s23
    %s43 = sphi 0, %s43
    %s45 = sphi 0, %s43
    %s46 = sphi 0, %s45
    %s60 = sphi 0, %s46
    %s64 = sphi 0, %s64
    %s66 = sphi 0, %s64
    %s67 = sphi 0, %s66
    %s81 = sphi 0, %s67
    %s87 = sphi 0, %s89
    %s90 = sphi 0, %s87
    %s91 = sphi 0, %s90
    %s107 = sphi 0, %s91
  $region4: #{inception_block_pallas.5} parent=0 // loop_header_branch
    %12 = sbr.rel (%p10) target = $region8
  $region5: #{inception_block_pallas.5} parent=0 // loop_body
    %s14 = ssub.s32 %s9, 1
    %s15 = ssub.s32 %s9, 2
    %s16 = sadd.s32 %s9, 1
    %s17 = ssub.s32 %s9, %s16
    %p18 = scmp.eq.s32.totalorder %s17, 0
    %s20 = sadd.s32 %s19, 1
    %s21 = scalar_select %p18, %s19, %s20
    %p24 = pneg %p18
    %p25 = scmp.eq.s32.totalorder %s9, 1
    %p26 = por %p24, %p25
    %p27 = scmp.ne.s32.totalorder %s19, %s22
    %p28 = scmp.eq.s32.totalorder %s9, 0
    %p29 = por %p27, %p28
    %p30 = scmp.ne.s32.totalorder %s19, %s22
    %p31 = scmp.eq.s32.totalorder %s14, 1
    %p32 = por %p30, %p31
    %p33 = scmp.ne.s32.totalorder %s22, %s23
    %p34 = scmp.eq.s32.totalorder %s14, 0
    %p35 = por %p33, %p34
    %p36 = scmp.ne.s32.totalorder %s22, %s23
    %p37 = scmp.eq.s32.totalorder %s15, 1
    %p38 = por %p36, %p37
    %p40 = scmp.ne.s32.totalorder %s23, %s39
    %p41 = scmp.eq.s32.totalorder %s15, 0
    %p42 = por %p40, %p41
    %s44 = sadd.s32 %s43, 1
    %p47 = scmp.eq.s32.totalorder %s9, 1
    %p48 = scmp.ne.s32.totalorder %s43, %s45
    %p49 = scmp.eq.s32.totalorder %s9, 0
    %p50 = por %p48, %p49
    %p51 = scmp.ne.s32.totalorder %s43, %s45
    %p52 = scmp.eq.s32.totalorder %s14, 1
    %p53 = por %p51, %p52
    %p54 = scmp.ne.s32.totalorder %s45, %s46
    %p55 = scmp.eq.s32.totalorder %s14, 0
    %p56 = por %p54, %p55
    %p57 = scmp.ne.s32.totalorder %s45, %s46
    %p58 = scmp.eq.s32.totalorder %s15, 1
    %p59 = por %p57, %p58
    %p61 = scmp.ne.s32.totalorder %s46, %s60
    %p62 = scmp.eq.s32.totalorder %s15, 0
    %p63 = por %p61, %p62
    %s65 = sadd.s32 %s64, 1
    %p68 = scmp.eq.s32.totalorder %s9, 1
    %p69 = scmp.ne.s32.totalorder %s64, %s66
    %p70 = scmp.eq.s32.totalorder %s9, 0
    %p71 = por %p69, %p70
    %p72 = scmp.ne.s32.totalorder %s64, %s66
    %p73 = scmp.eq.s32.totalorder %s14, 1
    %p74 = por %p72, %p73
    %p75 = scmp.ne.s32.totalorder %s66, %s67
    %p76 = scmp.eq.s32.totalorder %s14, 0
    %p77 = por %p75, %p76
    %p78 = scmp.ne.s32.totalorder %s66, %s67
    %p79 = scmp.eq.s32.totalorder %s15, 1
    %p80 = por %p78, %p79
    %p82 = scmp.ne.s32.totalorder %s67, %s81
    %p83 = scmp.eq.s32.totalorder %s15, 0
    %p84 = por %p82, %p83
    %s85 = ssub.s32 %s9, %s16
    %p86 = scmp.eq.s32.totalorder %s85, 0
    %s88 = sadd.s32 %s87, 1
    %s89 = scalar_select %p86, %s87, %s88
    %p92 = pneg %p86
    %p93 = scmp.eq.s32.totalorder %s9, 1
    %p94 = por %p92, %p93
    %p95 = scmp.ne.s32.totalorder %s87, %s90
    %p96 = scmp.eq.s32.totalorder %s9, 0
    %p97 = por %p95, %p96
    %p98 = scmp.ne.s32.totalorder %s87, %s90
    %p99 = scmp.eq.s32.totalorder %s14, 1
    %p100 = por %p98, %p99
    %p101 = scmp.ne.s32.totalorder %s90, %s91
    %p102 = scmp.eq.s32.totalorder %s14, 0
    %p103 = por %p101, %p102
    %p104 = scmp.ne.s32.totalorder %s90, %s91
    %p105 = scmp.eq.s32.totalorder %s15, 1
    %p106 = por %p104, %p105
    %p108 = scmp.ne.s32.totalorder %s91, %s107
    %p109 = scmp.eq.s32.totalorder %s15, 0
    %p110 = por %p108, %p109
    %p111 = scmp.le.s32.totalorder 1, %s9
    %p112 = scmp.lt.s32.totalorder %s9, 3
    %p113 = pnand %p111, %p112
    %p114 = pneg %p113
    // Predicated region
    $region9: #{inception_block_pallas.5} parent=5 // pred_check
      _
    $region10: #{inception_block_pallas.5} parent=5 // pred_check_branch
      %116 = sbr.rel (%p113) target = $region12
    $region11: #{inception_block_pallas.5} parent=5 // pred_region
      %s117 = ssub.s32 %s9, 1
      // Predicated region
      $region13: #{inception_block_pallas.5} parent=11 // pred_check
        %p118 = pneg %p56
      $region14: #{inception_block_pallas.5} parent=11 // pred_check_branch
        %120 = sbr.rel (%p118) target = $region16
      $region15: #{inception_block_pallas.5} parent=11 // pred_region
        _
      $region16: #{inception_block_pallas.5} parent=11 // pred_fallthru
        _
      // Predicated region
      $region17: #{inception_block_pallas.5} parent=11 // pred_check
        %p121 = pneg %p77
      $region18: #{inception_block_pallas.5} parent=11 // pred_check_branch
        %123 = sbr.rel (%p121) target = $region20
      $region19: #{inception_block_pallas.5} parent=11 // pred_region
        _
      $region20: #{inception_block_pallas.5} parent=11 // pred_fallthru
        _
    $region12: #{inception_block_pallas.5} parent=5 // pred_fallthru
      _
    %p124 = scmp.lt.s32.totalorder %s9, 2
    // Predicated region
    $region21: #{inception_block_pallas.5} parent=5 // pred_check
      %p125 = pneg %p124
    $region22: #{inception_block_pallas.5} parent=5 // pred_check_branch
      %127 = sbr.rel (%p125) target = $region24
    $region23: #{inception_block_pallas.5} parent=5 // pred_region
      // Predicated region
      $region25: #{inception_block_pallas.5} parent=23 // pred_check
        %p128 = pneg %p29
      $region26: #{inception_block_pallas.5} parent=23 // pred_check_branch
        %130 = sbr.rel (%p128) target = $region28
      $region27: #{inception_block_pallas.5} parent=23 // pred_region
        %s131 = smul.u32 32, %s9
        %p132 = scmp.lt.s32.totalorder %s131, 63
        %s133 = scalar_select %p132, %s131, 63
        %s134 = smul.addr %s133, 2
        %s135 = smul.addr %s134, 4
        %s136 = scalar_lea.vmem %s0, %s135
        %s137 = smul.u32 32, %s9
      $region28: #{inception_block_pallas.5} parent=23 // pred_fallthru
        _
    $region24: #{inception_block_pallas.5} parent=5 // pred_fallthru
      _
    %p138 = scmp.le.s32.totalorder 1, %s9
    %p139 = scmp.lt.s32.totalorder %s9, 3
    %p140 = pnand %p138, %p139
    %p141 = pneg %p140
    // Predicated region
    $region29: #{inception_block_pallas.5} parent=5 // pred_check
      _
    $region30: #{inception_block_pallas.5} parent=5 // pred_check_branch
      %143 = sbr.rel (%p140) target = $region32
    $region31: #{inception_block_pallas.5} parent=5 // pred_region
      %s144 = ssub.s32 %s9, 1
      %s145 = smul.u32 32, %s14
      %p146 = scmp.lt.s32.totalorder %s145, 63
      %s147 = scalar_select %p146, %s145, 63
      %s148 = smul.addr %s147, 2
      %s149 = smul.addr %s148, 4
      %s150 = scalar_lea.vmem %s0, %s149
      %p151 = pneg %p35
      %p152 = pneg %p32
      %p153 = pneg %p56
      %p154 = pneg %p53
      %p155 = pneg %p77
      %p156 = pneg %p74
      %p157 = pneg %p103
      %p158 = pneg %p100
      %s159 = smul.u32 32, %s14
      %p160 = scmp.lt.s32.totalorder %s159, 63
      %s161 = scalar_select %p160, %s159, 63
      %s162 = smul.addr %s161, 8
      %s163 = scalar_lea.vmem %s3, %s162
      %s164 = smul.u32 32, %s14
      %p165 = scmp.lt.s32.totalorder %s164, 63
      %s166 = scalar_select %p165, %s164, 63
      %s167 = smul.addr %s166, 2
      %s168 = smul.addr %s167, 4
      %s169 = scalar_lea.vmem %s0, %s168
      %s170 = smul.u32 32, %s14
      %s171 = smul.u32 32, %s14
      %p172 = scmp.lt.s32.totalorder %s171, 63
      %s173 = scalar_select %p172, %s171, 63
      %s174 = smul.addr %s173, 8
      %s175 = scalar_lea.vmem %s3, %s174
      %s176 = smul.u32 32, %s14
      %v178 = vld [vmem:[%s169] sm:$0xff]
      %v179 = vld [vmem:[%s169 + $0x8] sm:$0xff]
      %v180 = vld [vmem:[%s169 + $0x10] sm:$0xff]
      %v181 = vld [vmem:[%s169 + $0x18] sm:$0xff]
      %v182 = vld [vmem:[%s169 + $0x20] sm:$0xff]
      %v183 = vld [vmem:[%s169 + $0x28] sm:$0xff]
      %v184 = vld [vmem:[%s169 + $0x30] sm:$0xff]
      %v185 = vld [vmem:[%s169 + $0x38] sm:$0xff]
      %v186 = vld [vmem:[%s169 + $0x40] sm:$0xff]
      %v187 = vld [vmem:[%s169 + $0x48] sm:$0xff]
      %v188 = vld [vmem:[%s169 + $0x50] sm:$0xff]
      %v189 = vld [vmem:[%s169 + $0x58] sm:$0xff]
      %v190 = vld [vmem:[%s169 + $0x60] sm:$0xff]
      %v191 = vld [vmem:[%s169 + $0x68] sm:$0xff]
      %v192 = vld [vmem:[%s169 + $0x70] sm:$0xff]
      %v193 = vld [vmem:[%s169 + $0x78] sm:$0xff]
      %v194 = vld [vmem:[%s169 + $0x80] sm:$0xff]
      %v195 = vld [vmem:[%s169 + $0x88] sm:$0xff]
      %v196 = vld [vmem:[%s169 + $0x90] sm:$0xff]
      %v197 = vld [vmem:[%s169 + $0x98] sm:$0xff]
      %v198 = vld [vmem:[%s169 + $0xa0] sm:$0xff]
      %v199 = vld [vmem:[%s169 + $0xa8] sm:$0xff]
      %v200 = vld [vmem:[%s169 + $0xb0] sm:$0xff]
      %v201 = vld [vmem:[%s169 + $0xb8] sm:$0xff]
      %v202 = vld [vmem:[%s169 + $0xc0] sm:$0xff]
      %v203 = vld [vmem:[%s169 + $0xc8] sm:$0xff]
      %v204 = vld [vmem:[%s169 + $0xd0] sm:$0xff]
      %v205 = vld [vmem:[%s169 + $0xd8] sm:$0xff]
      %v206 = vld [vmem:[%s169 + $0xe0] sm:$0xff]
      %v207 = vld [vmem:[%s169 + $0xe8] sm:$0xff]
      %v208 = vld [vmem:[%s169 + $0xf0] sm:$0xff]
      %v209 = vld [vmem:[%s169 + $0xf8] sm:$0xff]
      %v210 = vld [vmem:[%s1] sm:$0xf]
      %v211 = vld [vmem:[%s1 + $0x4] sm:$0xf]
      %v212 = vld [vmem:[%s1 + $0x8] sm:$0xf]
      %v213 = vld [vmem:[%s1 + $0xc] sm:$0xf]
      %v214 = vld [vmem:[%s1 + $0x10] sm:$0xf]
      %v215 = vld [vmem:[%s1 + $0x14] sm:$0xf]
      %v216 = vld [vmem:[%s1 + $0x18] sm:$0xf]
      %v217 = vld [vmem:[%s1 + $0x1c] sm:$0xf]
      %v218 = vld [vmem:[%s1 + $0x20] sm:$0xf]
      %v219 = vld [vmem:[%s1 + $0x24] sm:$0xf]
      %v220 = vld [vmem:[%s1 + $0x28] sm:$0xf]
      %v221 = vld [vmem:[%s1 + $0x2c] sm:$0xf]
      %v222 = vld [vmem:[%s1 + $0x30] sm:$0xf]
      %v223 = vld [vmem:[%s1 + $0x34] sm:$0xf]
      %v224 = vld [vmem:[%s1 + $0x38] sm:$0xf]
      %v225 = vld [vmem:[%s1 + $0x3c] sm:$0xf]
      %v226 = vld [vmem:[%s1 + $0x40] sm:$0xf]
      %v227 = vld [vmem:[%s1 + $0x44] sm:$0xf]
      %v228 = vld [vmem:[%s1 + $0x48] sm:$0x7]
      %v229 = vld [vmem:[%s2] sm:$0x1]
      %v231 = vlaneseq
      %v232 = vshrl.u32 %v231, 7
      %v233 = vsub.s32 0, %v232
      %v234 = vrot.slane %v229, %v233
      %v268 = vunpack.c.l.b16 %v178
      %v269 = vunpack.c.h.b16 %v178
      %v270 = vunpack.c.l.b16 %v179
      %v271 = vunpack.c.h.b16 %v179
      %v272 = vunpack.c.l.b16 %v180
      %v273 = vunpack.c.h.b16 %v180
      %v274 = vunpack.c.l.b16 %v181
      %v275 = vunpack.c.h.b16 %v181
      %v276 = vunpack.c.l.b16 %v182
      %v277 = vunpack.c.h.b16 %v182
      %v278 = vunpack.c.l.b16 %v183
      %v279 = vunpack.c.h.b16 %v183
      %v280 = vunpack.c.l.b16 %v184
      %v281 = vunpack.c.h.b16 %v184
      %v282 = vunpack.c.l.b16 %v185
      %v283 = vunpack.c.h.b16 %v185
      %v284 = vunpack.c.l.b16 %v186
      %v285 = vunpack.c.h.b16 %v186
      %v286 = vunpack.c.l.b16 %v187
      %v287 = vunpack.c.h.b16 %v187
      %v288 = vunpack.c.l.b16 %v188
      %v289 = vunpack.c.h.b16 %v188
      %v290 = vunpack.c.l.b16 %v189
      %v291 = vunpack.c.h.b16 %v189
      %v292 = vunpack.c.l.b16 %v190
      %v293 = vunpack.c.h.b16 %v190
      %v294 = vunpack.c.l.b16 %v191
      %v295 = vunpack.c.h.b16 %v191
      %v296 = vunpack.c.l.b16 %v192
      %v297 = vunpack.c.h.b16 %v192
      %v298 = vunpack.c.l.b16 %v193
      %v299 = vunpack.c.h.b16 %v193
      %v300 = vunpack.c.l.b16 %v194
      %v301 = vunpack.c.h.b16 %v194
      %v302 = vunpack.c.l.b16 %v195
      %v303 = vunpack.c.h.b16 %v195
      %v304 = vunpack.c.l.b16 %v196
      %v305 = vunpack.c.h.b16 %v196
      %v306 = vunpack.c.l.b16 %v197
      %v307 = vunpack.c.h.b16 %v197
      %v308 = vunpack.c.l.b16 %v198
      %v309 = vunpack.c.h.b16 %v198
      %v310 = vunpack.c.l.b16 %v199
      %v311 = vunpack.c.h.b16 %v199
      %v312 = vunpack.c.l.b16 %v200
      %v313 = vunpack.c.h.b16 %v200
      %v314 = vunpack.c.l.b16 %v201
      %v315 = vunpack.c.h.b16 %v201
      %v316 = vunpack.c.l.b16 %v202
      %v317 = vunpack.c.h.b16 %v202
      %v318 = vunpack.c.l.b16 %v203
      %v319 = vunpack.c.h.b16 %v203
      %v320 = vunpack.c.l.b16 %v204
      %v321 = vunpack.c.h.b16 %v204
      %v322 = vunpack.c.l.b16 %v205
      %v323 = vunpack.c.h.b16 %v205
      %v324 = vunpack.c.l.b16 %v206
      %v325 = vunpack.c.h.b16 %v206
      %v326 = vunpack.c.l.b16 %v207
      %v327 = vunpack.c.h.b16 %v207
      %v328 = vunpack.c.l.b16 %v208
      %v329 = vunpack.c.h.b16 %v208
      %v330 = vunpack.c.l.b16 %v209
      %v331 = vunpack.c.h.b16 %v209
      %v332 = vpack.c.b16 %v270, %v268
      %v333 = vpack.c.b16 %v271, %v269
      %v334 = vpack.c.b16 %v274, %v272
      %v335 = vpack.c.b16 %v275, %v273
      %v336 = vpack.c.b16 %v278, %v276
      %v337 = vpack.c.b16 %v279, %v277
      %v338 = vpack.c.b16 %v282, %v280
      %v339 = vpack.c.b16 %v283, %v281
      %v340 = vpack.c.b16 %v286, %v284
      %v341 = vpack.c.b16 %v287, %v285
      %v342 = vpack.c.b16 %v290, %v288
      %v343 = vpack.c.b16 %v291, %v289
      %v344 = vpack.c.b16 %v294, %v292
      %v345 = vpack.c.b16 %v295, %v293
      %v346 = vpack.c.b16 %v298, %v296
      %v347 = vpack.c.b16 %v299, %v297
      %v348 = vpack.c.b16 %v302, %v300
      %v349 = vpack.c.b16 %v303, %v301
      %v350 = vpack.c.b16 %v306, %v304
      %v351 = vpack.c.b16 %v307, %v305
      %v352 = vpack.c.b16 %v310, %v308
      %v353 = vpack.c.b16 %v311, %v309
      %v354 = vpack.c.b16 %v314, %v312
      %v355 = vpack.c.b16 %v315, %v313
      %v356 = vpack.c.b16 %v318, %v316
      %v357 = vpack.c.b16 %v319, %v317
      %v358 = vpack.c.b16 %v322, %v320
      %v359 = vpack.c.b16 %v323, %v321
      %v360 = vpack.c.b16 %v326, %v324
      %v361 = vpack.c.b16 %v327, %v325
      %v362 = vpack.c.b16 %v330, %v328
      %v363 = vpack.c.b16 %v331, %v329
      %v399 = vunpack.c.l.b16 %v210
      %v400 = vunpack.c.l.b16 %v211
      %v401 = vunpack.c.l.b16 %v212
      %v402 = vunpack.c.l.b16 %v213
      %v403 = vunpack.c.l.b16 %v214
      %v404 = vunpack.c.l.b16 %v215
      %v405 = vunpack.c.l.b16 %v216
      %v406 = vunpack.c.l.b16 %v217
      %v407 = vunpack.c.l.b16 %v218
      %v408 = vunpack.c.l.b16 %v219
      %v409 = vunpack.c.l.b16 %v220
      %v410 = vunpack.c.l.b16 %v221
      %v411 = vunpack.c.l.b16 %v222
      %v412 = vunpack.c.l.b16 %v223
      %v413 = vunpack.c.l.b16 %v224
      %v414 = vunpack.c.l.b16 %v225
      %v415 = vunpack.c.l.b16 %v226
      %v416 = vunpack.c.l.b16 %v227
      %v417 = vunpack.c.l.b16 %v228
      %v418 = vpack.c.b16 %v400, %v399
      %v419 = vpack.c.b16 %v402, %v401
      %v420 = vpack.c.b16 %v404, %v403
      %v421 = vpack.c.b16 %v406, %v405
      %v422 = vpack.c.b16 %v408, %v407
      %v423 = vpack.c.b16 %v410, %v409
      %v424 = vpack.c.b16 %v412, %v411
      %v425 = vpack.c.b16 %v414, %v413
      %v426 = vpack.c.b16 %v416, %v415
      %v427 = vpack.c.b16 %v417, %v417
      %vm437 = vcmask 179200
      %v439 = vsel %vm437, %v333, 0
      %v442 = vsel %vm437, %v335, 0
      %v445 = vsel %vm437, %v337, 0
      %v448 = vsel %vm437, %v339, 0
      %v451 = vsel %vm437, %v341, 0
      %v454 = vsel %vm437, %v343, 0
      %v457 = vsel %vm437, %v345, 0
      %v460 = vsel %vm437, %v347, 0
      %v463 = vsel %vm437, %v349, 0
      %v466 = vsel %vm437, %v351, 0
      %v469 = vsel %vm437, %v353, 0
      %v472 = vsel %vm437, %v355, 0
      %v475 = vsel %vm437, %v357, 0
      %v478 = vsel %vm437, %v359, 0
      %v481 = vsel %vm437, %v361, 0
      %v484 = vsel %vm437, %v363, 0
      %vm486 = vcmask 1042432
      %v488 = vsel %vm486, %v427, 0
      %490 = vmatprep.subr.bf16.mxu0 0
      %491 = vmatpush1.bf16.msra.mxu0 %v425
      %492 = vmatprep.subr.bf16.mxu0 0
      %493 = vmatpush1.bf16.msra.mxu0 %v424
      %494 = vmatprep.subr.bf16.mxu0 0
      %495 = vmatpush1.bf16.msra.mxu0 %v423
      %496 = vmatprep.subr.bf16.mxu0 0
      %497 = vmatpush1.bf16.msra.mxu0 %v422
      %498 = vmatprep.subr.bf16.mxu0 0
      %499 = vmatpush1.bf16.msra.mxu0 %v421
      %500 = vmatprep.subr.bf16.mxu0 0
      %501 = vmatpush1.bf16.msra.mxu0 %v420
      %502 = vmatprep.subr.bf16.mxu0 0
      %503 = vmatpush1.bf16.msra.mxu0 %v419
      %504 = vmatprep.subr.bf16.mxu0 0
      %505 = vmatpush1.bf16.msra.mxu0 %v418
      %506 = vmatprep.subr.bf16.mxu0 0
      %507 = vmatpush2.bf16.msra.mxu0 0
      %508 = vmatprep.subr.bf16.mxu0 0
      %509 = vmatpush2.bf16.msra.mxu0 0
      %510 = vmatprep.subr.bf16.mxu0 0
      %511 = vmatpush2.bf16.msra.mxu0 0
      %512 = vmatprep.subr.bf16.mxu0 0
      %513 = vmatpush2.bf16.msra.mxu0 0
      %514 = vmatprep.subr.bf16.mxu0 0
      %515 = vmatpush2.bf16.msra.mxu0 0
      %516 = vmatprep.subr.bf16.mxu0 0
      %517 = vmatpush2.bf16.msra.mxu0 0
      %518 = vmatprep.subr.bf16.mxu0 0
      %519 = vmatpush2.bf16.msra.mxu0 %v488
      %520 = vmatprep.subr.bf16.mxu0 0
      %521 = vmatpush2.bf16.msra.mxu0 %v426
      %522 = vmatprep.mubr.bf16.mxu0 %v439
      %523 = vmatmul.mubr.bf16.gmra.mxu0 %v332
      %v524 = vpop.f32.mrf.mxu0
      %v525 = vadd.f32 %v234, %v524
      %v526 = vpop.f32.mrf.mxu0
      %v527 = vpop.f32.mrf.mxu0
      %v528 = vadd.f32 %v234, %v527
      %v529 = vpop.f32.mrf.mxu0
      %530 = vmatprep.mubr.bf16.mxu0 %v442
      %531 = vmatmul.mubr.bf16.gmra.mxu0 %v334
      %v532 = vpop.f32.mrf.mxu0
      %v533 = vadd.f32 %v234, %v532
      %v534 = vpop.f32.mrf.mxu0
      %v535 = vpop.f32.mrf.mxu0
      %v536 = vadd.f32 %v234, %v535
      %v537 = vpop.f32.mrf.mxu0
      %538 = vmatprep.mubr.bf16.mxu0 %v445
      %539 = vmatmul.mubr.bf16.gmra.mxu0 %v336
      %v540 = vpop.f32.mrf.mxu0
      %v541 = vadd.f32 %v234, %v540
      %v542 = vpop.f32.mrf.mxu0
      %v543 = vpop.f32.mrf.mxu0
      %v544 = vadd.f32 %v234, %v543
      %v545 = vpop.f32.mrf.mxu0
      %546 = vmatprep.mubr.bf16.mxu0 %v448
      %547 = vmatmul.mubr.bf16.gmra.mxu0 %v338
      %v548 = vpop.f32.mrf.mxu0
      %v549 = vadd.f32 %v234, %v548
      %v550 = vpop.f32.mrf.mxu0
      %v551 = vpop.f32.mrf.mxu0
      %v552 = vadd.f32 %v234, %v551
      %v553 = vpop.f32.mrf.mxu0
      %554 = vmatprep.mubr.bf16.mxu0 %v451
      %555 = vmatmul.mubr.bf16.gmra.mxu0 %v340
      %v556 = vpop.f32.mrf.mxu0
      %v557 = vadd.f32 %v234, %v556
      %v558 = vpop.f32.mrf.mxu0
      %v559 = vpop.f32.mrf.mxu0
      %v560 = vadd.f32 %v234, %v559
      %v561 = vpop.f32.mrf.mxu0
      %562 = vmatprep.mubr.bf16.mxu0 %v454
      %563 = vmatmul.mubr.bf16.gmra.mxu0 %v342
      %v564 = vpop.f32.mrf.mxu0
      %v565 = vadd.f32 %v234, %v564
      %v566 = vpop.f32.mrf.mxu0
      %v567 = vpop.f32.mrf.mxu0
      %v568 = vadd.f32 %v234, %v567
      %v569 = vpop.f32.mrf.mxu0
      %570 = vmatprep.mubr.bf16.mxu0 %v457
      %571 = vmatmul.mubr.bf16.gmra.mxu0 %v344
      %v572 = vpop.f32.mrf.mxu0
      %v573 = vadd.f32 %v234, %v572
      %v574 = vpop.f32.mrf.mxu0
      %v575 = vpop.f32.mrf.mxu0
      %v576 = vadd.f32 %v234, %v575
      %v577 = vpop.f32.mrf.mxu0
      %578 = vmatprep.mubr.bf16.mxu0 %v460
      %579 = vmatmul.mubr.bf16.gmra.mxu0 %v346
      %v580 = vpop.f32.mrf.mxu0
      %v581 = vadd.f32 %v234, %v580
      %v582 = vpop.f32.mrf.mxu0
      %v583 = vpop.f32.mrf.mxu0
      %v584 = vadd.f32 %v234, %v583
      %v585 = vpop.f32.mrf.mxu0
      %586 = vmatprep.mubr.bf16.mxu0 %v463
      %587 = vmatmul.mubr.bf16.gmra.mxu0 %v348
      %v588 = vpop.f32.mrf.mxu0
      %v589 = vadd.f32 %v234, %v588
      %v590 = vpop.f32.mrf.mxu0
      %v591 = vpop.f32.mrf.mxu0
      %v592 = vadd.f32 %v234, %v591
      %v593 = vpop.f32.mrf.mxu0
      %594 = vmatprep.mubr.bf16.mxu0 %v466
      %595 = vmatmul.mubr.bf16.gmra.mxu0 %v350
      %v596 = vpop.f32.mrf.mxu0
      %v597 = vadd.f32 %v234, %v596
      %v598 = vpop.f32.mrf.mxu0
      %v599 = vpop.f32.mrf.mxu0
      %v600 = vadd.f32 %v234, %v599
      %v601 = vpop.f32.mrf.mxu0
      %602 = vmatprep.mubr.bf16.mxu0 %v469
      %603 = vmatmul.mubr.bf16.gmra.mxu0 %v352
      %v604 = vpop.f32.mrf.mxu0
      %v605 = vadd.f32 %v234, %v604
      %v606 = vpop.f32.mrf.mxu0
      %v607 = vpop.f32.mrf.mxu0
      %v608 = vadd.f32 %v234, %v607
      %v609 = vpop.f32.mrf.mxu0
      %610 = vmatprep.mubr.bf16.mxu0 %v472
      %611 = vmatmul.mubr.bf16.gmra.mxu0 %v354
      %v612 = vpop.f32.mrf.mxu0
      %v613 = vadd.f32 %v234, %v612
      %v614 = vpop.f32.mrf.mxu0
      %v615 = vpop.f32.mrf.mxu0
      %v616 = vadd.f32 %v234, %v615
      %v617 = vpop.f32.mrf.mxu0
      %618 = vmatprep.mubr.bf16.mxu0 %v475
      %619 = vmatmul.mubr.bf16.gmra.mxu0 %v356
      %v620 = vpop.f32.mrf.mxu0
      %v621 = vadd.f32 %v234, %v620
      %v622 = vpop.f32.mrf.mxu0
      %v623 = vpop.f32.mrf.mxu0
      %v624 = vadd.f32 %v234, %v623
      %v625 = vpop.f32.mrf.mxu0
      %626 = vmatprep.mubr.bf16.mxu0 %v478
      %627 = vmatmul.mubr.bf16.gmra.mxu0 %v358
      %v628 = vpop.f32.mrf.mxu0
      %v629 = vadd.f32 %v234, %v628
      %v630 = vpop.f32.mrf.mxu0
      %v631 = vpop.f32.mrf.mxu0
      %v632 = vadd.f32 %v234, %v631
      %v633 = vpop.f32.mrf.mxu0
      %634 = vmatprep.mubr.bf16.mxu0 %v481
      %635 = vmatmul.mubr.bf16.gmra.mxu0 %v360
      %v636 = vpop.f32.mrf.mxu0
      %v637 = vadd.f32 %v234, %v636
      %v638 = vpop.f32.mrf.mxu0
      %v639 = vpop.f32.mrf.mxu0
      %v640 = vadd.f32 %v234, %v639
      %v641 = vpop.f32.mrf.mxu0
      %642 = vmatprep.mubr.bf16.mxu0 %v484
      %643 = vmatmul.mubr.bf16.gmra.mxu0 %v362
      %v644 = vpop.f32.mrf.mxu0
      %v645 = vadd.f32 %v234, %v644
      %v646 = vpop.f32.mrf.mxu0
      %v647 = vpop.f32.mrf.mxu0
      %v648 = vadd.f32 %v234, %v647
      %v649 = vpop.f32.mrf.mxu0
      %650 = vdwg.mxu0
      %v651 = vmax.f32 %v525, 0.0
      %v652 = vmax.f32 %v528, 0.0
      %v653 = vmax.f32 %v533, 0.0
      %v654 = vmax.f32 %v536, 0.0
      %v655 = vmax.f32 %v541, 0.0
      %v656 = vmax.f32 %v544, 0.0
      %v657 = vmax.f32 %v549, 0.0
      %v658 = vmax.f32 %v552, 0.0
      %v659 = vmax.f32 %v557, 0.0
      %v660 = vmax.f32 %v560, 0.0
      %v661 = vmax.f32 %v565, 0.0
      %v662 = vmax.f32 %v568, 0.0
      %v663 = vmax.f32 %v573, 0.0
      %v664 = vmax.f32 %v576, 0.0
      %v665 = vmax.f32 %v581, 0.0
      %v666 = vmax.f32 %v584, 0.0
      %v667 = vmax.f32 %v589, 0.0
      %v668 = vmax.f32 %v592, 0.0
      %v669 = vmax.f32 %v597, 0.0
      %v670 = vmax.f32 %v600, 0.0
      %v671 = vmax.f32 %v605, 0.0
      %v672 = vmax.f32 %v608, 0.0
      %v673 = vmax.f32 %v613, 0.0
      %v674 = vmax.f32 %v616, 0.0
      %v675 = vmax.f32 %v621, 0.0
      %v676 = vmax.f32 %v624, 0.0
      %v677 = vmax.f32 %v629, 0.0
      %v678 = vmax.f32 %v632, 0.0
      %v679 = vmax.f32 %v637, 0.0
      %v680 = vmax.f32 %v640, 0.0
      %v681 = vmax.f32 %v645, 0.0
      %v682 = vmax.f32 %v648, 0.0
      %vm683 = vcmask 64512
      %684 = vst.msk [vmem:[%s175] sm:$0xff] %vm683, %v651
      %685 = vst.msk [vmem:[%s175 + $0x8] sm:$0xff] %vm683, %v652
      %686 = vst.msk [vmem:[%s175 + $0x10] sm:$0xff] %vm683, %v653
      %687 = vst.msk [vmem:[%s175 + $0x18] sm:$0xff] %vm683, %v654
      %688 = vst.msk [vmem:[%s175 + $0x20] sm:$0xff] %vm683, %v655
      %689 = vst.msk [vmem:[%s175 + $0x28] sm:$0xff] %vm683, %v656
      %690 = vst.msk [vmem:[%s175 + $0x30] sm:$0xff] %vm683, %v657
      %691 = vst.msk [vmem:[%s175 + $0x38] sm:$0xff] %vm683, %v658
      %692 = vst.msk [vmem:[%s175 + $0x40] sm:$0xff] %vm683, %v659
      %693 = vst.msk [vmem:[%s175 + $0x48] sm:$0xff] %vm683, %v660
      %694 = vst.msk [vmem:[%s175 + $0x50] sm:$0xff] %vm683, %v661
      %695 = vst.msk [vmem:[%s175 + $0x58] sm:$0xff] %vm683, %v662
      %696 = vst.msk [vmem:[%s175 + $0x60] sm:$0xff] %vm683, %v663
      %697 = vst.msk [vmem:[%s175 + $0x68] sm:$0xff] %vm683, %v664
      %698 = vst.msk [vmem:[%s175 + $0x70] sm:$0xff] %vm683, %v665
      %699 = vst.msk [vmem:[%s175 + $0x78] sm:$0xff] %vm683, %v666
      %700 = vst.msk [vmem:[%s175 + $0x80] sm:$0xff] %vm683, %v667
      %701 = vst.msk [vmem:[%s175 + $0x88] sm:$0xff] %vm683, %v668
      %702 = vst.msk [vmem:[%s175 + $0x90] sm:$0xff] %vm683, %v669
      %703 = vst.msk [vmem:[%s175 + $0x98] sm:$0xff] %vm683, %v670
      %704 = vst.msk [vmem:[%s175 + $0xa0] sm:$0xff] %vm683, %v671
      %705 = vst.msk [vmem:[%s175 + $0xa8] sm:$0xff] %vm683, %v672
      %706 = vst.msk [vmem:[%s175 + $0xb0] sm:$0xff] %vm683, %v673
      %707 = vst.msk [vmem:[%s175 + $0xb8] sm:$0xff] %vm683, %v674
      %708 = vst.msk [vmem:[%s175 + $0xc0] sm:$0xff] %vm683, %v675
      %709 = vst.msk [vmem:[%s175 + $0xc8] sm:$0xff] %vm683, %v676
      %710 = vst.msk [vmem:[%s175 + $0xd0] sm:$0xff] %vm683, %v677
      %711 = vst.msk [vmem:[%s175 + $0xd8] sm:$0xff] %vm683, %v678
      %712 = vst.msk [vmem:[%s175 + $0xe0] sm:$0xff] %vm683, %v679
      %713 = vst.msk [vmem:[%s175 + $0xe8] sm:$0xff] %vm683, %v680
      %714 = vst.msk [vmem:[%s175 + $0xf0] sm:$0xff] %vm683, %v681
      %715 = vst.msk [vmem:[%s175 + $0xf8] sm:$0xff] %vm683, %v682
      %s716 = smul.u32 32, %s14
      %p717 = scmp.lt.s32.totalorder %s716, 63
      %s718 = scalar_select %p717, %s716, 63
      %s719 = smul.addr %s718, 8
      %s720 = scalar_lea.vmem %s3, %s719
      // Predicated region
      $region33: #{inception_block_pallas.5} parent=31 // pred_check
        %p721 = pneg %p100
      $region34: #{inception_block_pallas.5} parent=31 // pred_check_branch
        %723 = sbr.rel (%p721) target = $region36
      $region35: #{inception_block_pallas.5} parent=31 // pred_region
        %s724 = smul.u32 32, %s14
      $region36: #{inception_block_pallas.5} parent=31 // pred_fallthru
        _
    $region32: #{inception_block_pallas.5} parent=5 // pred_fallthru
      _
    %p725 = scmp.le.s32.totalorder 2, %s9
    // Predicated region
    $region37: #{inception_block_pallas.5} parent=5 // pred_check
      %p726 = pneg %p725
    $region38: #{inception_block_pallas.5} parent=5 // pred_check_branch
      %728 = sbr.rel (%p726) target = $region40
    $region39: #{inception_block_pallas.5} parent=5 // pred_region
      %s729 = ssub.s32 %s9, 2
      // Predicated region
      $region41: #{inception_block_pallas.5} parent=39 // pred_check
        %p730 = pneg %p106
      $region42: #{inception_block_pallas.5} parent=39 // pred_check_branch
        %732 = sbr.rel (%p730) target = $region44
      $region43: #{inception_block_pallas.5} parent=39 // pred_region
        %s733 = smul.u32 32, %s15
        %p734 = scmp.lt.s32.totalorder %s733, 63
        %s735 = scalar_select %p734, %s733, 63
        %s736 = smul.addr %s735, 8
        %s737 = scalar_lea.vmem %s3, %s736
      $region44: #{inception_block_pallas.5} parent=39 // pred_fallthru
        _
    $region40: #{inception_block_pallas.5} parent=5 // pred_fallthru
      _
  $region6: #{inception_block_pallas.5} parent=0 // loop_footer
    %s13 = sadd.s32 1, %s9
  $region7: #{inception_block_pallas.5} parent=0 // loop_footer_branch
    %8 = sbr.rel target = $region3
  $region8: #{inception_block_pallas.5} parent=0 // loop_exit
    _

</llo_original>
